<compile_context>
chip_gen: v7x
topology: tpu7x:2x2x1
jax: 0.10.0
libtpu: 0.0.40
codegen_flags: <defaults>
</compile_context>

<pallas_src>
import functools

import jax
import jax.numpy as jnp
from jax.experimental import pallas as pl
from jax.experimental.pallas import tpu as pltpu

_MAX_ROW_TILE = 1024


# ----------------------------------------------------------------------------
# Generation-aware VMEM budgeting
# ----------------------------------------------------------------------------
def _ceil_to(x, m):
    return ((x + m - 1) // m) * m


@functools.lru_cache(maxsize=None)
def _vmem_capacity_bytes():
    try:
        cap = int(pltpu.get_tpu_info().vmem_capacity_bytes)
        if cap > 0:
            return cap
    except Exception:
        pass
    return 64 * 1024 * 1024            # conservative fallback (v7x per-core VMEM)


@functools.lru_cache(maxsize=None)
def _vmem_limit_bytes():
    cap = _vmem_capacity_bytes()
    frac = 0.5 if cap <= 64 * 1024 * 1024 else 0.4
    return int(max(16 * 1024 * 1024, cap * frac))


def _vmem_tile_budget():
    return int(_vmem_limit_bytes() * 0.6)


def _choose_row_tile(n_rows, per_row_bytes, fixed_bytes=0):
    """Largest row tile that fits the budget, divides n_rows (multiple of 8) and
    leaves >=2-4 row tiles for pipelining / megacore sharding."""
    budget = max(_vmem_tile_budget() - fixed_bytes, 1 << 20)
    cap = budget // max(per_row_bytes, 1)
    cap = min(cap, _MAX_ROW_TILE, n_rows)
    if n_rows >= 64:
        cap = min(cap, n_rows // 4)
    elif n_rows >= 16:
        cap = min(cap, n_rows // 2)
    cap = max(8, (cap // 8) * 8)
    tm = cap
    while tm > 8 and n_rows % tm:
        tm -= 8
    if n_rows % tm:
        tm = n_rows                     # fall back to a single full-extent block
    return int(tm)


# ----------------------------------------------------------------------------
# In-kernel math helpers
# ----------------------------------------------------------------------------
def _erf_approx(x):
    # Abramowitz & Stegun 7.1.26 (abs err ~1.5e-7).  Exact division (no approx
    # reciprocal) so GELU matches PyTorch's erf-exact nn.GELU to ~1e-6.
    a1, a2, a3, a4, a5 = 0.254829592, -0.284496736, 1.421413741, -1.453152027, 1.061405429
    p = 0.3275911
    s = jnp.where(x >= 0.0, 1.0, -1.0)
    ax = jnp.abs(x)
    t = 1.0 / (1.0 + p * ax)
    poly = ((((a5 * t + a4) * t + a3) * t + a2) * t + a1) * t
    return s * (1.0 - poly * jnp.exp(-ax * ax))


def _gelu_exact(x):
    # PyTorch nn.GELU() default (erf-exact).
    return 0.5 * x * (1.0 + _erf_approx(x * 0.7071067811865476))


# ----------------------------------------------------------------------------
# Kernel A: fused per-edge message MLP + valid mask + mean-over-K aggregation
#           + residual + residue mask.  Grid = (row_tiles, K); K is "arbitrary".
# ----------------------------------------------------------------------------
def _msg_agg_kernel(n_hidden, *refs):
    xc_ref, m_ref, v_ref, xn_ref, xe_ref = refs[:5]
    wc_ref, wn_ref, we_ref, b0_ref = refs[5:9]
    hidden = refs[9:9 + 2 * n_hidden]
    out_ref = refs[9 + 2 * n_hidden]
    hc_ref, acc_ref, cnt_ref = refs[10 + 2 * n_hidden:]

    k = pl.program_id(1)
    cdt = wn_ref.dtype                 # matmul dtype (f32, or bf16)

    @pl.when(k == 0)
    def _init():
        # Central contribution to layer 0: computed once per row tile, reused for
        # every neighbour k.  Valid-neighbour counts computed in-kernel (no counts
        # HBM stream).
        xcm = (xc_ref[...] * m_ref[...]).astype(cdt)
        hc_ref[...] = (jnp.dot(xcm, wc_ref[...], preferred_element_type=jnp.float32)
                       + b0_ref[...])
        acc_ref[...] = jnp.zeros_like(acc_ref)
        cnt_ref[...] = jnp.maximum(jnp.sum(v_ref[...], axis=1, keepdims=True), 1.0)

    # Validity of neighbour k for every row, selected from the resident (tm, K)
    # block (avoids a lane-sparse per-k side stream and dynamic lane slicing).
    kk = jax.lax.broadcasted_iota(jnp.int32, v_ref.shape, 1)
    v_k = jnp.sum(jnp.where(kk == k, v_ref[...], 0.0), axis=1, keepdims=True)

    xn_k = xn_ref[:, 0, 0, :]                                   # (tm, D)
    xe_k = xe_ref[:, 0, 0, :]                                   # (tm, E)
    h = hc_ref[...] + jnp.dot(xn_k, wn_ref[...], preferred_element_type=jnp.float32)
    h = h + jnp.dot(xe_k, we_ref[...], preferred_element_type=jnp.float32)
    h = _gelu_exact(h)
    for li in range(n_hidden):
        w_l = hidden[2 * li][...]
        b_l = hidden[2 * li + 1][...]
        h = _gelu_exact(
            jnp.dot(h.astype(cdt), w_l, preferred_element_type=jnp.float32) + b_l)
    acc_ref[...] += h * v_k                                     # zero invalid edges

    @pl.when(k == pl.num_programs(1) - 1)
    def _finalize():
        agg = acc_ref[...] / cnt_ref[...]                       # mean over valid nbrs
        out_ref[...] = ((xc_ref[...] + agg) * m_ref[...]).astype(out_ref.dtype)


def msg_agg_pallas(xc, maskf, valid, xn, xe, wc, wn, we, b0, ws, bs):
    n, d = xc.shape
    num_k = xe.shape[1]
    e = xe.shape[3]
    n_hidden = len(ws)
    ms = xn.dtype.itemsize
    dp, ep, kp = _ceil_to(d, 128), _ceil_to(e, 128), _ceil_to(num_k, 128)

    w_args = [wc, wn, we, b0]
    for w_l, b_l in zip(ws, bs):
        w_args += [w_l, b_l]
    weight_bytes = sum(int(a.size) * a.dtype.itemsize for a in w_args)

    # Conservative per-row VMEM estimate (double-buffered blocks, 8-sublane padding
    # of the per-k unit axis, f32 scratches).
    per_row = (2 * dp * 4              # xc
               + 2 * 128 * 4           # mask
               + 2 * kp * 4            # valid
               + 2 * 8 * dp * ms       # per-k neighbour block
               + 2 * 8 * ep * ms       # per-k edge block
               + 2 * dp * 4            # output
               + 2 * dp * 4 + 128 * 4)  # hc / acc / cnt scratches
    tm = _choose_row_tile(n, per_row, fixed_bytes=2 * weight_bytes)

    in_specs = [
        pl.BlockSpec((tm, d), lambda i, k: (i, 0)),             # xc   (resident per i)
        pl.BlockSpec((tm, 1), lambda i, k: (i, 0)),             # mask (resident per i)
        pl.BlockSpec((tm, num_k), lambda i, k: (i, 0)),         # valid(resident per i)
        pl.BlockSpec((tm, 1, 1, d), lambda i, k: (i, k, 0, 0)),  # neighbour stream
        pl.BlockSpec((tm, 1, 1, e), lambda i, k: (i, k, 0, 0)),  # edge stream
    ] + [pl.BlockSpec(a.shape, lambda i, k: (0, 0)) for a in w_args]

    return pl.pallas_call(
        functools.partial(_msg_agg_kernel, n_hidden),
        out_shape=jax.ShapeDtypeStruct((n, d), jnp.float32),
        grid=(n // tm, num_k),
        in_specs=in_specs,
        out_specs=pl.BlockSpec((tm, d), lambda i, k: (i, 0)),
        scratch_shapes=[pltpu.VMEM((tm, d), jnp.float32),       # hc
                        pltpu.VMEM((tm, d), jnp.float32),       # acc
                        pltpu.VMEM((tm, 1), jnp.float32)],      # counts
        compiler_params=pltpu.CompilerParams(
            dimension_semantics=("parallel", "arbitrary"),
            vmem_limit_bytes=_vmem_limit_bytes()),
    )(xc, maskf, valid, xn, xe, *w_args)


# ----------------------------------------------------------------------------
# Kernel B: masked graph normalization.  Grid over batch.
# ----------------------------------------------------------------------------
def _graph_norm_kernel(x_ref, mask_ref, gamma_ref, beta_ref, out_ref):
    # TODO(synk): GraphNormalization source was not provided in the reference module;
    # implemented as masked per-graph, per-feature normalization (GraphNorm-style)
    # with learnable gamma/beta and eps=1e-5.
    x = x_ref[0]                                          # (L, D)
    m = mask_ref[0]                                       # (L, 1)
    n_valid = jnp.maximum(jnp.sum(m, axis=0, keepdims=True), 1.0)
    mean = jnp.sum(x * m, axis=0, keepdims=True) / n_valid
    diff = (x - mean) * m
    var = jnp.sum(diff * diff, axis=0, keepdims=True) / n_valid
    y = (x - mean) * jax.lax.rsqrt(var + 1e-5)
    y = y * gamma_ref[...] + beta_ref[...]
    out_ref[...] = ((y * m)[None]).astype(out_ref.dtype)


def graph_norm_pallas(x, maskf, gamma, beta):
    b, l, d = x.shape
    return pl.pallas_call(
        _graph_norm_kernel,
        out_shape=jax.ShapeDtypeStruct((b, l, d), jnp.float32),
        grid=(b,),
        in_specs=[
            pl.BlockSpec((1, l, d), lambda i: (i, 0, 0)),
            pl.BlockSpec((1, l, 1), lambda i: (i, 0, 0)),
            pl.BlockSpec((1, d), lambda i: (0, 0)),
            pl.BlockSpec((1, d), lambda i: (0, 0)),
        ],
        out_specs=pl.BlockSpec((1, l, d), lambda i: (i, 0, 0)),
        compiler_params=pltpu.CompilerParams(
            dimension_semantics=("parallel",),
            vmem_limit_bytes=_vmem_limit_bytes()),
    )(x, maskf, gamma, beta)


# ----------------------------------------------------------------------------
# Kernel C: fused edge-update MLP + residual add.  Grid = (row_tiles, K).
# ----------------------------------------------------------------------------
def _edge_update_kernel(n_hidden, *refs):
    xc_ref, xn_ref, xe_ref = refs[:3]
    wc_ref, wn_ref, we_ref, b0_ref = refs[3:7]
    hidden = refs[7:7 + 2 * n_hidden]
    out_ref = refs[7 + 2 * n_hidden]
    hc_ref = refs[8 + 2 * n_hidden]

    k = pl.program_id(1)
    cdt = wn_ref.dtype

    @pl.when(k == 0)
    def _init():
        hc_ref[...] = (jnp.dot(xc_ref[...].astype(cdt), wc_ref[...],
                               preferred_element_type=jnp.float32) + b0_ref[...])

    xn_k = xn_ref[:, 0, 0, :]                                   # (tm, D)
    xe_k = xe_ref[:, 0, 0, :]                                   # (tm, E) f32 residual
    h = hc_ref[...] + jnp.dot(xn_k, wn_ref[...], preferred_element_type=jnp.float32)
    h = h + jnp.dot(xe_k.astype(cdt), we_ref[...], preferred_element_type=jnp.float32)
    h = _gelu_exact(h)
    for li in range(n_hidden):
        w_l = hidden[2 * li][...]
        b_l = hidden[2 * li + 1][...]
        h = _gelu_exact(
            jnp.dot(h.astype(cdt), w_l, preferred_element_type=jnp.float32) + b_l)
    # Residual edge update (no validity masking, matching the reference).
    out_ref[:, 0, 0, :] = (xe_k + h).astype(out_ref.dtype)


def edge_update_pallas(xc, xn, xe, num_k, wc, wn, we, b0, ws, bs):
    n, d = xc.shape
    e = xe.shape[3]
    n_hidden = len(ws)
    ms = xn.dtype.itemsize
    dp, ep = _ceil_to(d, 128), _ceil_to(e, 128)

    w_args = [wc, wn, we, b0]
    for w_l, b_l in zip(ws, bs):
        w_args += [w_l, b_l]
    weight_bytes = sum(int(a.size) * a.dtype.itemsize for a in w_args)

    per_row = (2 * dp * 4              # xc
               + 2 * 8 * dp * ms       # per-k neighbour block
               + 2 * 8 * ep * 4        # per-k edge block (f32)
               + 2 * 8 * ep * 4        # per-k output block
               + ep * 4)               # hc scratch
    tm = _choose_row_tile(n, per_row, fixed_bytes=2 * weight_bytes)

    in_specs = [
        pl.BlockSpec((tm, d), lambda i, k: (i, 0)),
        pl.BlockSpec((tm, 1, 1, d), lambda i, k: (i, k, 0, 0)),
        pl.BlockSpec((tm, 1, 1, e), lambda i, k: (i, k, 0, 0)),
    ] + [pl.BlockSpec(a.shape, lambda i, k: (0, 0)) for a in w_args]

    return pl.pallas_call(
        functools.partial(_edge_update_kernel, n_hidden),
        out_shape=jax.ShapeDtypeStruct((n, num_k, 1, e), jnp.float32),
        grid=(n // tm, num_k),
        in_specs=in_specs,
        out_specs=pl.BlockSpec((tm, 1, 1, e), lambda i, k: (i, k, 0, 0)),
        scratch_shapes=[pltpu.VMEM((tm, e), jnp.float32)],
        compiler_params=pltpu.CompilerParams(
            dimension_semantics=("parallel", "arbitrary"),
            vmem_limit_bytes=_vmem_limit_bytes()),
    )(xc, xn, xe, *w_args)


# ----------------------------------------------------------------------------
# Parameter init (PyTorch nn.Linear-style uniform bounds); first-layer weights
# are stored pre-split into central / neighbour / edge slices, (in, out) layout.
# ----------------------------------------------------------------------------
def init_params(key, d, e, depth_res_mpnn, num_edge_layers):
    assert depth_res_mpnn >= 1 and num_edge_layers >= 1

    def linear(key, fan_in, fan_out):
        k1, k2 = jax.random.split(key)
        bound = float(fan_in) ** -0.5
        w = jax.random.uniform(k1, (fan_in, fan_out), jnp.float32, -bound, bound)
        bb = jax.random.uniform(k2, (1, fan_out), jnp.float32, -bound, bound)
        return w, bb

    params = {}
    key, sub = jax.random.split(key)
    w0, b0 = linear(sub, 2 * d + e, d)
    params["msg_wc"], params["msg_wn"], params["msg_we"] = w0[:d], w0[d:2 * d], w0[2 * d:]
    params["msg_b0"] = b0
    params["msg_w"], params["msg_b"] = [], []
    for _ in range(depth_res_mpnn - 1):
        key, sub = jax.random.split(key)
        w, bb = linear(sub, d, d)
        params["msg_w"].append(w)
        params["msg_b"].append(bb)

    key, sub = jax.random.split(key)
    w0, b0 = linear(sub, 2 * d + e, e)
    params["edge_wc"], params["edge_wn"], params["edge_we"] = w0[:d], w0[d:2 * d], w0[2 * d:]
    params["edge_b0"] = b0
    params["edge_w"], params["edge_b"] = [], []
    for _ in range(num_edge_layers - 1):
        key, sub = jax.random.split(key)
        w, bb = linear(sub, e, e)
        params["edge_w"].append(w)
        params["edge_b"].append(bb)

    params["gamma"] = jnp.ones((1, d), jnp.float32)
    params["beta"] = jnp.zeros((1, d), jnp.float32)
    return params


# ----------------------------------------------------------------------------
# Forward pass (JAX glue around the three Pallas kernels).
# ----------------------------------------------------------------------------
def _gather_neighbors(node_feats, safe_idx):
    # node_feats: (B, L, D); safe_idx: (B, L, K) -> (B, L, K, D)
    b, l, d = node_feats.shape
    k = safe_idx.shape[-1]
    gathered = jnp.take_along_axis(
        node_feats, safe_idx.reshape(b, l * k)[..., None], axis=1)
    return gathered.reshape(b, l, k, d)


def res_mpnn_forward(params, res_embedding, res_edge_embedding, edge_index, mask,
                     *, matmul_dtype=jnp.float32):
    """matmul_dtype=jnp.bfloat16 halves the neighbour/edge input streams on every
    TPU generation (v5e's MXU is bf16-native); accumulation, GELU, masking,
    residuals and the graph norm stay in f32."""
    b, l, d = res_embedding.shape
    _, _, k, e = res_edge_embedding.shape
    n = b * l

    maskf = mask.astype(jnp.float32)[..., None]                        # (B, L, 1)
    res_masked = res_embedding * maskf                                 # (B, L, D)
    safe_idx = jnp.where(edge_index < 0, 0, edge_index)                # (B, L, K)
    valid = (edge_index != -1).astype(jnp.float32)                     # (B, L, K)

    # TODO(synk): the neighbour gather stays wrapper-side (XLA gather); the cast is
    # fused into it so the gathered stream is written to HBM directly in matmul_dtype.
    neigh = _gather_neighbors(res_masked, safe_idx).astype(matmul_dtype)  # (B,L,K,D)

    # ---- message() + aggregation() fused ----
    res_updated = msg_agg_pallas(
        res_embedding.reshape(n, d),
        maskf.reshape(n, 1),
        valid.reshape(n, k),
        neigh.reshape(n, k, 1, d),
        res_edge_embedding.reshape(n, k, 1, e).astype(matmul_dtype),   # matmul-only in A
        params["msg_wc"].astype(matmul_dtype),
        params["msg_wn"].astype(matmul_dtype),
        params["msg_we"].astype(matmul_dtype),
        params["msg_b0"],
        [w.astype(matmul_dtype) for w in params["msg_w"]],
        params["msg_b"],
    ).reshape(b, l, d)

    # ---- graph_norm() ----
    res_norm = graph_norm_pallas(res_updated, maskf, params["gamma"], params["beta"])

    # ---- _update_edges() ----
    neigh2 = _gather_neighbors(res_norm, safe_idx).astype(matmul_dtype)
    edge_out = edge_update_pallas(
        res_norm.reshape(n, d),
        neigh2.reshape(n, k, 1, d),
        res_edge_embedding.reshape(n, k, 1, e),                        # f32 residual
        k,
        params["edge_wc"].astype(matmul_dtype),
        params["edge_wn"].astype(matmul_dtype),
        params["edge_we"].astype(matmul_dtype),
        params["edge_b0"],
        [w.astype(matmul_dtype) for w in params["edge_w"]],
        params["edge_b"],
    ).reshape(b, l, k, e)

    return res_norm, edge_out


if __name__ == "__main__":
    B, L, K = 2, 8, 4            # batch, max_len, num_neighbours
    D, E = 32, 16                # res_embedding_dim, res_edge_embedding_dim
    DEPTH_RES_MPNN = 2
    NUM_EDGE_LAYERS = 2

    key = jax.random.PRNGKey(0)
    k_param, k_res, k_edge, k_idx, k_mask = jax.random.split(key, 5)

    params = init_params(k_param, D, E, DEPTH_RES_MPNN, NUM_EDGE_LAYERS)
    res_embedding = jax.random.normal(k_res, (B, L, D), jnp.float32)
    res_edge_embedding = jax.random.normal(k_edge, (B, L, K, E), jnp.float32)
    edge_index = jax.random.randint(k_idx, (B, L, K), -1, L).astype(jnp.int32)
    mask = (jax.random.uniform(k_mask, (B, L)) > 0.2).astype(jnp.float32)

    fwd = jax.jit(res_mpnn_forward)
    out_nodes, out_edges = fwd(params, res_embedding, res_edge_embedding, edge_index, mask)
    jax.block_until_ready((out_nodes, out_edges))
    assert out_nodes.shape == (B, L, D) and out_edges.shape == (B, L, K, E)
    print("KERNEL_OK")
</pallas_src>

<mosaic_0001>
module attributes {stable_mosaic.version = 11 : i64} {
  func.func @_graph_norm_kernel(%arg0: i32, %arg1: memref<1x8x32xf32, #tpu.memory_space<vmem>>, %arg2: memref<1x8x1xf32, #tpu.memory_space<vmem>>, %arg3: memref<1x32xf32, #tpu.memory_space<vmem>>, %arg4: memref<1x32xf32, #tpu.memory_space<vmem>>, %arg5: memref<1x8x32xf32, #tpu.memory_space<vmem>>) attributes {dimension_semantics = [#tpu.dimension_semantics<parallel>], iteration_bounds = array<i64: 2>, scalar_prefetch = 0 : i64, scratch_operands = 0 : i64, tpu.core_type = #tpu.core_type<tc>, window_params = [{transform_indices = @transform_0, window_bounds = array<i64: 1, 8, 32>}, {transform_indices = @transform_1, window_bounds = array<i64: 1, 8, 1>}, {pipeline_mode = #tpu.pipeline_mode<synchronous>, transform_indices = @transform_2, window_bounds = array<i64: 1, 32>}, {pipeline_mode = #tpu.pipeline_mode<synchronous>, transform_indices = @transform_3, window_bounds = array<i64: 1, 32>}, {transform_indices = @transform_4, window_bounds = array<i64: 1, 8, 32>}]} {
    %c0 = arith.constant 0 : index
    %c0_0 = arith.constant 0 : index
    %c0_1 = arith.constant 0 : index
    %0 = vector.load %arg1[%c0, %c0_0, %c0_1] : memref<1x8x32xf32, #tpu.memory_space<vmem>>, vector<1x8x32xf32>
    %1 = vector.shape_cast %0 : vector<1x8x32xf32> to vector<8x32xf32>
    %c0_2 = arith.constant 0 : index
    %c0_3 = arith.constant 0 : index
    %c0_4 = arith.constant 0 : index
    %2 = vector.load %arg2[%c0_2, %c0_3, %c0_4] : memref<1x8x1xf32, #tpu.memory_space<vmem>>, vector<1x8x1xf32>
    %3 = vector.shape_cast %2 : vector<1x8x1xf32> to vector<8x1xf32>
    %cst = arith.constant dense<0.000000e+00> : vector<1xf32>
    %4 = vector.multi_reduction <add>, %3, %cst [0] : vector<8x1xf32> to vector<1xf32>
    %5 = vector.shape_cast %4 : vector<1xf32> to vector<1x1xf32>
    %cst_5 = arith.constant 1.000000e+00 : f32
    %6 = vector.broadcast %cst_5 : f32 to vector<1x1xf32>
    %7 = arith.maximumf %5, %6 : vector<1x1xf32>
    %8 = vector.broadcast %3 : vector<8x1xf32> to vector<8x32xf32>
    %9 = arith.mulf %1, %8 : vector<8x32xf32>
    %cst_6 = arith.constant dense<0.000000e+00> : vector<32xf32>
    %10 = vector.multi_reduction <add>, %9, %cst_6 [0] : vector<8x32xf32> to vector<32xf32>
    %11 = vector.shape_cast %10 : vector<32xf32> to vector<1x32xf32>
    %12 = vector.broadcast %7 : vector<1x1xf32> to vector<1x32xf32>
    %13 = arith.divf %11, %12 : vector<1x32xf32>
    %14 = vector.broadcast %13 : vector<1x32xf32> to vector<8x32xf32>
    %15 = arith.subf %1, %14 : vector<8x32xf32>
    %16 = vector.broadcast %3 : vector<8x1xf32> to vector<8x32xf32>
    %17 = arith.mulf %15, %16 : vector<8x32xf32>
    %18 = arith.mulf %17, %17 : vector<8x32xf32>
    %cst_7 = arith.constant dense<0.000000e+00> : vector<32xf32>
    %19 = vector.multi_reduction <add>, %18, %cst_7 [0] : vector<8x32xf32> to vector<32xf32>
    %20 = vector.shape_cast %19 : vector<32xf32> to vector<1x32xf32>
    %21 = vector.broadcast %7 : vector<1x1xf32> to vector<1x32xf32>
    %22 = arith.divf %20, %21 : vector<1x32xf32>
    %23 = vector.broadcast %13 : vector<1x32xf32> to vector<8x32xf32>
    %24 = arith.subf %1, %23 : vector<8x32xf32>
    %cst_8 = arith.constant 9.99999974E-6 : f32
    %25 = vector.broadcast %cst_8 : f32 to vector<1x32xf32>
    %26 = arith.addf %22, %25 : vector<1x32xf32>
    %27 = math.rsqrt %26 : vector<1x32xf32>
    %28 = vector.broadcast %27 : vector<1x32xf32> to vector<8x32xf32>
    %29 = arith.mulf %24, %28 : vector<8x32xf32>
    %c0_9 = arith.constant 0 : index
    %c0_10 = arith.constant 0 : index
    %30 = vector.load %arg3[%c0_9, %c0_10] : memref<1x32xf32, #tpu.memory_space<vmem>>, vector<1x32xf32>
    %31 = vector.broadcast %30 : vector<1x32xf32> to vector<8x32xf32>
    %32 = arith.mulf %29, %31 : vector<8x32xf32>
    %c0_11 = arith.constant 0 : index
    %c0_12 = arith.constant 0 : index
    %33 = vector.load %arg4[%c0_11, %c0_12] : memref<1x32xf32, #tpu.memory_space<vmem>>, vector<1x32xf32>
    %34 = vector.broadcast %33 : vector<1x32xf32> to vector<8x32xf32>
    %35 = arith.addf %32, %34 : vector<8x32xf32>
    %36 = vector.broadcast %3 : vector<8x1xf32> to vector<8x32xf32>
    %37 = arith.mulf %35, %36 : vector<8x32xf32>
    %38 = vector.shape_cast %37 : vector<8x32xf32> to vector<1x8x32xf32>
    %c0_13 = arith.constant 0 : index
    %c0_14 = arith.constant 0 : index
    %c0_15 = arith.constant 0 : index
    %39 = vector.load %arg5[%c0_13, %c0_14, %c0_15] : memref<1x8x32xf32, #tpu.memory_space<vmem>>, vector<1x8x32xf32>
    tpu.vector_store %arg5[%c0_13, %c0_14, %c0_15], %38 {strides = array<i32>} : memref<1x8x32xf32, #tpu.memory_space<vmem>>, vector<1x8x32xf32>,
    return
  }
  func.func @transform_0(%arg0: i32) -> (i32, i32, i32) {
    %c0_i32 = arith.constant 0 : i32
    %c0_i32_0 = arith.constant 0 : i32
    %c0_i32_1 = arith.constant 0 : i32
    return %arg0, %c0_i32, %c0_i32_0 : i32, i32, i32
  }
  func.func @transform_1(%arg0: i32) -> (i32, i32, i32) {
    %c0_i32 = arith.constant 0 : i32
    %c0_i32_0 = arith.constant 0 : i32
    %c0_i32_1 = arith.constant 0 : i32
    return %arg0, %c0_i32, %c0_i32_0 : i32, i32, i32
  }
  func.func @transform_2(%arg0: i32) -> (i32, i32) {
    %c0_i32 = arith.constant 0 : i32
    %c0_i32_0 = arith.constant 0 : i32
    %c0_i32_1 = arith.constant 0 : i32
    return %c0_i32, %c0_i32_0 : i32, i32
  }
  func.func @transform_3(%arg0: i32) -> (i32, i32) {
    %c0_i32 = arith.constant 0 : i32
    %c0_i32_0 = arith.constant 0 : i32
    %c0_i32_1 = arith.constant 0 : i32
    return %c0_i32, %c0_i32_0 : i32, i32
  }
  func.func @transform_4(%arg0: i32) -> (i32, i32, i32) {
    %c0_i32 = arith.constant 0 : i32
    %c0_i32_0 = arith.constant 0 : i32
    %c0_i32_1 = arith.constant 0 : i32
    return %arg0, %c0_i32, %c0_i32_0 : i32, i32, i32
  }
}

module attributes {stable_mosaic.version = 11 : i64} {
  func.func @_msg_agg_kernel(%arg0: i32, %arg1: i32, %arg2: memref<8x32xf32, #tpu.memory_space<vmem>>, %arg3: memref<8x1xf32, #tpu.memory_space<vmem>>, %arg4: memref<8x4xf32, #tpu.memory_space<vmem>>, %arg5: memref<8x1x1x32xf32, #tpu.memory_space<vmem>>, %arg6: memref<8x1x1x16xf32, #tpu.memory_space<vmem>>, %arg7: memref<32x32xf32, #tpu.memory_space<vmem>>, %arg8: memref<32x32xf32, #tpu.memory_space<vmem>>, %arg9: memref<16x32xf32, #tpu.memory_space<vmem>>, %arg10: memref<1x32xf32, #tpu.memory_space<vmem>>, %arg11: memref<32x32xf32, #tpu.memory_space<vmem>>, %arg12: memref<1x32xf32, #tpu.memory_space<vmem>>, %arg13: memref<8x32xf32, #tpu.memory_space<vmem>>, %arg14: memref<8x32xf32, #tpu.memory_space<vmem>>, %arg15: memref<8x32xf32, #tpu.memory_space<vmem>>, %arg16: memref<8x1xf32, #tpu.memory_space<vmem>>) attributes {dimension_semantics = [#tpu.dimension_semantics<parallel>, #tpu.dimension_semantics<arbitrary>], iteration_bounds = array<i64: 2, 4>, scalar_prefetch = 0 : i64, scratch_operands = 3 : i64, tpu.core_type = #tpu.core_type<tc>, window_params = [{transform_indices = @transform_0, window_bounds = array<i64: 8, 32>}, {transform_indices = @transform_1, window_bounds = array<i64: 8, 1>}, {transform_indices = @transform_2, window_bounds = array<i64: 8, 4>}, {transform_indices = @transform_3, window_bounds = array<i64: 8, 1, 1, 32>}, {transform_indices = @transform_4, window_bounds = array<i64: 8, 1, 1, 16>}, {pipeline_mode = #tpu.pipeline_mode<synchronous>, transform_indices = @transform_5, window_bounds = array<i64: 32, 32>}, {pipeline_mode = #tpu.pipeline_mode<synchronous>, transform_indices = @transform_6, window_bounds = array<i64: 32, 32>}, {pipeline_mode = #tpu.pipeline_mode<synchronous>, transform_indices = @transform_7, window_bounds = array<i64: 16, 32>}, {pipeline_mode = #tpu.pipeline_mode<synchronous>, transform_indices = @transform_8, window_bounds = array<i64: 1, 32>}, {pipeline_mode = #tpu.pipeline_mode<synchronous>, transform_indices = @transform_9, window_bounds = array<i64: 32, 32>}, {pipeline_mode = #tpu.pipeline_mode<synchronous>, transform_indices = @transform_10, window_bounds = array<i64: 1, 32>}, {transform_indices = @transform_11, window_bounds = array<i64: 8, 32>}]} {
    %c0_i32 = arith.constant 0 : i32
    %0 = arith.cmpi eq, %arg1, %c0_i32 : i32
    %1 = arith.extui %0 : i1 to i32
    %c0_i32_0 = arith.constant 0 : i32
    %2 = arith.cmpi ne, %1, %c0_i32_0 : i32
    scf.if %2 {
      %c0_61 = arith.constant 0 : index
      %c0_62 = arith.constant 0 : index
      %117 = vector.load %arg2[%c0_61, %c0_62] : memref<8x32xf32, #tpu.memory_space<vmem>>, vector<8x32xf32>
      %c0_63 = arith.constant 0 : index
      %c0_64 = arith.constant 0 : index
      %118 = vector.load %arg3[%c0_63, %c0_64] : memref<8x1xf32, #tpu.memory_space<vmem>>, vector<8x1xf32>
      %119 = vector.broadcast %118 : vector<8x1xf32> to vector<8x32xf32>
      %120 = arith.mulf %117, %119 : vector<8x32xf32>
      %c0_65 = arith.constant 0 : index
      %c0_66 = arith.constant 0 : index
      %121 = vector.load %arg7[%c0_65, %c0_66] : memref<32x32xf32, #tpu.memory_space<vmem>>, vector<32x32xf32>
      %cst_67 = arith.constant dense<0.000000e+00> : vector<8x32xf32>
      %122 = tpu.matmul %120, %121, %cst_67 {dimension_numbers = #tpu.dot_dimension_numbers<[1], [0], [0], [1], [0, 0, 1, 1], [], []>} : vector<8x32xf32>, vector<32x32xf32>, vector<8x32xf32> -> vector<8x32xf32>
      %c0_68 = arith.constant 0 : index
      %c0_69 = arith.constant 0 : index
      %123 = vector.load %arg10[%c0_68, %c0_69] : memref<1x32xf32, #tpu.memory_space<vmem>>, vector<1x32xf32>
      %124 = vector.broadcast %123 : vector<1x32xf32> to vector<8x32xf32>
      %125 = arith.addf %122, %124 : vector<8x32xf32>
      %c0_70 = arith.constant 0 : index
      %c0_71 = arith.constant 0 : index
      %126 = vector.load %arg14[%c0_70, %c0_71] : memref<8x32xf32, #tpu.memory_space<vmem>>, vector<8x32xf32>
      tpu.vector_store %arg14[%c0_70, %c0_71], %125 {strides = array<i32>} : memref<8x32xf32, #tpu.memory_space<vmem>>, vector<8x32xf32>,
      %cst_72 = arith.constant 0.000000e+00 : f32
      %127 = vector.broadcast %cst_72 : f32 to vector<8x32xf32>
      %c0_73 = arith.constant 0 : index
      %c0_74 = arith.constant 0 : index
      %128 = vector.load %arg15[%c0_73, %c0_74] : memref<8x32xf32, #tpu.memory_space<vmem>>, vector<8x32xf32>
      tpu.vector_store %arg15[%c0_73, %c0_74], %127 {strides = array<i32>} : memref<8x32xf32, #tpu.memory_space<vmem>>, vector<8x32xf32>,
      %c0_75 = arith.constant 0 : index
      %c0_76 = arith.constant 0 : index
      %129 = vector.load %arg4[%c0_75, %c0_76] : memref<8x4xf32, #tpu.memory_space<vmem>>, vector<8x4xf32>
      %cst_77 = arith.constant dense<0.000000e+00> : vector<8xf32>
      %130 = vector.multi_reduction <add>, %129, %cst_77 [1] : vector<8x4xf32> to vector<8xf32>
      %131 = vector.shape_cast %130 : vector<8xf32> to vector<8x1xf32>
      %cst_78 = arith.constant 1.000000e+00 : f32
      %132 = vector.broadcast %cst_78 : f32 to vector<8x1xf32>
      %133 = arith.maximumf %131, %132 : vector<8x1xf32>
      %c0_79 = arith.constant 0 : index
      %c0_80 = arith.constant 0 : index
      %134 = vector.load %arg16[%c0_79, %c0_80] : memref<8x1xf32, #tpu.memory_space<vmem>>, vector<8x1xf32>
      tpu.vector_store %arg16[%c0_79, %c0_80], %133 {strides = array<i32>} : memref<8x1xf32, #tpu.memory_space<vmem>>, vector<8x1xf32>,
    } else {
    }
    %3 = tpu.iota {dimensions = array<i32: 1>} : vector<8x4xi32>
    %4 = vector.broadcast %arg1 : i32 to vector<8x4xi32>
    %5 = arith.cmpi eq, %3, %4 : vector<8x4xi32>
    %c0 = arith.constant 0 : index
    %c0_1 = arith.constant 0 : index
    %6 = vector.load %arg4[%c0, %c0_1] : memref<8x4xf32, #tpu.memory_space<vmem>>, vector<8x4xf32>
    %cst = arith.constant 0.000000e+00 : f32
    %7 = vector.broadcast %cst : f32 to vector<8x4xf32>
    %8 = arith.select %5, %6, %7 : vector<8x4xi1>, vector<8x4xf32>
    %cst_2 = arith.constant dense<0.000000e+00> : vector<8xf32>
    %9 = vector.multi_reduction <add>, %8, %cst_2 [1] : vector<8x4xf32> to vector<8xf32>
    %10 = vector.shape_cast %9 : vector<8xf32> to vector<8x1xf32>
    %c0_3 = arith.constant 0 : index
    %c0_4 = arith.constant 0 : index
    %c0_5 = arith.constant 0 : index
    %c0_6 = arith.constant 0 : index
    %11 = vector.load %arg5[%c0_3, %c0_4, %c0_5, %c0_6] : memref<8x1x1x32xf32, #tpu.memory_space<vmem>>, vector<8x1x1x32xf32>
    %12 = vector.shape_cast %11 : vector<8x1x1x32xf32> to vector<8x32xf32>
    %c0_7 = arith.constant 0 : index
    %c0_8 = arith.constant 0 : index
    %c0_9 = arith.constant 0 : index
    %c0_10 = arith.constant 0 : index
    %13 = vector.load %arg6[%c0_7, %c0_8, %c0_9, %c0_10] : memref<8x1x1x16xf32, #tpu.memory_space<vmem>>, vector<8x1x1x16xf32>
    %14 = vector.shape_cast %13 : vector<8x1x1x16xf32> to vector<8x16xf32>
    %c0_11 = arith.constant 0 : index
    %c0_12 = arith.constant 0 : index
    %15 = vector.load %arg14[%c0_11, %c0_12] : memref<8x32xf32, #tpu.memory_space<vmem>>, vector<8x32xf32>
    %c0_13 = arith.constant 0 : index
    %c0_14 = arith.constant 0 : index
    %16 = vector.load %arg8[%c0_13, %c0_14] : memref<32x32xf32, #tpu.memory_space<vmem>>, vector<32x32xf32>
    %cst_15 = arith.constant dense<0.000000e+00> : vector<8x32xf32>
    %17 = tpu.matmul %12, %16, %cst_15 {dimension_numbers = #tpu.dot_dimension_numbers<[1], [0], [0], [1], [0, 0, 1, 1], [], []>} : vector<8x32xf32>, vector<32x32xf32>, vector<8x32xf32> -> vector<8x32xf32>
    %18 = arith.addf %15, %17 : vector<8x32xf32>
    %c0_16 = arith.constant 0 : index
    %c0_17 = arith.constant 0 : index
    %19 = vector.load %arg9[%c0_16, %c0_17] : memref<16x32xf32, #tpu.memory_space<vmem>>, vector<16x32xf32>
    %cst_18 = arith.constant dense<0.000000e+00> : vector<8x32xf32>
    %20 = tpu.matmul %14, %19, %cst_18 {dimension_numbers = #tpu.dot_dimension_numbers<[1], [0], [0], [1], [0, 0, 1, 1], [], []>} : vector<8x16xf32>, vector<16x32xf32>, vector<8x32xf32> -> vector<8x32xf32>
    %21 = arith.addf %18, %20 : vector<8x32xf32>
    %cst_19 = arith.constant 5.000000e-01 : f32
    %22 = vector.broadcast %cst_19 : f32 to vector<8x32xf32>
    %23 = arith.mulf %22, %21 : vector<8x32xf32>
    %cst_20 = arith.constant 0.707106769 : f32
    %24 = vector.broadcast %cst_20 : f32 to vector<8x32xf32>
    %25 = arith.mulf %21, %24 : vector<8x32xf32>
    %cst_21 = arith.constant 0.000000e+00 : f32
    %26 = vector.broadcast %cst_21 : f32 to vector<8x32xf32>
    %27 = arith.cmpf oge, %25, %26 : vector<8x32xf32>
    %cst_22 = arith.constant 1.000000e+00 : f32
    %cst_23 = arith.constant -1.000000e+00 : f32
    %28 = vector.broadcast %cst_22 : f32 to vector<8x32xf32>
    %29 = vector.broadcast %cst_23 : f32 to vector<8x32xf32>
    %30 = arith.select %27, %28, %29 : vector<8x32xi1>, vector<8x32xf32>
    %31 = math.absf %25 : vector<8x32xf32>
    %cst_24 = arith.constant 0.327591091 : f32
    %32 = vector.broadcast %cst_24 : f32 to vector<8x32xf32>
    %33 = arith.mulf %32, %31 : vector<8x32xf32>
    %cst_25 = arith.constant 1.000000e+00 : f32
    %34 = vector.broadcast %cst_25 : f32 to vector<8x32xf32>
    %35 = arith.addf %34, %33 : vector<8x32xf32>
    %cst_26 = arith.constant 1.000000e+00 : f32
    %36 = vector.broadcast %cst_26 : f32 to vector<8x32xf32>
    %37 = arith.divf %36, %35 : vector<8x32xf32>
    %cst_27 = arith.constant 1.06140542 : f32
    %38 = vector.broadcast %cst_27 : f32 to vector<8x32xf32>
    %39 = arith.mulf %38, %37 : vector<8x32xf32>
    %cst_28 = arith.constant -1.45315206 : f32
    %40 = vector.broadcast %cst_28 : f32 to vector<8x32xf32>
    %41 = arith.addf %39, %40 : vector<8x32xf32>
    %42 = arith.mulf %41, %37 : vector<8x32xf32>
    %cst_29 = arith.constant 1.42141378 : f32
    %43 = vector.broadcast %cst_29 : f32 to vector<8x32xf32>
    %44 = arith.addf %42, %43 : vector<8x32xf32>
    %45 = arith.mulf %44, %37 : vector<8x32xf32>
    %cst_30 = arith.constant -0.284496725 : f32
    %46 = vector.broadcast %cst_30 : f32 to vector<8x32xf32>
    %47 = arith.addf %45, %46 : vector<8x32xf32>
    %48 = arith.mulf %47, %37 : vector<8x32xf32>
    %cst_31 = arith.constant 0.254829586 : f32
    %49 = vector.broadcast %cst_31 : f32 to vector<8x32xf32>
    %50 = arith.addf %48, %49 : vector<8x32xf32>
    %51 = arith.mulf %50, %37 : vector<8x32xf32>
    %cst_32 = arith.constant 0.000000e+00 : f32
    %52 = vector.broadcast %cst_32 : f32 to vector<8x32xf32>
    %53 = arith.subf %52, %31 : vector<8x32xf32>
    %54 = arith.mulf %53, %31 : vector<8x32xf32>
    %55 = math.exp %54 : vector<8x32xf32>
    %56 = arith.mulf %51, %55 : vector<8x32xf32>
    %cst_33 = arith.constant 1.000000e+00 : f32
    %57 = vector.broadcast %cst_33 : f32 to vector<8x32xf32>
    %58 = arith.subf %57, %56 : vector<8x32xf32>
    %59 = arith.mulf %30, %58 : vector<8x32xf32>
    %cst_34 = arith.constant 1.000000e+00 : f32
    %60 = vector.broadcast %cst_34 : f32 to vector<8x32xf32>
    %61 = arith.addf %60, %59 : vector<8x32xf32>
    %62 = arith.mulf %23, %61 : vector<8x32xf32>
    %c0_35 = arith.constant 0 : index
    %c0_36 = arith.constant 0 : index
    %63 = vector.load %arg11[%c0_35, %c0_36] : memref<32x32xf32, #tpu.memory_space<vmem>>, vector<32x32xf32>
    %c0_37 = arith.constant 0 : index
    %c0_38 = arith.constant 0 : index
    %64 = vector.load %arg12[%c0_37, %c0_38] : memref<1x32xf32, #tpu.memory_space<vmem>>, vector<1x32xf32>
    %cst_39 = arith.constant dense<0.000000e+00> : vector<8x32xf32>
    %65 = tpu.matmul %62, %63, %cst_39 {dimension_numbers = #tpu.dot_dimension_numbers<[1], [0], [0], [1], [0, 0, 1, 1], [], []>} : vector<8x32xf32>, vector<32x32xf32>, vector<8x32xf32> -> vector<8x32xf32>
    %66 = vector.broadcast %64 : vector<1x32xf32> to vector<8x32xf32>
    %67 = arith.addf %65, %66 : vector<8x32xf32>
    %cst_40 = arith.constant 5.000000e-01 : f32
    %68 = vector.broadcast %cst_40 : f32 to vector<8x32xf32>
    %69 = arith.mulf %68, %67 : vector<8x32xf32>
    %cst_41 = arith.constant 0.707106769 : f32
    %70 = vector.broadcast %cst_41 : f32 to vector<8x32xf32>
    %71 = arith.mulf %67, %70 : vector<8x32xf32>
    %cst_42 = arith.constant 0.000000e+00 : f32
    %72 = vector.broadcast %cst_42 : f32 to vector<8x32xf32>
    %73 = arith.cmpf oge, %71, %72 : vector<8x32xf32>
    %cst_43 = arith.constant 1.000000e+00 : f32
    %cst_44 = arith.constant -1.000000e+00 : f32
    %74 = vector.broadcast %cst_43 : f32 to vector<8x32xf32>
    %75 = vector.broadcast %cst_44 : f32 to vector<8x32xf32>
    %76 = arith.select %73, %74, %75 : vector<8x32xi1>, vector<8x32xf32>
    %77 = math.absf %71 : vector<8x32xf32>
    %cst_45 = arith.constant 0.327591091 : f32
    %78 = vector.broadcast %cst_45 : f32 to vector<8x32xf32>
    %79 = arith.mulf %78, %77 : vector<8x32xf32>
    %cst_46 = arith.constant 1.000000e+00 : f32
    %80 = vector.broadcast %cst_46 : f32 to vector<8x32xf32>
    %81 = arith.addf %80, %79 : vector<8x32xf32>
    %cst_47 = arith.constant 1.000000e+00 : f32
    %82 = vector.broadcast %cst_47 : f32 to vector<8x32xf32>
    %83 = arith.divf %82, %81 : vector<8x32xf32>
    %cst_48 = arith.constant 1.06140542 : f32
    %84 = vector.broadcast %cst_48 : f32 to vector<8x32xf32>
    %85 = arith.mulf %84, %83 : vector<8x32xf32>
    %cst_49 = arith.constant -1.45315206 : f32
    %86 = vector.broadcast %cst_49 : f32 to vector<8x32xf32>
    %87 = arith.addf %85, %86 : vector<8x32xf32>
    %88 = arith.mulf %87, %83 : vector<8x32xf32>
    %cst_50 = arith.constant 1.42141378 : f32
    %89 = vector.broadcast %cst_50 : f32 to vector<8x32xf32>
    %90 = arith.addf %88, %89 : vector<8x32xf32>
    %91 = arith.mulf %90, %83 : vector<8x32xf32>
    %cst_51 = arith.constant -0.284496725 : f32
    %92 = vector.broadcast %cst_51 : f32 to vector<8x32xf32>
    %93 = arith.addf %91, %92 : vector<8x32xf32>
    %94 = arith.mulf %93, %83 : vector<8x32xf32>
    %cst_52 = arith.constant 0.254829586 : f32
    %95 = vector.broadcast %cst_52 : f32 to vector<8x32xf32>
    %96 = arith.addf %94, %95 : vector<8x32xf32>
    %97 = arith.mulf %96, %83 : vector<8x32xf32>
    %cst_53 = arith.constant 0.000000e+00 : f32
    %98 = vector.broadcast %cst_53 : f32 to vector<8x32xf32>
    %99 = arith.subf %98, %77 : vector<8x32xf32>
    %100 = arith.mulf %99, %77 : vector<8x32xf32>
    %101 = math.exp %100 : vector<8x32xf32>
    %102 = arith.mulf %97, %101 : vector<8x32xf32>
    %cst_54 = arith.constant 1.000000e+00 : f32
    %103 = vector.broadcast %cst_54 : f32 to vector<8x32xf32>
    %104 = arith.subf %103, %102 : vector<8x32xf32>
    %105 = arith.mulf %76, %104 : vector<8x32xf32>
    %cst_55 = arith.constant 1.000000e+00 : f32
    %106 = vector.broadcast %cst_55 : f32 to vector<8x32xf32>
    %107 = arith.addf %106, %105 : vector<8x32xf32>
    %108 = arith.mulf %69, %107 : vector<8x32xf32>
    %c0_56 = arith.constant 0 : index
    %c0_57 = arith.constant 0 : index
    %109 = vector.load %arg15[%c0_56, %c0_57] : memref<8x32xf32, #tpu.memory_space<vmem>>, vector<8x32xf32>
    %110 = vector.broadcast %10 : vector<8x1xf32> to vector<8x32xf32>
    %111 = arith.mulf %108, %110 : vector<8x32xf32>
    %112 = arith.addf %109, %111 : vector<8x32xf32>
    %c0_58 = arith.constant 0 : index
    %c0_59 = arith.constant 0 : index
    %113 = vector.load %arg15[%c0_58, %c0_59] : memref<8x32xf32, #tpu.memory_space<vmem>>, vector<8x32xf32>
    tpu.vector_store %arg15[%c0_58, %c0_59], %112 {strides = array<i32>} : memref<8x32xf32, #tpu.memory_space<vmem>>, vector<8x32xf32>,
    %c3_i32 = arith.constant 3 : i32
    %114 = arith.cmpi eq, %arg1, %c3_i32 : i32
    %115 = arith.extui %114 : i1 to i32
    %c0_i32_60 = arith.constant 0 : i32
    %116 = arith.cmpi ne, %115, %c0_i32_60 : i32
    scf.if %116 {
      %c0_61 = arith.constant 0 : index
      %c0_62 = arith.constant 0 : index
      %117 = vector.load %arg15[%c0_61, %c0_62] : memref<8x32xf32, #tpu.memory_space<vmem>>, vector<8x32xf32>
      %c0_63 = arith.constant 0 : index
      %c0_64 = arith.constant 0 : index
      %118 = vector.load %arg16[%c0_63, %c0_64] : memref<8x1xf32, #tpu.memory_space<vmem>>, vector<8x1xf32>
      %119 = vector.broadcast %118 : vector<8x1xf32> to vector<8x32xf32>
      %120 = arith.divf %117, %119 : vector<8x32xf32>
      %c0_65 = arith.constant 0 : index
      %c0_66 = arith.constant 0 : index
      %121 = vector.load %arg2[%c0_65, %c0_66] : memref<8x32xf32, #tpu.memory_space<vmem>>, vector<8x32xf32>
      %122 = arith.addf %121, %120 : vector<8x32xf32>
      %c0_67 = arith.constant 0 : index
      %c0_68 = arith.constant 0 : index
      %123 = vector.load %arg3[%c0_67, %c0_68] : memref<8x1xf32, #tpu.memory_space<vmem>>, vector<8x1xf32>
      %124 = vector.broadcast %123 : vector<8x1xf32> to vector<8x32xf32>
      %125 = arith.mulf %122, %124 : vector<8x32xf32>
      %c0_69 = arith.constant 0 : index
      %c0_70 = arith.constant 0 : index
      %126 = vector.load %arg13[%c0_69, %c0_70] : memref<8x32xf32, #tpu.memory_space<vmem>>, vector<8x32xf32>
      tpu.vector_store %arg13[%c0_69, %c0_70], %125 {strides = array<i32>} : memref<8x32xf32, #tpu.memory_space<vmem>>, vector<8x32xf32>,
    } else {
    }
    return
  }
  func.func @transform_0(%arg0: i32, %arg1: i32) -> (i32, i32) {
    %c0_i32 = arith.constant 0 : i32
    %c0_i32_0 = arith.constant 0 : i32
    return %arg0, %c0_i32 : i32, i32
  }
  func.func @transform_1(%arg0: i32, %arg1: i32) -> (i32, i32) {
    %c0_i32 = arith.constant 0 : i32
    %c0_i32_0 = arith.constant 0 : i32
    return %arg0, %c0_i32 : i32, i32
  }
  func.func @transform_2(%arg0: i32, %arg1: i32) -> (i32, i32) {
    %c0_i32 = arith.constant 0 : i32
    %c0_i32_0 = arith.constant 0 : i32
    return %arg0, %c0_i32 : i32, i32
  }
  func.func @transform_3(%arg0: i32, %arg1: i32) -> (i32, i32, i32, i32) {
    %c0_i32 = arith.constant 0 : i32
    %c0_i32_0 = arith.constant 0 : i32
    %c0_i32_1 = arith.constant 0 : i32
    return %arg0, %arg1, %c0_i32, %c0_i32_0 : i32, i32, i32, i32
  }
  func.func @transform_4(%arg0: i32, %arg1: i32) -> (i32, i32, i32, i32) {
    %c0_i32 = arith.constant 0 : i32
    %c0_i32_0 = arith.constant 0 : i32
    %c0_i32_1 = arith.constant 0 : i32
    return %arg0, %arg1, %c0_i32, %c0_i32_0 : i32, i32, i32, i32
  }
  func.func @transform_5(%arg0: i32, %arg1: i32) -> (i32, i32) {
    %c0_i32 = arith.constant 0 : i32
    %c0_i32_0 = arith.constant 0 : i32
    %c0_i32_1 = arith.constant 0 : i32
    return %c0_i32, %c0_i32_0 : i32, i32
  }
  func.func @transform_6(%arg0: i32, %arg1: i32) -> (i32, i32) {
    %c0_i32 = arith.constant 0 : i32
    %c0_i32_0 = arith.constant 0 : i32
    %c0_i32_1 = arith.constant 0 : i32
    return %c0_i32, %c0_i32_0 : i32, i32
  }
  func.func @transform_7(%arg0: i32, %arg1: i32) -> (i32, i32) {
    %c0_i32 = arith.constant 0 : i32
    %c0_i32_0 = arith.constant 0 : i32
    %c0_i32_1 = arith.constant 0 : i32
    return %c0_i32, %c0_i32_0 : i32, i32
  }
  func.func @transform_8(%arg0: i32, %arg1: i32) -> (i32, i32) {
    %c0_i32 = arith.constant 0 : i32
    %c0_i32_0 = arith.constant 0 : i32
    %c0_i32_1 = arith.constant 0 : i32
    return %c0_i32, %c0_i32_0 : i32, i32
  }
  func.func @transform_9(%arg0: i32, %arg1: i32) -> (i32, i32) {
    %c0_i32 = arith.constant 0 : i32
    %c0_i32_0 = arith.constant 0 : i32
    %c0_i32_1 = arith.constant 0 : i32
    return %c0_i32, %c0_i32_0 : i32, i32
  }
  func.func @transform_10(%arg0: i32, %arg1: i32) -> (i32, i32) {
    %c0_i32 = arith.constant 0 : i32
    %c0_i32_0 = arith.constant 0 : i32
    %c0_i32_1 = arith.constant 0 : i32
    return %c0_i32, %c0_i32_0 : i32, i32
  }
  func.func @transform_11(%arg0: i32, %arg1: i32) -> (i32, i32) {
    %c0_i32 = arith.constant 0 : i32
    %c0_i32_0 = arith.constant 0 : i32
    return %arg0, %c0_i32 : i32, i32
  }
}

module attributes {stable_mosaic.version = 11 : i64} {
  func.func @_edge_update_kernel(%arg0: i32, %arg1: i32, %arg2: memref<8x32xf32, #tpu.memory_space<vmem>>, %arg3: memref<8x1x1x32xf32, #tpu.memory_space<vmem>>, %arg4: memref<8x1x1x16xf32, #tpu.memory_space<vmem>>, %arg5: memref<32x16xf32, #tpu.memory_space<vmem>>, %arg6: memref<32x16xf32, #tpu.memory_space<vmem>>, %arg7: memref<16x16xf32, #tpu.memory_space<vmem>>, %arg8: memref<1x16xf32, #tpu.memory_space<vmem>>, %arg9: memref<16x16xf32, #tpu.memory_space<vmem>>, %arg10: memref<1x16xf32, #tpu.memory_space<vmem>>, %arg11: memref<8x1x1x16xf32, #tpu.memory_space<vmem>>, %arg12: memref<8x16xf32, #tpu.memory_space<vmem>>) attributes {dimension_semantics = [#tpu.dimension_semantics<parallel>, #tpu.dimension_semantics<arbitrary>], iteration_bounds = array<i64: 2, 4>, scalar_prefetch = 0 : i64, scratch_operands = 1 : i64, tpu.core_type = #tpu.core_type<tc>, window_params = [{transform_indices = @transform_0, window_bounds = array<i64: 8, 32>}, {transform_indices = @transform_1, window_bounds = array<i64: 8, 1, 1, 32>}, {transform_indices = @transform_2, window_bounds = array<i64: 8, 1, 1, 16>}, {pipeline_mode = #tpu.pipeline_mode<synchronous>, transform_indices = @transform_3, window_bounds = array<i64: 32, 16>}, {pipeline_mode = #tpu.pipeline_mode<synchronous>, transform_indices = @transform_4, window_bounds = array<i64: 32, 16>}, {pipeline_mode = #tpu.pipeline_mode<synchronous>, transform_indices = @transform_5, window_bounds = array<i64: 16, 16>}, {pipeline_mode = #tpu.pipeline_mode<synchronous>, transform_indices = @transform_6, window_bounds = array<i64: 1, 16>}, {pipeline_mode = #tpu.pipeline_mode<synchronous>, transform_indices = @transform_7, window_bounds = array<i64: 16, 16>}, {pipeline_mode = #tpu.pipeline_mode<synchronous>, transform_indices = @transform_8, window_bounds = array<i64: 1, 16>}, {transform_indices = @transform_9, window_bounds = array<i64: 8, 1, 1, 16>}]} {
    %c0_i32 = arith.constant 0 : i32
    %0 = arith.cmpi eq, %arg1, %c0_i32 : i32
    %1 = arith.extui %0 : i1 to i32
    %c0_i32_0 = arith.constant 0 : i32
    %2 = arith.cmpi ne, %1, %c0_i32_0 : i32
    scf.if %2 {
      %c0_56 = arith.constant 0 : index
      %c0_57 = arith.constant 0 : index
      %105 = vector.load %arg2[%c0_56, %c0_57] : memref<8x32xf32, #tpu.memory_space<vmem>>, vector<8x32xf32>
      %c0_58 = arith.constant 0 : index
      %c0_59 = arith.constant 0 : index
      %106 = vector.load %arg5[%c0_58, %c0_59] : memref<32x16xf32, #tpu.memory_space<vmem>>, vector<32x16xf32>
      %cst_60 = arith.constant dense<0.000000e+00> : vector<8x16xf32>
      %107 = tpu.matmul %105, %106, %cst_60 {dimension_numbers = #tpu.dot_dimension_numbers<[1], [0], [0], [1], [0, 0, 1, 1], [], []>} : vector<8x32xf32>, vector<32x16xf32>, vector<8x16xf32> -> vector<8x16xf32>
      %c0_61 = arith.constant 0 : index
      %c0_62 = arith.constant 0 : index
      %108 = vector.load %arg8[%c0_61, %c0_62] : memref<1x16xf32, #tpu.memory_space<vmem>>, vector<1x16xf32>
      %109 = vector.broadcast %108 : vector<1x16xf32> to vector<8x16xf32>
      %110 = arith.addf %107, %109 : vector<8x16xf32>
      %c0_63 = arith.constant 0 : index
      %c0_64 = arith.constant 0 : index
      %111 = vector.load %arg12[%c0_63, %c0_64] : memref<8x16xf32, #tpu.memory_space<vmem>>, vector<8x16xf32>
      tpu.vector_store %arg12[%c0_63, %c0_64], %110 {strides = array<i32>} : memref<8x16xf32, #tpu.memory_space<vmem>>, vector<8x16xf32>,
    } else {
    }
    %c0 = arith.constant 0 : index
    %c0_1 = arith.constant 0 : index
    %c0_2 = arith.constant 0 : index
    %c0_3 = arith.constant 0 : index
    %3 = vector.load %arg3[%c0, %c0_1, %c0_2, %c0_3] : memref<8x1x1x32xf32, #tpu.memory_space<vmem>>, vector<8x1x1x32xf32>
    %4 = vector.shape_cast %3 : vector<8x1x1x32xf32> to vector<8x32xf32>
    %c0_4 = arith.constant 0 : index
    %c0_5 = arith.constant 0 : index
    %c0_6 = arith.constant 0 : index
    %c0_7 = arith.constant 0 : index
    %5 = vector.load %arg4[%c0_4, %c0_5, %c0_6, %c0_7] : memref<8x1x1x16xf32, #tpu.memory_space<vmem>>, vector<8x1x1x16xf32>
    %6 = vector.shape_cast %5 : vector<8x1x1x16xf32> to vector<8x16xf32>
    %c0_8 = arith.constant 0 : index
    %c0_9 = arith.constant 0 : index
    %7 = vector.load %arg12[%c0_8, %c0_9] : memref<8x16xf32, #tpu.memory_space<vmem>>, vector<8x16xf32>
    %c0_10 = arith.constant 0 : index
    %c0_11 = arith.constant 0 : index
    %8 = vector.load %arg6[%c0_10, %c0_11] : memref<32x16xf32, #tpu.memory_space<vmem>>, vector<32x16xf32>
    %cst = arith.constant dense<0.000000e+00> : vector<8x16xf32>
    %9 = tpu.matmul %4, %8, %cst {dimension_numbers = #tpu.dot_dimension_numbers<[1], [0], [0], [1], [0, 0, 1, 1], [], []>} : vector<8x32xf32>, vector<32x16xf32>, vector<8x16xf32> -> vector<8x16xf32>
    %10 = arith.addf %7, %9 : vector<8x16xf32>
    %c0_12 = arith.constant 0 : index
    %c0_13 = arith.constant 0 : index
    %11 = vector.load %arg7[%c0_12, %c0_13] : memref<16x16xf32, #tpu.memory_space<vmem>>, vector<16x16xf32>
    %cst_14 = arith.constant dense<0.000000e+00> : vector<8x16xf32>
    %12 = tpu.matmul %6, %11, %cst_14 {dimension_numbers = #tpu.dot_dimension_numbers<[1], [0], [0], [1], [0, 0, 1, 1], [], []>} : vector<8x16xf32>, vector<16x16xf32>, vector<8x16xf32> -> vector<8x16xf32>
    %13 = arith.addf %10, %12 : vector<8x16xf32>
    %cst_15 = arith.constant 5.000000e-01 : f32
    %14 = vector.broadcast %cst_15 : f32 to vector<8x16xf32>
    %15 = arith.mulf %14, %13 : vector<8x16xf32>
    %cst_16 = arith.constant 0.707106769 : f32
    %16 = vector.broadcast %cst_16 : f32 to vector<8x16xf32>
    %17 = arith.mulf %13, %16 : vector<8x16xf32>
    %cst_17 = arith.constant 0.000000e+00 : f32
    %18 = vector.broadcast %cst_17 : f32 to vector<8x16xf32>
    %19 = arith.cmpf oge, %17, %18 : vector<8x16xf32>
    %cst_18 = arith.constant 1.000000e+00 : f32
    %cst_19 = arith.constant -1.000000e+00 : f32
    %20 = vector.broadcast %cst_18 : f32 to vector<8x16xf32>
    %21 = vector.broadcast %cst_19 : f32 to vector<8x16xf32>
    %22 = arith.select %19, %20, %21 : vector<8x16xi1>, vector<8x16xf32>
    %23 = math.absf %17 : vector<8x16xf32>
    %cst_20 = arith.constant 0.327591091 : f32
    %24 = vector.broadcast %cst_20 : f32 to vector<8x16xf32>
    %25 = arith.mulf %24, %23 : vector<8x16xf32>
    %cst_21 = arith.constant 1.000000e+00 : f32
    %26 = vector.broadcast %cst_21 : f32 to vector<8x16xf32>
    %27 = arith.addf %26, %25 : vector<8x16xf32>
    %cst_22 = arith.constant 1.000000e+00 : f32
    %28 = vector.broadcast %cst_22 : f32 to vector<8x16xf32>
    %29 = arith.divf %28, %27 : vector<8x16xf32>
    %cst_23 = arith.constant 1.06140542 : f32
    %30 = vector.broadcast %cst_23 : f32 to vector<8x16xf32>
    %31 = arith.mulf %30, %29 : vector<8x16xf32>
    %cst_24 = arith.constant -1.45315206 : f32
    %32 = vector.broadcast %cst_24 : f32 to vector<8x16xf32>
    %33 = arith.addf %31, %32 : vector<8x16xf32>
    %34 = arith.mulf %33, %29 : vector<8x16xf32>
    %cst_25 = arith.constant 1.42141378 : f32
    %35 = vector.broadcast %cst_25 : f32 to vector<8x16xf32>
    %36 = arith.addf %34, %35 : vector<8x16xf32>
    %37 = arith.mulf %36, %29 : vector<8x16xf32>
    %cst_26 = arith.constant -0.284496725 : f32
    %38 = vector.broadcast %cst_26 : f32 to vector<8x16xf32>
    %39 = arith.addf %37, %38 : vector<8x16xf32>
    %40 = arith.mulf %39, %29 : vector<8x16xf32>
    %cst_27 = arith.constant 0.254829586 : f32
    %41 = vector.broadcast %cst_27 : f32 to vector<8x16xf32>
    %42 = arith.addf %40, %41 : vector<8x16xf32>
    %43 = arith.mulf %42, %29 : vector<8x16xf32>
    %cst_28 = arith.constant 0.000000e+00 : f32
    %44 = vector.broadcast %cst_28 : f32 to vector<8x16xf32>
    %45 = arith.subf %44, %23 : vector<8x16xf32>
    %46 = arith.mulf %45, %23 : vector<8x16xf32>
    %47 = math.exp %46 : vector<8x16xf32>
    %48 = arith.mulf %43, %47 : vector<8x16xf32>
    %cst_29 = arith.constant 1.000000e+00 : f32
    %49 = vector.broadcast %cst_29 : f32 to vector<8x16xf32>
    %50 = arith.subf %49, %48 : vector<8x16xf32>
    %51 = arith.mulf %22, %50 : vector<8x16xf32>
    %cst_30 = arith.constant 1.000000e+00 : f32
    %52 = vector.broadcast %cst_30 : f32 to vector<8x16xf32>
    %53 = arith.addf %52, %51 : vector<8x16xf32>
    %54 = arith.mulf %15, %53 : vector<8x16xf32>
    %c0_31 = arith.constant 0 : index
    %c0_32 = arith.constant 0 : index
    %55 = vector.load %arg9[%c0_31, %c0_32] : memref<16x16xf32, #tpu.memory_space<vmem>>, vector<16x16xf32>
    %c0_33 = arith.constant 0 : index
    %c0_34 = arith.constant 0 : index
    %56 = vector.load %arg10[%c0_33, %c0_34] : memref<1x16xf32, #tpu.memory_space<vmem>>, vector<1x16xf32>
    %cst_35 = arith.constant dense<0.000000e+00> : vector<8x16xf32>
    %57 = tpu.matmul %54, %55, %cst_35 {dimension_numbers = #tpu.dot_dimension_numbers<[1], [0], [0], [1], [0, 0, 1, 1], [], []>} : vector<8x16xf32>, vector<16x16xf32>, vector<8x16xf32> -> vector<8x16xf32>
    %58 = vector.broadcast %56 : vector<1x16xf32> to vector<8x16xf32>
    %59 = arith.addf %57, %58 : vector<8x16xf32>
    %cst_36 = arith.constant 5.000000e-01 : f32
    %60 = vector.broadcast %cst_36 : f32 to vector<8x16xf32>
    %61 = arith.mulf %60, %59 : vector<8x16xf32>
    %cst_37 = arith.constant 0.707106769 : f32
    %62 = vector.broadcast %cst_37 : f32 to vector<8x16xf32>
    %63 = arith.mulf %59, %62 : vector<8x16xf32>
    %cst_38 = arith.constant 0.000000e+00 : f32
    %64 = vector.broadcast %cst_38 : f32 to vector<8x16xf32>
    %65 = arith.cmpf oge, %63, %64 : vector<8x16xf32>
    %cst_39 = arith.constant 1.000000e+00 : f32
    %cst_40 = arith.constant -1.000000e+00 : f32
    %66 = vector.broadcast %cst_39 : f32 to vector<8x16xf32>
    %67 = vector.broadcast %cst_40 : f32 to vector<8x16xf32>
    %68 = arith.select %65, %66, %67 : vector<8x16xi1>, vector<8x16xf32>
    %69 = math.absf %63 : vector<8x16xf32>
    %cst_41 = arith.constant 0.327591091 : f32
    %70 = vector.broadcast %cst_41 : f32 to vector<8x16xf32>
    %71 = arith.mulf %70, %69 : vector<8x16xf32>
    %cst_42 = arith.constant 1.000000e+00 : f32
    %72 = vector.broadcast %cst_42 : f32 to vector<8x16xf32>
    %73 = arith.addf %72, %71 : vector<8x16xf32>
    %cst_43 = arith.constant 1.000000e+00 : f32
    %74 = vector.broadcast %cst_43 : f32 to vector<8x16xf32>
    %75 = arith.divf %74, %73 : vector<8x16xf32>
    %cst_44 = arith.constant 1.06140542 : f32
    %76 = vector.broadcast %cst_44 : f32 to vector<8x16xf32>
    %77 = arith.mulf %76, %75 : vector<8x16xf32>
    %cst_45 = arith.constant -1.45315206 : f32
    %78 = vector.broadcast %cst_45 : f32 to vector<8x16xf32>
    %79 = arith.addf %77, %78 : vector<8x16xf32>
    %80 = arith.mulf %79, %75 : vector<8x16xf32>
    %cst_46 = arith.constant 1.42141378 : f32
    %81 = vector.broadcast %cst_46 : f32 to vector<8x16xf32>
    %82 = arith.addf %80, %81 : vector<8x16xf32>
    %83 = arith.mulf %82, %75 : vector<8x16xf32>
    %cst_47 = arith.constant -0.284496725 : f32
    %84 = vector.broadcast %cst_47 : f32 to vector<8x16xf32>
    %85 = arith.addf %83, %84 : vector<8x16xf32>
    %86 = arith.mulf %85, %75 : vector<8x16xf32>
    %cst_48 = arith.constant 0.254829586 : f32
    %87 = vector.broadcast %cst_48 : f32 to vector<8x16xf32>
    %88 = arith.addf %86, %87 : vector<8x16xf32>
    %89 = arith.mulf %88, %75 : vector<8x16xf32>
    %cst_49 = arith.constant 0.000000e+00 : f32
    %90 = vector.broadcast %cst_49 : f32 to vector<8x16xf32>
    %91 = arith.subf %90, %69 : vector<8x16xf32>
    %92 = arith.mulf %91, %69 : vector<8x16xf32>
    %93 = math.exp %92 : vector<8x16xf32>
    %94 = arith.mulf %89, %93 : vector<8x16xf32>
    %cst_50 = arith.constant 1.000000e+00 : f32
    %95 = vector.broadcast %cst_50 : f32 to vector<8x16xf32>
    %96 = arith.subf %95, %94 : vector<8x16xf32>
    %97 = arith.mulf %68, %96 : vector<8x16xf32>
    %cst_51 = arith.constant 1.000000e+00 : f32
    %98 = vector.broadcast %cst_51 : f32 to vector<8x16xf32>
    %99 = arith.addf %98, %97 : vector<8x16xf32>
    %100 = arith.mulf %61, %99 : vector<8x16xf32>
    %101 = arith.addf %6, %100 : vector<8x16xf32>
    %c0_52 = arith.constant 0 : index
    %c0_53 = arith.constant 0 : index
    %c0_54 = arith.constant 0 : index
    %c0_55 = arith.constant 0 : index
    %102 = vector.load %arg11[%c0_52, %c0_53, %c0_54, %c0_55] : memref<8x1x1x16xf32, #tpu.memory_space<vmem>>, vector<8x1x1x16xf32>
    %103 = vector.shape_cast %102 : vector<8x1x1x16xf32> to vector<8x16xf32>
    %104 = vector.shape_cast %101 : vector<8x16xf32> to vector<8x1x1x16xf32>
    tpu.vector_store %arg11[%c0_52, %c0_53, %c0_54, %c0_55], %104 {strides = array<i32>} : memref<8x1x1x16xf32, #tpu.memory_space<vmem>>, vector<8x1x1x16xf32>,
    return
  }
  func.func @transform_0(%arg0: i32, %arg1: i32) -> (i32, i32) {
    %c0_i32 = arith.constant 0 : i32
    %c0_i32_0 = arith.constant 0 : i32
    return %arg0, %c0_i32 : i32, i32
  }
  func.func @transform_1(%arg0: i32, %arg1: i32) -> (i32, i32, i32, i32) {
    %c0_i32 = arith.constant 0 : i32
    %c0_i32_0 = arith.constant 0 : i32
    %c0_i32_1 = arith.constant 0 : i32
    return %arg0, %arg1, %c0_i32, %c0_i32_0 : i32, i32, i32, i32
  }
  func.func @transform_2(%arg0: i32, %arg1: i32) -> (i32, i32, i32, i32) {
    %c0_i32 = arith.constant 0 : i32
    %c0_i32_0 = arith.constant 0 : i32
    %c0_i32_1 = arith.constant 0 : i32
    return %arg0, %arg1, %c0_i32, %c0_i32_0 : i32, i32, i32, i32
  }
  func.func @transform_3(%arg0: i32, %arg1: i32) -> (i32, i32) {
    %c0_i32 = arith.constant 0 : i32
    %c0_i32_0 = arith.constant 0 : i32
    %c0_i32_1 = arith.constant 0 : i32
    return %c0_i32, %c0_i32_0 : i32, i32
  }
  func.func @transform_4(%arg0: i32, %arg1: i32) -> (i32, i32) {
    %c0_i32 = arith.constant 0 : i32
    %c0_i32_0 = arith.constant 0 : i32
    %c0_i32_1 = arith.constant 0 : i32
    return %c0_i32, %c0_i32_0 : i32, i32
  }
  func.func @transform_5(%arg0: i32, %arg1: i32) -> (i32, i32) {
    %c0_i32 = arith.constant 0 : i32
    %c0_i32_0 = arith.constant 0 : i32
    %c0_i32_1 = arith.constant 0 : i32
    return %c0_i32, %c0_i32_0 : i32, i32
  }
  func.func @transform_6(%arg0: i32, %arg1: i32) -> (i32, i32) {
    %c0_i32 = arith.constant 0 : i32
    %c0_i32_0 = arith.constant 0 : i32
    %c0_i32_1 = arith.constant 0 : i32
    return %c0_i32, %c0_i32_0 : i32, i32
  }
  func.func @transform_7(%arg0: i32, %arg1: i32) -> (i32, i32) {
    %c0_i32 = arith.constant 0 : i32
    %c0_i32_0 = arith.constant 0 : i32
    %c0_i32_1 = arith.constant 0 : i32
    return %c0_i32, %c0_i32_0 : i32, i32
  }
  func.func @transform_8(%arg0: i32, %arg1: i32) -> (i32, i32) {
    %c0_i32 = arith.constant 0 : i32
    %c0_i32_0 = arith.constant 0 : i32
    %c0_i32_1 = arith.constant 0 : i32
    return %c0_i32, %c0_i32_0 : i32, i32
  }
  func.func @transform_9(%arg0: i32, %arg1: i32) -> (i32, i32, i32, i32) {
    %c0_i32 = arith.constant 0 : i32
    %c0_i32_0 = arith.constant 0 : i32
    %c0_i32_1 = arith.constant 0 : i32
    return %arg0, %arg1, %c0_i32, %c0_i32_0 : i32, i32, i32, i32
  }
}

</mosaic_0001>

<llo_original>
// kernel: res_mpnn_forward.4
$region0: #{res_mpnn_forward.4}
  #allocation0 [shape = 'u32[]', space=smem, size = 0x4, offset = 0x4, fixed_abs, tag = 'smem constant byte address 0x4 - core index']
  #allocation1 [shape = 'u32[144,128]{1,0:T(1,128)}', space=vmem, size = 0x12000, scoped, tag = 'internal scratch']
  %s0 = inlined_call_operand.vmem [shape: f32[2,8,32], index: 0, kind: input, shape index: {}]
  %s1 = inlined_call_operand.vmem [shape: f32[2,8,1], index: 1, kind: input, shape index: {}]
  %s2 = inlined_call_operand.vmem [shape: f32[1,32], index: 2, kind: input, shape index: {}]
  %s3 = inlined_call_operand.vmem [shape: f32[1,32], index: 3, kind: input, shape index: {}]
  %s4 = inlined_call_operand.vmem [shape: f32[2,8,32], index: 4, kind: output, shape index: {}]
  %s5 = sld [smem:[#allocation0]]
  $region49: #{res_mpnn_forward.4} parent=0
    _
  %s7 = ssub.s32 1, %s5
  %s8 = scalar_select 0, %s7, %s5
  loop: start=0, step=1, limit=4
  $region2: #{res_mpnn_forward.4} parent=0 // loop_pre_header
    _
  $region3: #{res_mpnn_forward.4} parent=0 // loop_header
    %s10 = sphi 0, %s14
    %p11 = scmp.ge.s32.totalorder %s10, 4
    %s20 = sphi 0, %s22
    %s23 = sphi 0, %s20
    %s24 = sphi 0, %s23
    %s40 = sphi 0, %s24
    %s46 = sphi 0, %s48
    %s49 = sphi 0, %s46
    %s50 = sphi 0, %s49
    %s66 = sphi 0, %s50
    %s70 = sphi 0, %s70
    %s72 = sphi 0, %s70
    %s73 = sphi 0, %s72
    %s87 = sphi 0, %s73
    %s91 = sphi 0, %s91
    %s93 = sphi 0, %s91
    %s94 = sphi 0, %s93
    %s108 = sphi 0, %s94
    %s114 = sphi 0, %s116
    %s117 = sphi 0, %s114
    %s118 = sphi 0, %s117
    %s134 = sphi 0, %s118
  $region4: #{res_mpnn_forward.4} parent=0 // loop_header_branch
    %13 = sbr.rel (%p11) target = $region8
  $region5: #{res_mpnn_forward.4} parent=0 // loop_body
    %s15 = ssub.s32 %s10, 1
    %s16 = ssub.s32 %s10, 2
    %s17 = sadd.s32 %s10, 1
    %s18 = ssub.s32 %s10, %s17
    %p19 = scmp.eq.s32.totalorder %s18, 0
    %s21 = sadd.s32 %s20, 1
    %s22 = scalar_select %p19, %s20, %s21
    %p25 = pneg %p19
    %p26 = scmp.eq.s32.totalorder %s10, 1
    %p27 = por %p25, %p26
    %p28 = scmp.ne.s32.totalorder %s20, %s23
    %p29 = scmp.eq.s32.totalorder %s10, 0
    %p30 = por %p28, %p29
    %p31 = scmp.ne.s32.totalorder %s20, %s23
    %p32 = scmp.eq.s32.totalorder %s15, 1
    %p33 = por %p31, %p32
    %p34 = scmp.ne.s32.totalorder %s23, %s24
    %p35 = scmp.eq.s32.totalorder %s15, 0
    %p36 = por %p34, %p35
    %p37 = scmp.ne.s32.totalorder %s23, %s24
    %p38 = scmp.eq.s32.totalorder %s16, 1
    %p39 = por %p37, %p38
    %p41 = scmp.ne.s32.totalorder %s24, %s40
    %p42 = scmp.eq.s32.totalorder %s16, 0
    %p43 = por %p41, %p42
    %s44 = ssub.s32 %s10, %s17
    %p45 = scmp.eq.s32.totalorder %s44, 0
    %s47 = sadd.s32 %s46, 1
    %s48 = scalar_select %p45, %s46, %s47
    %p51 = pneg %p45
    %p52 = scmp.eq.s32.totalorder %s10, 1
    %p53 = por %p51, %p52
    %p54 = scmp.ne.s32.totalorder %s46, %s49
    %p55 = scmp.eq.s32.totalorder %s10, 0
    %p56 = por %p54, %p55
    %p57 = scmp.ne.s32.totalorder %s46, %s49
    %p58 = scmp.eq.s32.totalorder %s15, 1
    %p59 = por %p57, %p58
    %p60 = scmp.ne.s32.totalorder %s49, %s50
    %p61 = scmp.eq.s32.totalorder %s15, 0
    %p62 = por %p60, %p61
    %p63 = scmp.ne.s32.totalorder %s49, %s50
    %p64 = scmp.eq.s32.totalorder %s16, 1
    %p65 = por %p63, %p64
    %p67 = scmp.ne.s32.totalorder %s50, %s66
    %p68 = scmp.eq.s32.totalorder %s16, 0
    %p69 = por %p67, %p68
    %s71 = sadd.s32 %s70, 1
    %p74 = scmp.eq.s32.totalorder %s10, 1
    %p75 = scmp.ne.s32.totalorder %s70, %s72
    %p76 = scmp.eq.s32.totalorder %s10, 0
    %p77 = por %p75, %p76
    %p78 = scmp.ne.s32.totalorder %s70, %s72
    %p79 = scmp.eq.s32.totalorder %s15, 1
    %p80 = por %p78, %p79
    %p81 = scmp.ne.s32.totalorder %s72, %s73
    %p82 = scmp.eq.s32.totalorder %s15, 0
    %p83 = por %p81, %p82
    %p84 = scmp.ne.s32.totalorder %s72, %s73
    %p85 = scmp.eq.s32.totalorder %s16, 1
    %p86 = por %p84, %p85
    %p88 = scmp.ne.s32.totalorder %s73, %s87
    %p89 = scmp.eq.s32.totalorder %s16, 0
    %p90 = por %p88, %p89
    %s92 = sadd.s32 %s91, 1
    %p95 = scmp.eq.s32.totalorder %s10, 1
    %p96 = scmp.ne.s32.totalorder %s91, %s93
    %p97 = scmp.eq.s32.totalorder %s10, 0
    %p98 = por %p96, %p97
    %p99 = scmp.ne.s32.totalorder %s91, %s93
    %p100 = scmp.eq.s32.totalorder %s15, 1
    %p101 = por %p99, %p100
    %p102 = scmp.ne.s32.totalorder %s93, %s94
    %p103 = scmp.eq.s32.totalorder %s15, 0
    %p104 = por %p102, %p103
    %p105 = scmp.ne.s32.totalorder %s93, %s94
    %p106 = scmp.eq.s32.totalorder %s16, 1
    %p107 = por %p105, %p106
    %p109 = scmp.ne.s32.totalorder %s94, %s108
    %p110 = scmp.eq.s32.totalorder %s16, 0
    %p111 = por %p109, %p110
    %s112 = ssub.s32 %s10, %s17
    %p113 = scmp.eq.s32.totalorder %s112, 0
    %s115 = sadd.s32 %s114, 1
    %s116 = scalar_select %p113, %s114, %s115
    %p119 = pneg %p113
    %p120 = scmp.eq.s32.totalorder %s10, 1
    %p121 = por %p119, %p120
    %p122 = scmp.ne.s32.totalorder %s114, %s117
    %p123 = scmp.eq.s32.totalorder %s10, 0
    %p124 = por %p122, %p123
    %p125 = scmp.ne.s32.totalorder %s114, %s117
    %p126 = scmp.eq.s32.totalorder %s15, 1
    %p127 = por %p125, %p126
    %p128 = scmp.ne.s32.totalorder %s117, %s118
    %p129 = scmp.eq.s32.totalorder %s15, 0
    %p130 = por %p128, %p129
    %p131 = scmp.ne.s32.totalorder %s117, %s118
    %p132 = scmp.eq.s32.totalorder %s16, 1
    %p133 = por %p131, %p132
    %p135 = scmp.ne.s32.totalorder %s118, %s134
    %p136 = scmp.eq.s32.totalorder %s16, 0
    %p137 = por %p135, %p136
    %p138 = scmp.le.s32.totalorder 1, %s10
    %p139 = scmp.lt.s32.totalorder %s10, 3
    %p140 = pnand %p138, %p139
    %p141 = pneg %p140
    // Predicated region
    $region9: #{res_mpnn_forward.4} parent=5 // pred_check
      _
    $region10: #{res_mpnn_forward.4} parent=5 // pred_check_branch
      %143 = sbr.rel (%p140) target = $region12
    $region11: #{res_mpnn_forward.4} parent=5 // pred_region
      %s144 = ssub.s32 %s10, 1
      // Predicated region
      $region13: #{res_mpnn_forward.4} parent=11 // pred_check
        %p145 = pneg %p83
      $region14: #{res_mpnn_forward.4} parent=11 // pred_check_branch
        %147 = sbr.rel (%p145) target = $region16
      $region15: #{res_mpnn_forward.4} parent=11 // pred_region
        _
      $region16: #{res_mpnn_forward.4} parent=11 // pred_fallthru
        _
      // Predicated region
      $region17: #{res_mpnn_forward.4} parent=11 // pred_check
        %p148 = pneg %p104
      $region18: #{res_mpnn_forward.4} parent=11 // pred_check_branch
        %150 = sbr.rel (%p148) target = $region20
      $region19: #{res_mpnn_forward.4} parent=11 // pred_region
        _
      $region20: #{res_mpnn_forward.4} parent=11 // pred_fallthru
        _
    $region12: #{res_mpnn_forward.4} parent=5 // pred_fallthru
      _
    %p151 = scmp.lt.s32.totalorder %s10, 2
    // Predicated region
    $region21: #{res_mpnn_forward.4} parent=5 // pred_check
      %p152 = pneg %p151
    $region22: #{res_mpnn_forward.4} parent=5 // pred_check_branch
      %154 = sbr.rel (%p152) target = $region24
    $region23: #{res_mpnn_forward.4} parent=5 // pred_region
      // Predicated region
      $region25: #{res_mpnn_forward.4} parent=23 // pred_check
        %p155 = pneg %p30
      $region26: #{res_mpnn_forward.4} parent=23 // pred_check_branch
        %157 = sbr.rel (%p155) target = $region28
      $region27: #{res_mpnn_forward.4} parent=23 // pred_region
        %p158 = scmp.lt.s32.totalorder %s10, 1
        %s159 = scalar_select %p158, %s10, 1
        %s160 = smul.addr %s159, 8
        %s161 = scalar_lea.vmem %s0, %s160
      $region28: #{res_mpnn_forward.4} parent=23 // pred_fallthru
        _
      // Predicated region
      $region29: #{res_mpnn_forward.4} parent=23 // pred_check
        %p162 = pneg %p56
      $region30: #{res_mpnn_forward.4} parent=23 // pred_check_branch
        %164 = sbr.rel (%p162) target = $region32
      $region31: #{res_mpnn_forward.4} parent=23 // pred_region
        %p165 = scmp.lt.s32.totalorder %s10, 1
        %s166 = scalar_select %p165, %s10, 1
        %s167 = smul.addr %s166, 8
        %s168 = scalar_lea.vmem %s1, %s167
      $region32: #{res_mpnn_forward.4} parent=23 // pred_fallthru
        _
    $region24: #{res_mpnn_forward.4} parent=5 // pred_fallthru
      _
    %p169 = scmp.le.s32.totalorder 1, %s10
    %p170 = scmp.lt.s32.totalorder %s10, 3
    %p171 = pnand %p169, %p170
    %p172 = pneg %p171
    // Predicated region
    $region33: #{res_mpnn_forward.4} parent=5 // pred_check
      _
    $region34: #{res_mpnn_forward.4} parent=5 // pred_check_branch
      %174 = sbr.rel (%p171) target = $region36
    $region35: #{res_mpnn_forward.4} parent=5 // pred_region
      %s175 = ssub.s32 %s10, 1
      %p176 = scmp.lt.s32.totalorder %s15, 1
      %s177 = scalar_select %p176, %s15, 1
      %s178 = smul.addr %s177, 8
      %s179 = scalar_lea.vmem %s0, %s178
      %p180 = pneg %p36
      %p181 = pneg %p33
      %p182 = scmp.lt.s32.totalorder %s15, 1
      %s183 = scalar_select %p182, %s15, 1
      %s184 = smul.addr %s183, 8
      %s185 = scalar_lea.vmem %s1, %s184
      %p186 = pneg %p62
      %p187 = pneg %p59
      %p188 = pneg %p83
      %p189 = pneg %p80
      %p190 = pneg %p104
      %p191 = pneg %p101
      %p192 = pneg %p130
      %p193 = pneg %p127
      %p194 = scmp.lt.s32.totalorder %s15, 1
      %s195 = scalar_select %p194, %s15, 1
      %s196 = smul.addr %s195, 8
      %s197 = scalar_lea.vmem %s4, %s196
      %p198 = scmp.lt.s32.totalorder %s15, 1
      %s199 = scalar_select %p198, %s15, 1
      %s200 = smul.addr %s199, 8
      %s201 = scalar_lea.vmem %s0, %s200
      %p202 = scmp.lt.s32.totalorder %s15, 1
      %s203 = scalar_select %p202, %s15, 1
      %s204 = smul.addr %s203, 8
      %s205 = scalar_lea.vmem %s1, %s204
      %p206 = scmp.lt.s32.totalorder %s15, 1
      %s207 = scalar_select %p206, %s15, 1
      %s208 = smul.addr %s207, 8
      %s209 = scalar_lea.vmem %s4, %s208
      %v210 = vld [vmem:[%s201] sm:$0xff]
      %v211 = vld [vmem:[%s205] sm:$0xff]
      %vm212 = vcmask 7168
      %v213 = vsel %vm212, %v211, 0.0
      %v214 = vrot.slane %v213, 4
      %v215 = vadd.f32 %v213, %v214
      %v216 = vrot.slane %v215, 2
      %v217 = vadd.f32 %v215, %v216
      %v218 = vrot.slane %v217, 1
      %v219 = vadd.f32 %v217, %v218
      %v220 = vmax.f32 %v219, 1.0
      %222 = vset.pattern.permute.xlu0 0
      %223 = vperm.xlu0 %222, %v211
      %v224 = vpop.permute.xlu0 %223
      %v226 = vmul.f32 %v210, %v224
      %vm227 = vcmask 261120
      %v228 = vsel %vm227, %v226, 0.0
      %v229 = vrot.slane %v228, 4
      %v230 = vadd.f32 %v228, %v229
      %v231 = vrot.slane %v230, 2
      %v232 = vadd.f32 %v230, %v231
      %v233 = vrot.slane %v232, 1
      %v234 = vadd.f32 %v232, %v233
      %236 = vset.pattern.permute.xlu0 0
      %237 = vperm.xlu0 %236, %v220
      %v238 = vpop.permute.xlu0 %237
      %v240 = vrcp.pop %v238
      %v241 = vmul.f32 %v234, %v240
      %v242 = vsub.f32 %v210, %v241
      %v243 = vmul.f32 %v242, %v224
      %v244 = vmul.f32 %v243, %v243
      %v245 = vsel %vm227, %v244, 0.0
      %v246 = vrot.slane %v245, 4
      %v247 = vadd.f32 %v245, %v246
      %v248 = vrot.slane %v247, 2
      %v249 = vadd.f32 %v247, %v248
      %v250 = vrot.slane %v249, 1
      %v251 = vadd.f32 %v249, %v250
      %v252 = vmul.f32 %v251, %v240
      %v253 = vadd.f32 %v252, 1e-05
      %v254 = vrsqrt.pop %v253
      %v255 = vmul.f32 %v242, %v254
      %v256 = vld [vmem:[%s2] sm:$0x1]
      %v258 = vlaneseq
      %v259 = vshrl.u32 %v258, 7
      %v260 = vsub.s32 0, %v259
      %v261 = vrot.slane %v256, %v260
      %v263 = vmul.f32 %v255, %v261
      %v264 = vld [vmem:[%s3] sm:$0x1]
      %v266 = vlaneseq
      %v267 = vshrl.u32 %v266, 7
      %v268 = vsub.s32 0, %v267
      %v269 = vrot.slane %v264, %v268
      %v271 = vadd.f32 %v263, %v269
      %v272 = vmul.f32 %v271, %v224
      %273 = vst.msk [vmem:[%s209] sm:$0xff] %vm227, %v272
      %p274 = scmp.lt.s32.totalorder %s15, 1
      %s275 = scalar_select %p274, %s15, 1
      %s276 = smul.addr %s275, 8
      %s277 = scalar_lea.vmem %s4, %s276
      // Predicated region
      $region37: #{res_mpnn_forward.4} parent=35 // pred_check
        %p278 = pneg %p127
      $region38: #{res_mpnn_forward.4} parent=35 // pred_check_branch
        %280 = sbr.rel (%p278) target = $region40
      $region39: #{res_mpnn_forward.4} parent=35 // pred_region
        _
      $region40: #{res_mpnn_forward.4} parent=35 // pred_fallthru
        _
    $region36: #{res_mpnn_forward.4} parent=5 // pred_fallthru
      _
    %p281 = scmp.le.s32.totalorder 2, %s10
    // Predicated region
    $region41: #{res_mpnn_forward.4} parent=5 // pred_check
      %p282 = pneg %p281
    $region42: #{res_mpnn_forward.4} parent=5 // pred_check_branch
      %284 = sbr.rel (%p282) target = $region44
    $region43: #{res_mpnn_forward.4} parent=5 // pred_region
      %s285 = ssub.s32 %s10, 2
      // Predicated region
      $region45: #{res_mpnn_forward.4} parent=43 // pred_check
        %p286 = pneg %p133
      $region46: #{res_mpnn_forward.4} parent=43 // pred_check_branch
        %288 = sbr.rel (%p286) target = $region48
      $region47: #{res_mpnn_forward.4} parent=43 // pred_region
        %p289 = scmp.lt.s32.totalorder %s16, 1
        %s290 = scalar_select %p289, %s16, 1
        %s291 = smul.addr %s290, 8
        %s292 = scalar_lea.vmem %s4, %s291
      $region48: #{res_mpnn_forward.4} parent=43 // pred_fallthru
        _
    $region44: #{res_mpnn_forward.4} parent=5 // pred_fallthru
      _
  $region6: #{res_mpnn_forward.4} parent=0 // loop_footer
    %s14 = sadd.s32 1, %s10
  $region7: #{res_mpnn_forward.4} parent=0 // loop_footer_branch
    %9 = sbr.rel target = $region3
  $region8: #{res_mpnn_forward.4} parent=0 // loop_exit
    _

// kernel: res_mpnn_forward.5
$region0: #{res_mpnn_forward.5}
  #allocation0 [shape = 'u32[]', space=smem, size = 0x4, offset = 0x4, fixed_abs, tag = 'smem constant byte address 0x4 - core index']
  #allocation1 [shape = 'u32[144,128]{1,0:T(1,128)}', space=vmem, size = 0x12000, scoped, tag = 'internal scratch']
  #allocation2 [shape = 'f32[8,16]{1,0:T(8,128)}', space=vmem, size = 0x1000, scoped, tag = 'scratch operand']
  %s0 = inlined_call_operand.vmem [shape: f32[16,32], index: 0, kind: input, shape index: {}]
  %s1 = inlined_call_operand.vmem [shape: f32[16,4,1,32], index: 1, kind: input, shape index: {}]
  %s2 = inlined_call_operand.vmem [shape: f32[16,4,1,16], index: 2, kind: input, shape index: {}]
  %s3 = inlined_call_operand.vmem [shape: f32[32,16], index: 3, kind: input, shape index: {}]
  %s4 = inlined_call_operand.vmem [shape: f32[32,16], index: 4, kind: input, shape index: {}]
  %s5 = inlined_call_operand.vmem [shape: f32[16,16], index: 5, kind: input, shape index: {}]
  %s6 = inlined_call_operand.vmem [shape: f32[1,16], index: 6, kind: input, shape index: {}]
  %s7 = inlined_call_operand.vmem [shape: f32[16,16], index: 7, kind: input, shape index: {}]
  %s8 = inlined_call_operand.vmem [shape: f32[1,16], index: 8, kind: input, shape index: {}]
  %s9 = inlined_call_operand.hbm [shape: f32[16,4,1,16], index: 9, kind: output, shape index: {}]
  %s10 = sld [smem:[#allocation0]]
  $region155: #{res_mpnn_forward.5} parent=0
    _
  %s12 = ssub.s32 1, %s10
  %s13 = scalar_select 0, %s12, %s10
  $region1: #{res_mpnn_forward.5} parent=0
    #allocation3 [shape = 'u8[8192]{0}', space=vmem, size = 0x2000, scoped, tag = 'input window, operand 1']
    #allocation4 [shape = 'u8[8192]{0}', space=vmem, size = 0x2000, scoped, tag = 'input window, operand 2']
    #allocation5 [shape = 'u8[8192]{0}', space=vmem, size = 0x2000, scoped, tag = 'output window, operand 0']
    #allocation6 [shape = 's32[2]{0}', space=sflag, size = 0x8, scoped, tag = 'scoped memory for res_mpnn_forward.5']
    %14 = vsyncpa [#allocation6], 0
    %s15 = scalar_lea.sflag [#allocation6], 1
    %16 = vsyncpa %s15, 0
    loop: start=0, step=1, limit=10
    $region2: #{res_mpnn_forward.5} parent=1 // loop_pre_header
      _
    $region3: #{res_mpnn_forward.5} parent=1 // loop_header
      %s18 = sphi 0, %s22
      %p19 = scmp.ge.s32.totalorder %s18, 10
      %s25 = sphi 0, %s37
      %s26 = sphi 0, %s33
      %s27 = sphi 0, %s25
      %s28 = sphi 0, %s26
      %s29 = sphi 0, %s27
      %s30 = sphi 0, %s28
      %s40 = sphi 0, %s42
      %s43 = sphi 0, %s40
      %s44 = sphi 0, %s43
      %s60 = sphi 0, %s44
      %s68 = sphi 0, %s70
      %s71 = sphi 0, %s68
      %s72 = sphi 0, %s71
      %s88 = sphi 0, %s72
      %s96 = sphi 0, %s98
      %s99 = sphi 0, %s96
      %s100 = sphi 0, %s99
      %s116 = sphi 0, %s100
      %s120 = sphi 0, %s120
      %s122 = sphi 0, %s120
      %s123 = sphi 0, %s122
      %s137 = sphi 0, %s123
      %s141 = sphi 0, %s141
      %s143 = sphi 0, %s141
      %s144 = sphi 0, %s143
      %s158 = sphi 0, %s144
      %s162 = sphi 0, %s162
      %s164 = sphi 0, %s162
      %s165 = sphi 0, %s164
      %s179 = sphi 0, %s165
      %s183 = sphi 0, %s183
      %s185 = sphi 0, %s183
      %s186 = sphi 0, %s185
      %s200 = sphi 0, %s186
      %s204 = sphi 0, %s204
      %s206 = sphi 0, %s204
      %s207 = sphi 0, %s206
      %s221 = sphi 0, %s207
      %s225 = sphi 0, %s225
      %s227 = sphi 0, %s225
      %s228 = sphi 0, %s227
      %s242 = sphi 0, %s228
      %s250 = sphi 0, %s252
      %s253 = sphi 0, %s250
      %s254 = sphi 0, %s253
      %s270 = sphi 0, %s254
    $region4: #{res_mpnn_forward.5} parent=1 // loop_header_branch
      %21 = sbr.rel (%p19) target = $region8
    $region5: #{res_mpnn_forward.5} parent=1 // loop_body
      %s23 = ssub.s32 %s18, 1
      %s24 = ssub.s32 %s18, 2
      %s31 = sadd.s32 1, %s26
      %p32 = scmp.ge.s32.totalorder %s31, 4
      %s33 = scalar_select %p32, 0, %s31
      %s34 = sadd.s32 1, %s25
      %s35 = scalar_select %p32, %s34, %s25
      %p36 = scmp.ge.s32.totalorder %s35, 2
      %s37 = scalar_select %p36, 0, %s35
      %s38 = ssub.s32 %s25, %s37
      %p39 = scmp.eq.s32.totalorder %s38, 0
      %s41 = sadd.s32 %s40, 1
      %s42 = scalar_select %p39, %s40, %s41
      %p45 = pneg %p39
      %p46 = scmp.eq.s32.totalorder %s18, 7
      %p47 = por %p45, %p46
      %p48 = scmp.ne.s32.totalorder %s40, %s43
      %p49 = scmp.eq.s32.totalorder %s18, 0
      %p50 = por %p48, %p49
      %p51 = scmp.ne.s32.totalorder %s40, %s43
      %p52 = scmp.eq.s32.totalorder %s23, 7
      %p53 = por %p51, %p52
      %p54 = scmp.ne.s32.totalorder %s43, %s44
      %p55 = scmp.eq.s32.totalorder %s23, 0
      %p56 = por %p54, %p55
      %p57 = scmp.ne.s32.totalorder %s43, %s44
      %p58 = scmp.eq.s32.totalorder %s24, 7
      %p59 = por %p57, %p58
      %p61 = scmp.ne.s32.totalorder %s44, %s60
      %p62 = scmp.eq.s32.totalorder %s24, 0
      %p63 = por %p61, %p62
      %s64 = ssub.s32 %s25, %s37
      %s65 = ssub.s32 %s26, %s33
      %s66 = sor.u32 %s64, %s65
      %p67 = scmp.eq.s32.totalorder %s66, 0
      %s69 = sadd.s32 %s68, 1
      %s70 = scalar_select %p67, %s68, %s69
      %p73 = pneg %p67
      %p74 = scmp.eq.s32.totalorder %s18, 7
      %p75 = por %p73, %p74
      %p76 = scmp.ne.s32.totalorder %s68, %s71
      %p77 = scmp.eq.s32.totalorder %s18, 0
      %p78 = por %p76, %p77
      %p79 = scmp.ne.s32.totalorder %s68, %s71
      %p80 = scmp.eq.s32.totalorder %s23, 7
      %p81 = por %p79, %p80
      %p82 = scmp.ne.s32.totalorder %s71, %s72
      %p83 = scmp.eq.s32.totalorder %s23, 0
      %p84 = por %p82, %p83
      %p85 = scmp.ne.s32.totalorder %s71, %s72
      %p86 = scmp.eq.s32.totalorder %s24, 7
      %p87 = por %p85, %p86
      %p89 = scmp.ne.s32.totalorder %s72, %s88
      %p90 = scmp.eq.s32.totalorder %s24, 0
      %p91 = por %p89, %p90
      %s92 = ssub.s32 %s25, %s37
      %s93 = ssub.s32 %s26, %s33
      %s94 = sor.u32 %s92, %s93
      %p95 = scmp.eq.s32.totalorder %s94, 0
      %s97 = sadd.s32 %s96, 1
      %s98 = scalar_select %p95, %s96, %s97
      %p101 = pneg %p95
      %p102 = scmp.eq.s32.totalorder %s18, 7
      %p103 = por %p101, %p102
      %p104 = scmp.ne.s32.totalorder %s96, %s99
      %p105 = scmp.eq.s32.totalorder %s18, 0
      %p106 = por %p104, %p105
      %p107 = scmp.ne.s32.totalorder %s96, %s99
      %p108 = scmp.eq.s32.totalorder %s23, 7
      %p109 = por %p107, %p108
      %p110 = scmp.ne.s32.totalorder %s99, %s100
      %p111 = scmp.eq.s32.totalorder %s23, 0
      %p112 = por %p110, %p111
      %p113 = scmp.ne.s32.totalorder %s99, %s100
      %p114 = scmp.eq.s32.totalorder %s24, 7
      %p115 = por %p113, %p114
      %p117 = scmp.ne.s32.totalorder %s100, %s116
      %p118 = scmp.eq.s32.totalorder %s24, 0
      %p119 = por %p117, %p118
      %s121 = sadd.s32 %s120, 1
      %p124 = scmp.eq.s32.totalorder %s18, 7
      %p125 = scmp.ne.s32.totalorder %s120, %s122
      %p126 = scmp.eq.s32.totalorder %s18, 0
      %p127 = por %p125, %p126
      %p128 = scmp.ne.s32.totalorder %s120, %s122
      %p129 = scmp.eq.s32.totalorder %s23, 7
      %p130 = por %p128, %p129
      %p131 = scmp.ne.s32.totalorder %s122, %s123
      %p132 = scmp.eq.s32.totalorder %s23, 0
      %p133 = por %p131, %p132
      %p134 = scmp.ne.s32.totalorder %s122, %s123
      %p135 = scmp.eq.s32.totalorder %s24, 7
      %p136 = por %p134, %p135
      %p138 = scmp.ne.s32.totalorder %s123, %s137
      %p139 = scmp.eq.s32.totalorder %s24, 0
      %p140 = por %p138, %p139
      %s142 = sadd.s32 %s141, 1
      %p145 = scmp.eq.s32.totalorder %s18, 7
      %p146 = scmp.ne.s32.totalorder %s141, %s143
      %p147 = scmp.eq.s32.totalorder %s18, 0
      %p148 = por %p146, %p147
      %p149 = scmp.ne.s32.totalorder %s141, %s143
      %p150 = scmp.eq.s32.totalorder %s23, 7
      %p151 = por %p149, %p150
      %p152 = scmp.ne.s32.totalorder %s143, %s144
      %p153 = scmp.eq.s32.totalorder %s23, 0
      %p154 = por %p152, %p153
      %p155 = scmp.ne.s32.totalorder %s143, %s144
      %p156 = scmp.eq.s32.totalorder %s24, 7
      %p157 = por %p155, %p156
      %p159 = scmp.ne.s32.totalorder %s144, %s158
      %p160 = scmp.eq.s32.totalorder %s24, 0
      %p161 = por %p159, %p160
      %s163 = sadd.s32 %s162, 1
      %p166 = scmp.eq.s32.totalorder %s18, 7
      %p167 = scmp.ne.s32.totalorder %s162, %s164
      %p168 = scmp.eq.s32.totalorder %s18, 0
      %p169 = por %p167, %p168
      %p170 = scmp.ne.s32.totalorder %s162, %s164
      %p171 = scmp.eq.s32.totalorder %s23, 7
      %p172 = por %p170, %p171
      %p173 = scmp.ne.s32.totalorder %s164, %s165
      %p174 = scmp.eq.s32.totalorder %s23, 0
      %p175 = por %p173, %p174
      %p176 = scmp.ne.s32.totalorder %s164, %s165
      %p177 = scmp.eq.s32.totalorder %s24, 7
      %p178 = por %p176, %p177
      %p180 = scmp.ne.s32.totalorder %s165, %s179
      %p181 = scmp.eq.s32.totalorder %s24, 0
      %p182 = por %p180, %p181
      %s184 = sadd.s32 %s183, 1
      %p187 = scmp.eq.s32.totalorder %s18, 7
      %p188 = scmp.ne.s32.totalorder %s183, %s185
      %p189 = scmp.eq.s32.totalorder %s18, 0
      %p190 = por %p188, %p189
      %p191 = scmp.ne.s32.totalorder %s183, %s185
      %p192 = scmp.eq.s32.totalorder %s23, 7
      %p193 = por %p191, %p192
      %p194 = scmp.ne.s32.totalorder %s185, %s186
      %p195 = scmp.eq.s32.totalorder %s23, 0
      %p196 = por %p194, %p195
      %p197 = scmp.ne.s32.totalorder %s185, %s186
      %p198 = scmp.eq.s32.totalorder %s24, 7
      %p199 = por %p197, %p198
      %p201 = scmp.ne.s32.totalorder %s186, %s200
      %p202 = scmp.eq.s32.totalorder %s24, 0
      %p203 = por %p201, %p202
      %s205 = sadd.s32 %s204, 1
      %p208 = scmp.eq.s32.totalorder %s18, 7
      %p209 = scmp.ne.s32.totalorder %s204, %s206
      %p210 = scmp.eq.s32.totalorder %s18, 0
      %p211 = por %p209, %p210
      %p212 = scmp.ne.s32.totalorder %s204, %s206
      %p213 = scmp.eq.s32.totalorder %s23, 7
      %p214 = por %p212, %p213
      %p215 = scmp.ne.s32.totalorder %s206, %s207
      %p216 = scmp.eq.s32.totalorder %s23, 0
      %p217 = por %p215, %p216
      %p218 = scmp.ne.s32.totalorder %s206, %s207
      %p219 = scmp.eq.s32.totalorder %s24, 7
      %p220 = por %p218, %p219
      %p222 = scmp.ne.s32.totalorder %s207, %s221
      %p223 = scmp.eq.s32.totalorder %s24, 0
      %p224 = por %p222, %p223
      %s226 = sadd.s32 %s225, 1
      %p229 = scmp.eq.s32.totalorder %s18, 7
      %p230 = scmp.ne.s32.totalorder %s225, %s227
      %p231 = scmp.eq.s32.totalorder %s18, 0
      %p232 = por %p230, %p231
      %p233 = scmp.ne.s32.totalorder %s225, %s227
      %p234 = scmp.eq.s32.totalorder %s23, 7
      %p235 = por %p233, %p234
      %p236 = scmp.ne.s32.totalorder %s227, %s228
      %p237 = scmp.eq.s32.totalorder %s23, 0
      %p238 = por %p236, %p237
      %p239 = scmp.ne.s32.totalorder %s227, %s228
      %p240 = scmp.eq.s32.totalorder %s24, 7
      %p241 = por %p239, %p240
      %p243 = scmp.ne.s32.totalorder %s228, %s242
      %p244 = scmp.eq.s32.totalorder %s24, 0
      %p245 = por %p243, %p244
      %s246 = ssub.s32 %s25, %s37
      %s247 = ssub.s32 %s26, %s33
      %s248 = sor.u32 %s246, %s247
      %p249 = scmp.eq.s32.totalorder %s248, 0
      %s251 = sadd.s32 %s250, 1
      %s252 = scalar_select %p249, %s250, %s251
      %p255 = pneg %p249
      %p256 = scmp.eq.s32.totalorder %s18, 7
      %p257 = por %p255, %p256
      %p258 = scmp.ne.s32.totalorder %s250, %s253
      %p259 = scmp.eq.s32.totalorder %s18, 0
      %p260 = por %p258, %p259
      %p261 = scmp.ne.s32.totalorder %s250, %s253
      %p262 = scmp.eq.s32.totalorder %s23, 7
      %p263 = por %p261, %p262
      %p264 = scmp.ne.s32.totalorder %s253, %s254
      %p265 = scmp.eq.s32.totalorder %s23, 0
      %p266 = por %p264, %p265
      %p267 = scmp.ne.s32.totalorder %s253, %s254
      %p268 = scmp.eq.s32.totalorder %s24, 7
      %p269 = por %p267, %p268
      %p271 = scmp.ne.s32.totalorder %s254, %s270
      %p272 = scmp.eq.s32.totalorder %s24, 0
      %p273 = por %p271, %p272
      %p274 = scmp.le.s32.totalorder 1, %s18
      %p275 = scmp.lt.s32.totalorder %s18, 9
      %p276 = pnand %p274, %p275
      %p277 = pneg %p276
      // Predicated region
      $region9: #{res_mpnn_forward.5} parent=5 // pred_check
        _
      $region10: #{res_mpnn_forward.5} parent=5 // pred_check_branch
        %279 = sbr.rel (%p276) target = $region12
      $region11: #{res_mpnn_forward.5} parent=5 // pred_region
        %s280 = ssub.s32 %s18, 1
        // Predicated region
        $region13: #{res_mpnn_forward.5} parent=11 // pred_check
          %p281 = pneg %p133
        $region14: #{res_mpnn_forward.5} parent=11 // pred_check_branch
          %283 = sbr.rel (%p281) target = $region16
        $region15: #{res_mpnn_forward.5} parent=11 // pred_region
          _
        $region16: #{res_mpnn_forward.5} parent=11 // pred_fallthru
          _
        // Predicated region
        $region17: #{res_mpnn_forward.5} parent=11 // pred_check
          %p284 = pneg %p154
        $region18: #{res_mpnn_forward.5} parent=11 // pred_check_branch
          %286 = sbr.rel (%p284) target = $region20
        $region19: #{res_mpnn_forward.5} parent=11 // pred_region
          _
        $region20: #{res_mpnn_forward.5} parent=11 // pred_fallthru
          _
        // Predicated region
        $region21: #{res_mpnn_forward.5} parent=11 // pred_check
          %p287 = pneg %p175
        $region22: #{res_mpnn_forward.5} parent=11 // pred_check_branch
          %289 = sbr.rel (%p287) target = $region24
        $region23: #{res_mpnn_forward.5} parent=11 // pred_region
          _
        $region24: #{res_mpnn_forward.5} parent=11 // pred_fallthru
          _
        // Predicated region
        $region25: #{res_mpnn_forward.5} parent=11 // pred_check
          %p290 = pneg %p196
        $region26: #{res_mpnn_forward.5} parent=11 // pred_check_branch
          %292 = sbr.rel (%p290) target = $region28
        $region27: #{res_mpnn_forward.5} parent=11 // pred_region
          _
        $region28: #{res_mpnn_forward.5} parent=11 // pred_fallthru
          _
        // Predicated region
        $region29: #{res_mpnn_forward.5} parent=11 // pred_check
          %p293 = pneg %p217
        $region30: #{res_mpnn_forward.5} parent=11 // pred_check_branch
          %295 = sbr.rel (%p293) target = $region32
        $region31: #{res_mpnn_forward.5} parent=11 // pred_region
          _
        $region32: #{res_mpnn_forward.5} parent=11 // pred_fallthru
          _
        // Predicated region
        $region33: #{res_mpnn_forward.5} parent=11 // pred_check
          %p296 = pneg %p238
        $region34: #{res_mpnn_forward.5} parent=11 // pred_check_branch
          %298 = sbr.rel (%p296) target = $region36
        $region35: #{res_mpnn_forward.5} parent=11 // pred_region
          _
        $region36: #{res_mpnn_forward.5} parent=11 // pred_fallthru
          _
      $region12: #{res_mpnn_forward.5} parent=5 // pred_fallthru
        _
      %p299 = scmp.lt.s32.totalorder %s18, 8
      // Predicated region
      $region37: #{res_mpnn_forward.5} parent=5 // pred_check
        %p300 = pneg %p299
      $region38: #{res_mpnn_forward.5} parent=5 // pred_check_branch
        %302 = sbr.rel (%p300) target = $region40
      $region39: #{res_mpnn_forward.5} parent=5 // pred_region
        // Predicated region
        $region41: #{res_mpnn_forward.5} parent=39 // pred_check
          %p303 = pneg %p50
        $region42: #{res_mpnn_forward.5} parent=39 // pred_check_branch
          %305 = sbr.rel (%p303) target = $region44
        $region43: #{res_mpnn_forward.5} parent=39 // pred_region
          %p306 = scmp.lt.s32.totalorder %s25, 1
          %s307 = scalar_select %p306, %s25, 1
          %s308 = smul.addr %s307, 8
          %s309 = scalar_lea.vmem %s0, %s308
        $region44: #{res_mpnn_forward.5} parent=39 // pred_fallthru
          _
        // Predicated region
        $region45: #{res_mpnn_forward.5} parent=39 // pred_check
          %p310 = pneg %p78
        $region46: #{res_mpnn_forward.5} parent=39 // pred_check_branch
          %312 = sbr.rel (%p310) target = $region48
        $region47: #{res_mpnn_forward.5} parent=39 // pred_region
          %s313 = sand.u32 %s68, 1
          %s314 = sand.u32 %s68, 1
          %s315 = smul.addr %s314, 8
          %s316 = scalar_lea.vmem [#allocation3], %s315
          %s317 = smul.u32 8, %s25
          %s318 = smul.addr %s317, 4
          %s319 = sadd.s32 %s26, %s318
          %s320 = scalar_lea.vmem %s1, %s319
          // Predicated region
          $region49: #{res_mpnn_forward.5} parent=47 // pred_check
            _
          $region50: #{res_mpnn_forward.5} parent=47 // pred_check_branch
            %322 = sbr.rel (0) target = $region52
          $region51: #{res_mpnn_forward.5} parent=47 // pred_region
            // Predicated region
            $region53: #{res_mpnn_forward.5} parent=51 // pred_check
              _
            $region54: #{res_mpnn_forward.5} parent=51 // pred_check_branch
              %324 = sbr.rel target = $region56
            $region55: #{res_mpnn_forward.5} parent=51 // pred_region
              // Predicated region
              $region68: #{res_mpnn_forward.5} parent=55 // pred_check
                _
              $region69: #{res_mpnn_forward.5} parent=55 // pred_check_branch
                %353 = sbr.rel (0) target = $region71
              $region70: #{res_mpnn_forward.5} parent=55 // pred_region
                loop: start=0, step=1, limit=1
                $region72: #{res_mpnn_forward.5} parent=70 // loop_pre_header
                  _
                $region73: #{res_mpnn_forward.5} parent=70 // loop_header
                  %s355 = sphi 0, %s359
                  %p356 = scmp.ge.s32.totalorder %s355, 1
                  %s360 = sphi %s320, %s320
                  %s361 = sphi %s316, %s316
                $region74: #{res_mpnn_forward.5} parent=70 // loop_header_branch
                  %358 = sbr.rel (%p356) target = $region78
                $region75: #{res_mpnn_forward.5} parent=70 // loop_body
                  _
                $region76: #{res_mpnn_forward.5} parent=70 // loop_footer
                  %s359 = sadd.s32 1, %s355
                $region77: #{res_mpnn_forward.5} parent=70 // loop_footer_branch
                  %354 = sbr.rel target = $region73
                $region78: #{res_mpnn_forward.5} parent=70 // loop_exit
                  _
                loop: start=0, step=1, limit=1
                $region79: #{res_mpnn_forward.5} parent=70 // loop_pre_header
                  _
                $region80: #{res_mpnn_forward.5} parent=70 // loop_header
                  %s364 = sphi 0, %s368
                  %p365 = scmp.ge.s32.totalorder %s364, 1
                  %s369 = sphi %s320, %s320
                  %s370 = sphi %s316, %s316
                $region81: #{res_mpnn_forward.5} parent=70 // loop_header_branch
                  %367 = sbr.rel (%p365) target = $region85
                $region82: #{res_mpnn_forward.5} parent=70 // loop_body
                  %v371 = vld [vmem:[%s369] sm:$0x1]
                  %372 = vst [vmem:[%s370] sm:$0x1] %v371
                  %v373 = vld [vmem:[%s369 + $0x4] sm:$0x1]
                  %374 = vst [vmem:[%s370 + $0x1] sm:$0x1] %v373
                  %v375 = vld [vmem:[%s369 + $0x8] sm:$0x1]
                  %376 = vst [vmem:[%s370 + $0x2] sm:$0x1] %v375
                  %v377 = vld [vmem:[%s369 + $0xc] sm:$0x1]
                  %378 = vst [vmem:[%s370 + $0x3] sm:$0x1] %v377
                  %v379 = vld [vmem:[%s369 + $0x10] sm:$0x1]
                  %380 = vst [vmem:[%s370 + $0x4] sm:$0x1] %v379
                  %v381 = vld [vmem:[%s369 + $0x14] sm:$0x1]
                  %382 = vst [vmem:[%s370 + $0x5] sm:$0x1] %v381
                  %v383 = vld [vmem:[%s369 + $0x18] sm:$0x1]
                  %384 = vst [vmem:[%s370 + $0x6] sm:$0x1] %v383
                  %v385 = vld [vmem:[%s369 + $0x1c] sm:$0x1]
                  %386 = vst [vmem:[%s370 + $0x7] sm:$0x1] %v385
                $region83: #{res_mpnn_forward.5} parent=70 // loop_footer
                  %s368 = sadd.s32 1, %s364
                $region84: #{res_mpnn_forward.5} parent=70 // loop_footer_branch
                  %363 = sbr.rel target = $region80
                $region85: #{res_mpnn_forward.5} parent=70 // loop_exit
                  _
              $region71: #{res_mpnn_forward.5} parent=55 // pred_fallthru
                _
            $region56: #{res_mpnn_forward.5} parent=51 // pred_fallthru
              _
            // Predicated region
            $region57: #{res_mpnn_forward.5} parent=51 // pred_check
              _
            $region58: #{res_mpnn_forward.5} parent=51 // pred_check_branch
              %326 = sbr.rel (0) target = $region60
            $region59: #{res_mpnn_forward.5} parent=51 // pred_region
              loop: start=0, step=1, limit=1
              $region61: #{res_mpnn_forward.5} parent=59 // loop_pre_header
                _
              $region62: #{res_mpnn_forward.5} parent=59 // loop_header
                %s329 = sphi 0, %s333
                %p330 = scmp.ge.s32.totalorder %s329, 1
                %s334 = sphi %s320, %s320
                %s335 = sphi %s316, %s316
              $region63: #{res_mpnn_forward.5} parent=59 // loop_header_branch
                %332 = sbr.rel (%p330) target = $region67
              $region64: #{res_mpnn_forward.5} parent=59 // loop_body
                %v336 = vld [vmem:[%s334] sm:$0x1]
                %337 = vst [vmem:[%s335] sm:$0x1] %v336
                %v338 = vld [vmem:[%s334 + $0x4] sm:$0x1]
                %339 = vst [vmem:[%s335 + $0x1] sm:$0x1] %v338
                %v340 = vld [vmem:[%s334 + $0x8] sm:$0x1]
                %341 = vst [vmem:[%s335 + $0x2] sm:$0x1] %v340
                %v342 = vld [vmem:[%s334 + $0xc] sm:$0x1]
                %343 = vst [vmem:[%s335 + $0x3] sm:$0x1] %v342
                %v344 = vld [vmem:[%s334 + $0x10] sm:$0x1]
                %345 = vst [vmem:[%s335 + $0x4] sm:$0x1] %v344
                %v346 = vld [vmem:[%s334 + $0x14] sm:$0x1]
                %347 = vst [vmem:[%s335 + $0x5] sm:$0x1] %v346
                %v348 = vld [vmem:[%s334 + $0x18] sm:$0x1]
                %349 = vst [vmem:[%s335 + $0x6] sm:$0x1] %v348
                %v350 = vld [vmem:[%s334 + $0x1c] sm:$0x1]
                %351 = vst [vmem:[%s335 + $0x7] sm:$0x1] %v350
              $region65: #{res_mpnn_forward.5} parent=59 // loop_footer
                %s333 = sadd.s32 1, %s329
              $region66: #{res_mpnn_forward.5} parent=59 // loop_footer_branch
                %328 = sbr.rel target = $region62
              $region67: #{res_mpnn_forward.5} parent=59 // loop_exit
                _
            $region60: #{res_mpnn_forward.5} parent=51 // pred_fallthru
              _
          $region52: #{res_mpnn_forward.5} parent=47 // pred_fallthru
            _
          %387 = vnop
        $region48: #{res_mpnn_forward.5} parent=39 // pred_fallthru
          _
        // Predicated region
        $region86: #{res_mpnn_forward.5} parent=39 // pred_check
          %p388 = pneg %p106
        $region87: #{res_mpnn_forward.5} parent=39 // pred_check_branch
          %390 = sbr.rel (%p388) target = $region89
        $region88: #{res_mpnn_forward.5} parent=39 // pred_region
          %s391 = sand.u32 %s96, 1
          %s392 = sand.u32 %s96, 1
          %s393 = smul.addr %s392, 8
          %s394 = scalar_lea.vmem [#allocation4], %s393
          %s395 = smul.u32 8, %s25
          %s396 = smul.addr %s395, 4
          %s397 = sadd.s32 %s26, %s396
          %s398 = scalar_lea.vmem %s2, %s397
          // Predicated region
          $region90: #{res_mpnn_forward.5} parent=88 // pred_check
            _
          $region91: #{res_mpnn_forward.5} parent=88 // pred_check_branch
            %400 = sbr.rel (0) target = $region93
          $region92: #{res_mpnn_forward.5} parent=88 // pred_region
            // Predicated region
            $region94: #{res_mpnn_forward.5} parent=92 // pred_check
              _
            $region95: #{res_mpnn_forward.5} parent=92 // pred_check_branch
              %402 = sbr.rel target = $region97
            $region96: #{res_mpnn_forward.5} parent=92 // pred_region
              // Predicated region
              $region109: #{res_mpnn_forward.5} parent=96 // pred_check
                _
              $region110: #{res_mpnn_forward.5} parent=96 // pred_check_branch
                %431 = sbr.rel (0) target = $region112
              $region111: #{res_mpnn_forward.5} parent=96 // pred_region
                loop: start=0, step=1, limit=1
                $region113: #{res_mpnn_forward.5} parent=111 // loop_pre_header
                  _
                $region114: #{res_mpnn_forward.5} parent=111 // loop_header
                  %s433 = sphi 0, %s437
                  %p434 = scmp.ge.s32.totalorder %s433, 1
                  %s438 = sphi %s398, %s398
                  %s439 = sphi %s394, %s394
                $region115: #{res_mpnn_forward.5} parent=111 // loop_header_branch
                  %436 = sbr.rel (%p434) target = $region119
                $region116: #{res_mpnn_forward.5} parent=111 // loop_body
                  _
                $region117: #{res_mpnn_forward.5} parent=111 // loop_footer
                  %s437 = sadd.s32 1, %s433
                $region118: #{res_mpnn_forward.5} parent=111 // loop_footer_branch
                  %432 = sbr.rel target = $region114
                $region119: #{res_mpnn_forward.5} parent=111 // loop_exit
                  _
                loop: start=0, step=1, limit=1
                $region120: #{res_mpnn_forward.5} parent=111 // loop_pre_header
                  _
                $region121: #{res_mpnn_forward.5} parent=111 // loop_header
                  %s442 = sphi 0, %s446
                  %p443 = scmp.ge.s32.totalorder %s442, 1
                  %s447 = sphi %s398, %s398
                  %s448 = sphi %s394, %s394
                $region122: #{res_mpnn_forward.5} parent=111 // loop_header_branch
                  %445 = sbr.rel (%p443) target = $region126
                $region123: #{res_mpnn_forward.5} parent=111 // loop_body
                  %v449 = vld [vmem:[%s447] sm:$0x1]
                  %450 = vst [vmem:[%s448] sm:$0x1] %v449
                  %v451 = vld [vmem:[%s447 + $0x4] sm:$0x1]
                  %452 = vst [vmem:[%s448 + $0x1] sm:$0x1] %v451
                  %v453 = vld [vmem:[%s447 + $0x8] sm:$0x1]
                  %454 = vst [vmem:[%s448 + $0x2] sm:$0x1] %v453
                  %v455 = vld [vmem:[%s447 + $0xc] sm:$0x1]
                  %456 = vst [vmem:[%s448 + $0x3] sm:$0x1] %v455
                  %v457 = vld [vmem:[%s447 + $0x10] sm:$0x1]
                  %458 = vst [vmem:[%s448 + $0x4] sm:$0x1] %v457
                  %v459 = vld [vmem:[%s447 + $0x14] sm:$0x1]
                  %460 = vst [vmem:[%s448 + $0x5] sm:$0x1] %v459
                  %v461 = vld [vmem:[%s447 + $0x18] sm:$0x1]
                  %462 = vst [vmem:[%s448 + $0x6] sm:$0x1] %v461
                  %v463 = vld [vmem:[%s447 + $0x1c] sm:$0x1]
                  %464 = vst [vmem:[%s448 + $0x7] sm:$0x1] %v463
                $region124: #{res_mpnn_forward.5} parent=111 // loop_footer
                  %s446 = sadd.s32 1, %s442
                $region125: #{res_mpnn_forward.5} parent=111 // loop_footer_branch
                  %441 = sbr.rel target = $region121
                $region126: #{res_mpnn_forward.5} parent=111 // loop_exit
                  _
              $region112: #{res_mpnn_forward.5} parent=96 // pred_fallthru
                _
            $region97: #{res_mpnn_forward.5} parent=92 // pred_fallthru
              _
            // Predicated region
            $region98: #{res_mpnn_forward.5} parent=92 // pred_check
              _
            $region99: #{res_mpnn_forward.5} parent=92 // pred_check_branch
              %404 = sbr.rel (0) target = $region101
            $region100: #{res_mpnn_forward.5} parent=92 // pred_region
              loop: start=0, step=1, limit=1
              $region102: #{res_mpnn_forward.5} parent=100 // loop_pre_header
                _
              $region103: #{res_mpnn_forward.5} parent=100 // loop_header
                %s407 = sphi 0, %s411
                %p408 = scmp.ge.s32.totalorder %s407, 1
                %s412 = sphi %s398, %s398
                %s413 = sphi %s394, %s394
              $region104: #{res_mpnn_forward.5} parent=100 // loop_header_branch
                %410 = sbr.rel (%p408) target = $region108
              $region105: #{res_mpnn_forward.5} parent=100 // loop_body
                %v414 = vld [vmem:[%s412] sm:$0x1]
                %415 = vst [vmem:[%s413] sm:$0x1] %v414
                %v416 = vld [vmem:[%s412 + $0x4] sm:$0x1]
                %417 = vst [vmem:[%s413 + $0x1] sm:$0x1] %v416
                %v418 = vld [vmem:[%s412 + $0x8] sm:$0x1]
                %419 = vst [vmem:[%s413 + $0x2] sm:$0x1] %v418
                %v420 = vld [vmem:[%s412 + $0xc] sm:$0x1]
                %421 = vst [vmem:[%s413 + $0x3] sm:$0x1] %v420
                %v422 = vld [vmem:[%s412 + $0x10] sm:$0x1]
                %423 = vst [vmem:[%s413 + $0x4] sm:$0x1] %v422
                %v424 = vld [vmem:[%s412 + $0x14] sm:$0x1]
                %425 = vst [vmem:[%s413 + $0x5] sm:$0x1] %v424
                %v426 = vld [vmem:[%s412 + $0x18] sm:$0x1]
                %427 = vst [vmem:[%s413 + $0x6] sm:$0x1] %v426
                %v428 = vld [vmem:[%s412 + $0x1c] sm:$0x1]
                %429 = vst [vmem:[%s413 + $0x7] sm:$0x1] %v428
              $region106: #{res_mpnn_forward.5} parent=100 // loop_footer
                %s411 = sadd.s32 1, %s407
              $region107: #{res_mpnn_forward.5} parent=100 // loop_footer_branch
                %406 = sbr.rel target = $region103
              $region108: #{res_mpnn_forward.5} parent=100 // loop_exit
                _
            $region101: #{res_mpnn_forward.5} parent=92 // pred_fallthru
              _
          $region93: #{res_mpnn_forward.5} parent=88 // pred_fallthru
            _
          %465 = vnop
        $region89: #{res_mpnn_forward.5} parent=39 // pred_fallthru
          _
      $region40: #{res_mpnn_forward.5} parent=5 // pred_fallthru
        _
      %p466 = scmp.le.s32.totalorder 1, %s18
      %p467 = scmp.lt.s32.totalorder %s18, 9
      %p468 = pnand %p466, %p467
      %p469 = pneg %p468
      // Predicated region
      $region127: #{res_mpnn_forward.5} parent=5 // pred_check
        _
      $region128: #{res_mpnn_forward.5} parent=5 // pred_check_branch
        %471 = sbr.rel (%p468) target = $region130
      $region129: #{res_mpnn_forward.5} parent=5 // pred_region
        %s472 = ssub.s32 %s18, 1
        %s473 = sand.u32 %s71, 1
        %s474 = sand.u32 %s71, 1
        %s475 = smul.addr %s474, 8
        %s476 = scalar_lea.vmem [#allocation3], %s475
        // Predicated region
        $region131: #{res_mpnn_forward.5} parent=129 // pred_check
          %p477 = pneg %p84
        $region132: #{res_mpnn_forward.5} parent=129 // pred_check_branch
          %479 = sbr.rel (%p477) target = $region134
        $region133: #{res_mpnn_forward.5} parent=129 // pred_region
          _
        $region134: #{res_mpnn_forward.5} parent=129 // pred_fallthru
          _
        %s480 = sand.u32 %s99, 1
        %s481 = sand.u32 %s99, 1
        %s482 = smul.addr %s481, 8
        %s483 = scalar_lea.vmem [#allocation4], %s482
        // Predicated region
        $region135: #{res_mpnn_forward.5} parent=129 // pred_check
          %p484 = pneg %p112
        $region136: #{res_mpnn_forward.5} parent=129 // pred_check_branch
          %486 = sbr.rel (%p484) target = $region138
        $region137: #{res_mpnn_forward.5} parent=129 // pred_region
          _
        $region138: #{res_mpnn_forward.5} parent=129 // pred_fallthru
          _
        %p487 = scmp.lt.s32.totalorder %s27, 1
        %s488 = scalar_select %p487, %s27, 1
        %s489 = smul.addr %s488, 8
        %s490 = scalar_lea.vmem %s0, %s489
        %p491 = pneg %p56
        %p492 = pneg %p53
        %s493 = sand.u32 %s71, 1
        %s494 = sand.u32 %s71, 1
        %s495 = smul.addr %s494, 8
        %s496 = scalar_lea.vmem [#allocation3], %s495
        %p497 = pneg %p84
        %p498 = pneg %p81
        %s499 = sand.u32 %s99, 1
        %s500 = sand.u32 %s99, 1
        %s501 = smul.addr %s500, 8
        %s502 = scalar_lea.vmem [#allocation4], %s501
        %p503 = pneg %p112
        %p504 = pneg %p109
        %p505 = pneg %p133
        %p506 = pneg %p130
        %p507 = pneg %p154
        %p508 = pneg %p151
        %p509 = pneg %p175
        %p510 = pneg %p172
        %p511 = pneg %p196
        %p512 = pneg %p193
        %p513 = pneg %p217
        %p514 = pneg %p214
        %p515 = pneg %p238
        %p516 = pneg %p235
        %p517 = pneg %p266
        %p518 = pneg %p263
        %s519 = sand.u32 %s253, 1
        %s520 = scalar_lea.sflag [#allocation6], %s519
        %s521 = sand.u32 %s253, 1
        %s522 = smul.addr %s521, 8
        %s523 = scalar_lea.vmem [#allocation5], %s522
        %p524 = scmp.lt.s32.totalorder %s27, 1
        %s525 = scalar_select %p524, %s27, 1
        %s526 = smul.addr %s525, 8
        %s527 = scalar_lea.vmem %s0, %s526
        %s528 = smul.u32 8, %s27
        %s529 = smul.u32 8, %s27
        %s530 = smul.u32 8, %s27
        %p531 = scmp.eq.s32.totalorder %s28, 0
        // Predicated region
        $region139: #{res_mpnn_forward.5} parent=129 // pred_check
          %p532 = pneg %p531
        $region140: #{res_mpnn_forward.5} parent=129 // pred_check_branch
          %534 = sbr.rel (%p532) target = $region142
        $region141: #{res_mpnn_forward.5} parent=129 // pred_region
          %v535 = vld [vmem:[%s527] sm:$0xff]
          %v536 = vld [vmem:[%s3] sm:$0xff]
          %v537 = vld [vmem:[%s3 + $0x8] sm:$0xff]
          %v538 = vld [vmem:[%s3 + $0x10] sm:$0xff]
          %v539 = vld [vmem:[%s3 + $0x18] sm:$0xff]
          %v540 = vld [vmem:[%s6] sm:$0x1]
          %v542 = vlaneseq
          %v543 = vshrl.u32 %v542, 7
          %v544 = vsub.s32 0, %v543
          %v545 = vrot.slane %v540, %v544
          %vm547 = vcmask 261120
          %v549 = vsel %vm547, %v535, 0
          %551 = vmatprep.subr.mxu0 0.0
          %552 = vmatpush1.msra.mxu0 %v536
          %553 = vmatprep.subr.mxu0 0.0
          %554 = vmatpush1.msra.mxu0 %v537
          %555 = vmatprep.subr.mxu0 0.0
          %556 = vmatpush1.msra.mxu0 %v538
          %557 = vmatprep.subr.mxu0 0.0
          %558 = vmatpush1.msra.mxu0 %v539
          %559 = vmatprep.subr.mxu0 0.0
          %560 = vmatpush1.msra.mxu0 0.0
          %561 = vmatprep.subr.mxu0 0.0
          %562 = vmatpush1.msra.mxu0 0.0
          %563 = vmatprep.subr.mxu0 0.0
          %564 = vmatpush1.msra.mxu0 0.0
          %565 = vmatprep.subr.mxu0 0.0
          %566 = vmatpush1.msra.mxu0 0.0
          %567 = vmatprep.subr.mxu0 0.0
          %568 = vmatpush1.msra.mxu0 0.0
          %569 = vmatprep.subr.mxu0 0.0
          %570 = vmatpush1.msra.mxu0 0.0
          %571 = vmatprep.subr.mxu0 0.0
          %572 = vmatpush1.msra.mxu0 0.0
          %573 = vmatprep.subr.mxu0 0.0
          %574 = vmatpush1.msra.mxu0 0.0
          %575 = vmatprep.subr.mxu0 0.0
          %576 = vmatpush1.msra.mxu0 0.0
          %577 = vmatprep.subr.mxu0 0.0
          %578 = vmatpush1.msra.mxu0 0.0
          %579 = vmatprep.subr.mxu0 0.0
          %580 = vmatpush1.msra.mxu0 0.0
          %581 = vmatprep.subr.mxu0 0.0
          %582 = vmatpush1.msra.mxu0 0.0
          %583 = vmatprep.subr.mxu0 0.0
          %584 = vmatpush1.msra.mxu0 0.0
          %585 = vmatprep.subr.mxu0 0.0
          %586 = vmatpush1.msra.mxu0 0.0
          %587 = vmatprep.subr.mxu0 0.0
          %588 = vmatpush1.msra.mxu0 0.0
          %589 = vmatprep.subr.mxu0 0.0
          %590 = vmatpush1.msra.mxu0 0.0
          %591 = vmatprep.subr.mxu0 0.0
          %592 = vmatpush1.msra.mxu0 0.0
          %593 = vmatprep.subr.mxu0 0.0
          %594 = vmatpush1.msra.mxu0 0.0
          %595 = vmatprep.subr.mxu0 0.0
          %596 = vmatpush1.msra.mxu0 0.0
          %597 = vmatprep.subr.mxu0 0.0
          %598 = vmatpush1.msra.mxu0 0.0
          %599 = vmatprep.subr.mxu0 0.0
          %600 = vmatpush1.msra.mxu0 0.0
          %601 = vmatprep.subr.mxu0 0.0
          %602 = vmatpush1.msra.mxu0 0.0
          %603 = vmatprep.subr.mxu0 0.0
          %604 = vmatpush1.msra.mxu0 0.0
          %605 = vmatprep.subr.mxu0 0.0
          %606 = vmatpush1.msra.mxu0 0.0
          %607 = vmatprep.subr.mxu0 0.0
          %608 = vmatpush1.msra.mxu0 0.0
          %609 = vmatprep.subr.mxu0 0.0
          %610 = vmatpush1.msra.mxu0 0.0
          %611 = vmatprep.subr.mxu0 0.0
          %612 = vmatpush1.msra.mxu0 0.0
          %613 = vmatprep.subr.mxu0 0.0
          %614 = vmatpush1.msra.mxu0 0.0
          %615 = vmatprep.mubr.f32.mxu0 0.0
          %616 = vmatmul.mubr.f32.gmra.mrb[0].mxu0 %v549
          %v617 = vpop.f32.mrb[0].mxu0
          %v618 = vadd.f32 %v545, %v617
          %v619 = vpop.f32.mrb[0].mxu0
          %620 = vdwg.mxu0
          %vm621 = vcmask 130048
          %622 = vst.msk [vmem:[#allocation2] sm:$0xff] %vm621, %v618
        $region142: #{res_mpnn_forward.5} parent=129 // pred_fallthru
          _
        %v623 = vld [vmem:[%s476] sm:$0x1]
        %v624 = vld [vmem:[%s476 + $0x1] sm:$0x1]
        %v625 = vld [vmem:[%s476 + $0x2] sm:$0x1]
        %v626 = vld [vmem:[%s476 + $0x3] sm:$0x1]
        %v627 = vld [vmem:[%s476 + $0x4] sm:$0x1]
        %v628 = vld [vmem:[%s476 + $0x5] sm:$0x1]
        %v629 = vld [vmem:[%s476 + $0x6] sm:$0x1]
        %v630 = vld [vmem:[%s476 + $0x7] sm:$0x1]
        %v631 = vld [vmem:[%s483] sm:$0x1]
        %v632 = vld [vmem:[%s483 + $0x1] sm:$0x1]
        %v633 = vld [vmem:[%s483 + $0x2] sm:$0x1]
        %v634 = vld [vmem:[%s483 + $0x3] sm:$0x1]
        %v635 = vld [vmem:[%s483 + $0x4] sm:$0x1]
        %v636 = vld [vmem:[%s483 + $0x5] sm:$0x1]
        %v637 = vld [vmem:[%s483 + $0x6] sm:$0x1]
        %v638 = vld [vmem:[%s483 + $0x7] sm:$0x1]
        %v639 = vld [vmem:[#allocation2] sm:$0xff]
        %v640 = vld [vmem:[%s4] sm:$0xff]
        %v641 = vld [vmem:[%s4 + $0x8] sm:$0xff]
        %v642 = vld [vmem:[%s4 + $0x10] sm:$0xff]
        %v643 = vld [vmem:[%s4 + $0x18] sm:$0xff]
        %v652 = vcombine.low %v623, %v624
        %v653 = vcombine.low %v625, %v626
        %v654 = vcombine.low %v627, %v628
        %v655 = vcombine.low %v629, %v630
        %v657 = vunpack.c.l.s4 1966171168
        %v658 = vunpack.c.0.s8 %v657
        %v659 = vlaneseq
        %v660 = vshrl.u32 %v659, 7
        %v661 = vsub.s32 %v658, %v660
        %v662 = vrot.slane %v652, %v661
        %v664 = vunpack.c.l.s4 1966171168
        %v665 = vunpack.c.0.s8 %v664
        %v666 = vlaneseq
        %v667 = vshrl.u32 %v666, 7
        %v668 = vsub.s32 %v665, %v667
        %v669 = vrot.slane %v653, %v668
        %v671 = vunpack.c.l.s4 1966171168
        %v672 = vunpack.c.0.s8 %v671
        %v673 = vlaneseq
        %v674 = vshrl.u32 %v673, 7
        %v675 = vsub.s32 %v672, %v674
        %v676 = vrot.slane %v654, %v675
        %v678 = vunpack.c.l.s4 1966171168
        %v679 = vunpack.c.0.s8 %v678
        %v680 = vlaneseq
        %v681 = vshrl.u32 %v680, 7
        %v682 = vsub.s32 %v679, %v681
        %v683 = vrot.slane %v655, %v682
        %v684 = vcombine.low %v662, %v669
        %v685 = vcombine.low %v676, %v683
        %v687 = vunpack.c.l.s4 1966171168
        %v688 = vunpack.c.0.s8 %v687
        %v689 = vlaneseq
        %v690 = vshrl.u32 %v689, 7
        %v691 = vsub.s32 %v688, %v690
        %v692 = vrot.slane %v684, %v691
        %v694 = vunpack.c.l.s4 1966171168
        %v695 = vunpack.c.0.s8 %v694
        %v696 = vlaneseq
        %v697 = vshrl.u32 %v696, 7
        %v698 = vsub.s32 %v695, %v697
        %v699 = vrot.slane %v685, %v698
        %v700 = vcombine.low %v692, %v699
        %vm701 = vcmask 261120
        %v702 = vsel %vm701, %v700, 0
        %704 = vmatprep.subr.mxu0 0.0
        %705 = vmatpush1.msra.mxu0 %v640
        %706 = vmatprep.subr.mxu0 0.0
        %707 = vmatpush1.msra.mxu0 %v641
        %708 = vmatprep.subr.mxu0 0.0
        %709 = vmatpush1.msra.mxu0 %v642
        %710 = vmatprep.subr.mxu0 0.0
        %711 = vmatpush1.msra.mxu0 %v643
        %712 = vmatprep.subr.mxu0 0.0
        %713 = vmatpush1.msra.mxu0 0.0
        %714 = vmatprep.subr.mxu0 0.0
        %715 = vmatpush1.msra.mxu0 0.0
        %716 = vmatprep.subr.mxu0 0.0
        %717 = vmatpush1.msra.mxu0 0.0
        %718 = vmatprep.subr.mxu0 0.0
        %719 = vmatpush1.msra.mxu0 0.0
        %720 = vmatprep.subr.mxu0 0.0
        %721 = vmatpush1.msra.mxu0 0.0
        %722 = vmatprep.subr.mxu0 0.0
        %723 = vmatpush1.msra.mxu0 0.0
        %724 = vmatprep.subr.mxu0 0.0
        %725 = vmatpush1.msra.mxu0 0.0
        %726 = vmatprep.subr.mxu0 0.0
        %727 = vmatpush1.msra.mxu0 0.0
        %728 = vmatprep.subr.mxu0 0.0
        %729 = vmatpush1.msra.mxu0 0.0
        %730 = vmatprep.subr.mxu0 0.0
        %731 = vmatpush1.msra.mxu0 0.0
        %732 = vmatprep.subr.mxu0 0.0
        %733 = vmatpush1.msra.mxu0 0.0
        %734 = vmatprep.subr.mxu0 0.0
        %735 = vmatpush1.msra.mxu0 0.0
        %736 = vmatprep.subr.mxu0 0.0
        %737 = vmatpush1.msra.mxu0 0.0
        %738 = vmatprep.subr.mxu0 0.0
        %739 = vmatpush1.msra.mxu0 0.0
        %740 = vmatprep.subr.mxu0 0.0
        %741 = vmatpush1.msra.mxu0 0.0
        %742 = vmatprep.subr.mxu0 0.0
        %743 = vmatpush1.msra.mxu0 0.0
        %744 = vmatprep.subr.mxu0 0.0
        %745 = vmatpush1.msra.mxu0 0.0
        %746 = vmatprep.subr.mxu0 0.0
        %747 = vmatpush1.msra.mxu0 0.0
        %748 = vmatprep.subr.mxu0 0.0
        %749 = vmatpush1.msra.mxu0 0.0
        %750 = vmatprep.subr.mxu0 0.0
        %751 = vmatpush1.msra.mxu0 0.0
        %752 = vmatprep.subr.mxu0 0.0
        %753 = vmatpush1.msra.mxu0 0.0
        %754 = vmatprep.subr.mxu0 0.0
        %755 = vmatpush1.msra.mxu0 0.0
        %756 = vmatprep.subr.mxu0 0.0
        %757 = vmatpush1.msra.mxu0 0.0
        %758 = vmatprep.subr.mxu0 0.0
        %759 = vmatpush1.msra.mxu0 0.0
        %760 = vmatprep.subr.mxu0 0.0
        %761 = vmatpush1.msra.mxu0 0.0
        %762 = vmatprep.subr.mxu0 0.0
        %763 = vmatpush1.msra.mxu0 0.0
        %764 = vmatprep.subr.mxu0 0.0
        %765 = vmatpush1.msra.mxu0 0.0
        %766 = vmatprep.subr.mxu0 0.0
        %767 = vmatpush1.msra.mxu0 0.0
        %768 = vmatprep.mubr.f32.mxu0 0.0
        %769 = vmatmul.mubr.f32.gmra.mrb[0].mxu0 %v702
        %v770 = vpop.f32.mrb[0].mxu0
        %v771 = vadd.f32 0.0, %v770
        %v772 = vpop.f32.mrb[0].mxu0
        %773 = vdwg.mxu0
        %v774 = vadd.f32 %v639, %v771
        %v775 = vld [vmem:[%s5] sm:$0xff]
        %v776 = vld [vmem:[%s5 + $0x8] sm:$0xff]
        %v785 = vcombine.low %v631, %v632
        %v786 = vcombine.low %v633, %v634
        %v787 = vcombine.low %v635, %v636
        %v788 = vcombine.low %v637, %v638
        %v790 = vunpack.c.l.s4 1966171168
        %v791 = vunpack.c.0.s8 %v790
        %v792 = vlaneseq
        %v793 = vshrl.u32 %v792, 7
        %v794 = vsub.s32 %v791, %v793
        %v795 = vrot.slane %v785, %v794
        %v797 = vunpack.c.l.s4 1966171168
        %v798 = vunpack.c.0.s8 %v797
        %v799 = vlaneseq
        %v800 = vshrl.u32 %v799, 7
        %v801 = vsub.s32 %v798, %v800
        %v802 = vrot.slane %v786, %v801
        %v804 = vunpack.c.l.s4 1966171168
        %v805 = vunpack.c.0.s8 %v804
        %v806 = vlaneseq
        %v807 = vshrl.u32 %v806, 7
        %v808 = vsub.s32 %v805, %v807
        %v809 = vrot.slane %v787, %v808
        %v811 = vunpack.c.l.s4 1966171168
        %v812 = vunpack.c.0.s8 %v811
        %v813 = vlaneseq
        %v814 = vshrl.u32 %v813, 7
        %v815 = vsub.s32 %v812, %v814
        %v816 = vrot.slane %v788, %v815
        %v817 = vcombine.low %v795, %v802
        %v818 = vcombine.low %v809, %v816
        %v820 = vunpack.c.l.s4 1966171168
        %v821 = vunpack.c.0.s8 %v820
        %v822 = vlaneseq
        %v823 = vshrl.u32 %v822, 7
        %v824 = vsub.s32 %v821, %v823
        %v825 = vrot.slane %v817, %v824
        %v827 = vunpack.c.l.s4 1966171168
        %v828 = vunpack.c.0.s8 %v827
        %v829 = vlaneseq
        %v830 = vshrl.u32 %v829, 7
        %v831 = vsub.s32 %v828, %v830
        %v832 = vrot.slane %v818, %v831
        %v833 = vcombine.low %v825, %v832
        %vm834 = vcmask 130048
        %v835 = vsel %vm834, %v833, 0
        %837 = vmatprep.subr.mxu0 0.0
        %838 = vmatpush1.msra.mxu0 %v775
        %839 = vmatprep.subr.mxu0 0.0
        %840 = vmatpush1.msra.mxu0 %v776
        %841 = vmatprep.subr.mxu0 0.0
        %842 = vmatpush1.msra.mxu0 0.0
        %843 = vmatprep.subr.mxu0 0.0
        %844 = vmatpush1.msra.mxu0 0.0
        %845 = vmatprep.subr.mxu0 0.0
        %846 = vmatpush1.msra.mxu0 0.0
        %847 = vmatprep.subr.mxu0 0.0
        %848 = vmatpush1.msra.mxu0 0.0
        %849 = vmatprep.subr.mxu0 0.0
        %850 = vmatpush1.msra.mxu0 0.0
        %851 = vmatprep.subr.mxu0 0.0
        %852 = vmatpush1.msra.mxu0 0.0
        %853 = vmatprep.subr.mxu0 0.0
        %854 = vmatpush1.msra.mxu0 0.0
        %855 = vmatprep.subr.mxu0 0.0
        %856 = vmatpush1.msra.mxu0 0.0
        %857 = vmatprep.subr.mxu0 0.0
        %858 = vmatpush1.msra.mxu0 0.0
        %859 = vmatprep.subr.mxu0 0.0
        %860 = vmatpush1.msra.mxu0 0.0
        %861 = vmatprep.subr.mxu0 0.0
        %862 = vmatpush1.msra.mxu0 0.0
        %863 = vmatprep.subr.mxu0 0.0
        %864 = vmatpush1.msra.mxu0 0.0
        %865 = vmatprep.subr.mxu0 0.0
        %866 = vmatpush1.msra.mxu0 0.0
        %867 = vmatprep.subr.mxu0 0.0
        %868 = vmatpush1.msra.mxu0 0.0
        %869 = vmatprep.subr.mxu0 0.0
        %870 = vmatpush1.msra.mxu0 0.0
        %871 = vmatprep.subr.mxu0 0.0
        %872 = vmatpush1.msra.mxu0 0.0
        %873 = vmatprep.subr.mxu0 0.0
        %874 = vmatpush1.msra.mxu0 0.0
        %875 = vmatprep.subr.mxu0 0.0
        %876 = vmatpush1.msra.mxu0 0.0
        %877 = vmatprep.subr.mxu0 0.0
        %878 = vmatpush1.msra.mxu0 0.0
        %879 = vmatprep.subr.mxu0 0.0
        %880 = vmatpush1.msra.mxu0 0.0
        %881 = vmatprep.subr.mxu0 0.0
        %882 = vmatpush1.msra.mxu0 0.0
        %883 = vmatprep.subr.mxu0 0.0
        %884 = vmatpush1.msra.mxu0 0.0
        %885 = vmatprep.subr.mxu0 0.0
        %886 = vmatpush1.msra.mxu0 0.0
        %887 = vmatprep.subr.mxu0 0.0
        %888 = vmatpush1.msra.mxu0 0.0
        %889 = vmatprep.subr.mxu0 0.0
        %890 = vmatpush1.msra.mxu0 0.0
        %891 = vmatprep.subr.mxu0 0.0
        %892 = vmatpush1.msra.mxu0 0.0
        %893 = vmatprep.subr.mxu0 0.0
        %894 = vmatpush1.msra.mxu0 0.0
        %895 = vmatprep.subr.mxu0 0.0
        %896 = vmatpush1.msra.mxu0 0.0
        %897 = vmatprep.subr.mxu0 0.0
        %898 = vmatpush1.msra.mxu0 0.0
        %899 = vmatprep.subr.mxu0 0.0
        %900 = vmatpush1.msra.mxu0 0.0
        %901 = vmatprep.mubr.f32.mxu0 0.0
        %902 = vmatmul.mubr.f32.gmra.mrb[0].mxu0 %v835
        %v903 = vpop.f32.mrb[0].mxu0
        %v904 = vadd.f32 0.0, %v903
        %v905 = vpop.f32.mrb[0].mxu0
        %906 = vdwg.mxu0
        %v907 = vadd.f32 %v774, %v904
        %v908 = vmul.f32 %v907, 0.5
        %v909 = vmul.f32 %v907, 0.70710677
        %vm910 = vcmp.ge.f32.partialorder %v909, 0.0
        %v911 = vsel %vm910, 1.0, -1.0
        %v912 = vand.u32 2147483647, %v909
        %v913 = vmul.f32 %v912, 0.3275911
        %v914 = vadd.f32 %v913, 1.0
        %v915 = vrcp.pop %v914
        %v916 = vmul.f32 1.0, %v915
        %v917 = vmul.f32 %v916, 1.0614054
        %v918 = vadd.f32 %v917, -1.4531521
        %v919 = vmul.f32 %v918, %v916
        %v920 = vadd.f32 %v919, 1.4214138
        %v921 = vmul.f32 %v920, %v916
        %v922 = vadd.f32 %v921, -0.28449672
        %v923 = vmul.f32 %v922, %v916
        %v924 = vadd.f32 %v923, 0.2548296
        %v925 = vmul.f32 %v924, %v916
        %v926 = vsub.f32 0.0, %v912
        %v927 = vmul.f32 %v926, %v912
        %v928 = vmul.f32 %v927, 1.442695
        %v929 = vpow.pop %v928
        %v930 = vmul.f32 %v925, %v929
        %v931 = vsub.f32 1.0, %v930
        %v932 = vmul.f32 %v911, %v931
        %v933 = vadd.f32 %v932, 1.0
        %v934 = vmul.f32 %v908, %v933
        %v935 = vld [vmem:[%s7] sm:$0xff]
        %v936 = vld [vmem:[%s7 + $0x8] sm:$0xff]
        %v937 = vld [vmem:[%s8] sm:$0x1]
        %v939 = vlaneseq
        %v940 = vshrl.u32 %v939, 7
        %v941 = vsub.s32 0, %v940
        %v942 = vrot.slane %v937, %v941
        %v945 = vsel %vm834, %v934, 0
        %947 = vmatprep.subr.mxu0 0.0
        %948 = vmatpush1.msra.mxu0 %v935
        %949 = vmatprep.subr.mxu0 0.0
        %950 = vmatpush1.msra.mxu0 %v936
        %951 = vmatprep.subr.mxu0 0.0
        %952 = vmatpush1.msra.mxu0 0.0
        %953 = vmatprep.subr.mxu0 0.0
        %954 = vmatpush1.msra.mxu0 0.0
        %955 = vmatprep.subr.mxu0 0.0
        %956 = vmatpush1.msra.mxu0 0.0
        %957 = vmatprep.subr.mxu0 0.0
        %958 = vmatpush1.msra.mxu0 0.0
        %959 = vmatprep.subr.mxu0 0.0
        %960 = vmatpush1.msra.mxu0 0.0
        %961 = vmatprep.subr.mxu0 0.0
        %962 = vmatpush1.msra.mxu0 0.0
        %963 = vmatprep.subr.mxu0 0.0
        %964 = vmatpush1.msra.mxu0 0.0
        %965 = vmatprep.subr.mxu0 0.0
        %966 = vmatpush1.msra.mxu0 0.0
        %967 = vmatprep.subr.mxu0 0.0
        %968 = vmatpush1.msra.mxu0 0.0
        %969 = vmatprep.subr.mxu0 0.0
        %970 = vmatpush1.msra.mxu0 0.0
        %971 = vmatprep.subr.mxu0 0.0
        %972 = vmatpush1.msra.mxu0 0.0
        %973 = vmatprep.subr.mxu0 0.0
        %974 = vmatpush1.msra.mxu0 0.0
        %975 = vmatprep.subr.mxu0 0.0
        %976 = vmatpush1.msra.mxu0 0.0
        %977 = vmatprep.subr.mxu0 0.0
        %978 = vmatpush1.msra.mxu0 0.0
        %979 = vmatprep.subr.mxu0 0.0
        %980 = vmatpush1.msra.mxu0 0.0
        %981 = vmatprep.subr.mxu0 0.0
        %982 = vmatpush1.msra.mxu0 0.0
        %983 = vmatprep.subr.mxu0 0.0
        %984 = vmatpush1.msra.mxu0 0.0
        %985 = vmatprep.subr.mxu0 0.0
        %986 = vmatpush1.msra.mxu0 0.0
        %987 = vmatprep.subr.mxu0 0.0
        %988 = vmatpush1.msra.mxu0 0.0
        %989 = vmatprep.subr.mxu0 0.0
        %990 = vmatpush1.msra.mxu0 0.0
        %991 = vmatprep.subr.mxu0 0.0
        %992 = vmatpush1.msra.mxu0 0.0
        %993 = vmatprep.subr.mxu0 0.0
        %994 = vmatpush1.msra.mxu0 0.0
        %995 = vmatprep.subr.mxu0 0.0
        %996 = vmatpush1.msra.mxu0 0.0
        %997 = vmatprep.subr.mxu0 0.0
        %998 = vmatpush1.msra.mxu0 0.0
        %999 = vmatprep.subr.mxu0 0.0
        %1000 = vmatpush1.msra.mxu0 0.0
        %1001 = vmatprep.subr.mxu0 0.0
        %1002 = vmatpush1.msra.mxu0 0.0
        %1003 = vmatprep.subr.mxu0 0.0
        %1004 = vmatpush1.msra.mxu0 0.0
        %1005 = vmatprep.subr.mxu0 0.0
        %1006 = vmatpush1.msra.mxu0 0.0
        %1007 = vmatprep.subr.mxu0 0.0
        %1008 = vmatpush1.msra.mxu0 0.0
        %1009 = vmatprep.subr.mxu0 0.0
        %1010 = vmatpush1.msra.mxu0 0.0
        %1011 = vmatprep.mubr.f32.mxu0 0.0
        %1012 = vmatmul.mubr.f32.gmra.mrb[0].mxu0 %v945
        %v1013 = vpop.f32.mrb[0].mxu0
        %v1014 = vadd.f32 %v942, %v1013
        %v1015 = vpop.f32.mrb[0].mxu0
        %1016 = vdwg.mxu0
        %v1017 = vmul.f32 %v1014, 0.5
        %v1018 = vmul.f32 %v1014, 0.70710677
        %vm1019 = vcmp.ge.f32.partialorder %v1018, 0.0
        %v1020 = vsel %vm1019, 1.0, -1.0
        %v1021 = vand.u32 2147483647, %v1018
        %v1022 = vmul.f32 %v1021, 0.3275911
        %v1023 = vadd.f32 %v1022, 1.0
        %v1024 = vrcp.pop %v1023
        %v1025 = vmul.f32 1.0, %v1024
        %v1026 = vmul.f32 %v1025, 1.0614054
        %v1027 = vadd.f32 %v1026, -1.4531521
        %v1028 = vmul.f32 %v1027, %v1025
        %v1029 = vadd.f32 %v1028, 1.4214138
        %v1030 = vmul.f32 %v1029, %v1025
        %v1031 = vadd.f32 %v1030, -0.28449672
        %v1032 = vmul.f32 %v1031, %v1025
        %v1033 = vadd.f32 %v1032, 0.2548296
        %v1034 = vmul.f32 %v1033, %v1025
        %v1035 = vsub.f32 0.0, %v1021
        %v1036 = vmul.f32 %v1035, %v1021
        %v1037 = vmul.f32 %v1036, 1.442695
        %v1038 = vpow.pop %v1037
        %v1039 = vmul.f32 %v1034, %v1038
        %v1040 = vsub.f32 1.0, %v1039
        %v1041 = vmul.f32 %v1020, %v1040
        %v1042 = vadd.f32 %v1041, 1.0
        %v1043 = vmul.f32 %v1017, %v1042
        %v1045 = vcombine.high %v1043, %v1043
        %v1047 = vunpack.c.l.s4 1966171168
        %v1048 = vunpack.c.0.s8 %v1047
        %v1049 = vlaneseq
        %v1050 = vshrl.u32 %v1049, 7
        %v1051 = vsub.s32 %v1048, %v1050
        %v1052 = vrot.slane %v1043, %v1051
        %v1054 = vunpack.c.l.s4 1966171168
        %v1055 = vunpack.c.0.s8 %v1054
        %v1056 = vlaneseq
        %v1057 = vshrl.u32 %v1056, 7
        %v1058 = vsub.s32 %v1055, %v1057
        %v1059 = vrot.slane %v1045, %v1058
        %v1060 = vcombine.high %v1052, %v1052
        %v1061 = vcombine.high %v1059, %v1059
        %v1063 = vunpack.c.l.s4 1966171168
        %v1064 = vunpack.c.0.s8 %v1063
        %v1065 = vlaneseq
        %v1066 = vshrl.u32 %v1065, 7
        %v1067 = vsub.s32 %v1064, %v1066
        %v1068 = vrot.slane %v1052, %v1067
        %v1070 = vunpack.c.l.s4 1966171168
        %v1071 = vunpack.c.0.s8 %v1070
        %v1072 = vlaneseq
        %v1073 = vshrl.u32 %v1072, 7
        %v1074 = vsub.s32 %v1071, %v1073
        %v1075 = vrot.slane %v1059, %v1074
        %v1077 = vunpack.c.l.s4 1966171168
        %v1078 = vunpack.c.0.s8 %v1077
        %v1079 = vlaneseq
        %v1080 = vshrl.u32 %v1079, 7
        %v1081 = vsub.s32 %v1078, %v1080
        %v1082 = vrot.slane %v1060, %v1081
        %v1084 = vunpack.c.l.s4 1966171168
        %v1085 = vunpack.c.0.s8 %v1084
        %v1086 = vlaneseq
        %v1087 = vshrl.u32 %v1086, 7
        %v1088 = vsub.s32 %v1085, %v1087
        %v1089 = vrot.slane %v1061, %v1088
        %v1090 = vcombine.high %v1068, %v1068
        %v1091 = vcombine.high %v1075, %v1075
        %v1092 = vcombine.high %v1082, %v1082
        %v1093 = vcombine.high %v1089, %v1089
        %v1102 = vadd.f32 %v631, %v1068
        %v1103 = vadd.f32 %v632, %v1082
        %v1104 = vadd.f32 %v633, %v1090
        %v1105 = vadd.f32 %v634, %v1092
        %v1106 = vadd.f32 %v635, %v1075
        %v1107 = vadd.f32 %v636, %v1089
        %v1108 = vadd.f32 %v637, %v1091
        %v1109 = vadd.f32 %v638, %v1093
        %vm1110 = vcmask 122880
        %1111 = vst.msk [vmem:[%s523] sm:$0x1] %vm1110, %v1102
        %1112 = vst.msk [vmem:[%s523 + $0x1] sm:$0x1] %vm1110, %v1103
        %1113 = vst.msk [vmem:[%s523 + $0x2] sm:$0x1] %vm1110, %v1104
        %1114 = vst.msk [vmem:[%s523 + $0x3] sm:$0x1] %vm1110, %v1105
        %1115 = vst.msk [vmem:[%s523 + $0x4] sm:$0x1] %vm1110, %v1106
        %1116 = vst.msk [vmem:[%s523 + $0x5] sm:$0x1] %vm1110, %v1107
        %1117 = vst.msk [vmem:[%s523 + $0x6] sm:$0x1] %vm1110, %v1108
        %1118 = vst.msk [vmem:[%s523 + $0x7] sm:$0x1] %vm1110, %v1109
        %s1119 = sand.u32 %s253, 1
        %s1120 = scalar_lea.sflag [#allocation6], %s1119
        %s1121 = sand.u32 %s253, 1
        %s1122 = smul.addr %s1121, 8
        %s1123 = scalar_lea.vmem [#allocation5], %s1122
        // Predicated region
        $region143: #{res_mpnn_forward.5} parent=129 // pred_check
          %p1124 = pneg %p263
        $region144: #{res_mpnn_forward.5} parent=129 // pred_check_branch
          %1126 = sbr.rel (%p1124) target = $region146
        $region145: #{res_mpnn_forward.5} parent=129 // pred_region
          %s1127 = smul.u32 8, %s27
          %s1129 = ssub.s32 128, 128
          %1130 = vsyncadd %s1120, %s1129
          %s1131 = smul.addr %s1127, 4
          %s1132 = sadd.s32 %s28, %s1131
          %s1133 = smul.addr %s1132, 16
          %s1134 = scalar_lea.hbm %s9, %s1133
          %s1135 = sshll.u32 %s1123, 4
          %s1136 = int_to_ptr.vmem [resolvable:$true] %s1135
          %1141 = dma.vmem_to_hbm [thread:$0]  %s1136, 128, %s1134, %s1120, 16, 64, 1
        $region146: #{res_mpnn_forward.5} parent=129 // pred_fallthru
          _
      $region130: #{res_mpnn_forward.5} parent=5 // pred_fallthru
        _
      %p1142 = scmp.le.s32.totalorder 2, %s18
      // Predicated region
      $region147: #{res_mpnn_forward.5} parent=5 // pred_check
        %p1143 = pneg %p1142
      $region148: #{res_mpnn_forward.5} parent=5 // pred_check_branch
        %1145 = sbr.rel (%p1143) target = $region150
      $region149: #{res_mpnn_forward.5} parent=5 // pred_region
        %s1146 = ssub.s32 %s18, 2
        // Predicated region
        $region151: #{res_mpnn_forward.5} parent=149 // pred_check
          %p1147 = pneg %p269
        $region152: #{res_mpnn_forward.5} parent=149 // pred_check_branch
          %1149 = sbr.rel (%p1147) target = $region154
        $region153: #{res_mpnn_forward.5} parent=149 // pred_region
          %s1150 = sand.u32 %s254, 1
          %s1151 = scalar_lea.sflag [#allocation6], %s1150
          %s1152 = sand.u32 %s254, 1
          %s1153 = smul.addr %s1152, 8
          %s1154 = scalar_lea.vmem [#allocation5], %s1153
          %1155 = dma.done %s1151, 128
        $region154: #{res_mpnn_forward.5} parent=149 // pred_fallthru
          _
      $region150: #{res_mpnn_forward.5} parent=5 // pred_fallthru
        _
    $region6: #{res_mpnn_forward.5} parent=1 // loop_footer
      %s22 = sadd.s32 1, %s18
    $region7: #{res_mpnn_forward.5} parent=1 // loop_footer_branch
      %17 = sbr.rel target = $region3
    $region8: #{res_mpnn_forward.5} parent=1 // loop_exit
      _
    %1156 = vsyncpa [#allocation6], 1
    %s1157 = scalar_lea.sflag [#allocation6], 1
    %1158 = vsyncpa %s1157, 1

// kernel: res_mpnn_forward.3
$region0: #{res_mpnn_forward.3}
  #allocation0 [shape = 'u32[]', space=smem, size = 0x4, offset = 0x4, fixed_abs, tag = 'smem constant byte address 0x4 - core index']
  #allocation1 [shape = 'u32[144,128]{1,0:T(1,128)}', space=vmem, size = 0x12000, scoped, tag = 'internal scratch']
  #allocation2 [shape = 'f32[8,32]{1,0:T(8,128)}', space=vmem, size = 0x1000, scoped, tag = 'scratch operand']
  #allocation3 [shape = 'f32[8,32]{1,0:T(8,128)}', space=vmem, size = 0x1000, scoped, tag = 'scratch operand']
  #allocation4 [shape = 'f32[8,1]{1,0:T(8,128)}', space=vmem, size = 0x1000, scoped, tag = 'scratch operand']
  %s0 = inlined_call_operand.vmem [shape: f32[16,32], index: 0, kind: input, shape index: {}]
  %s1 = inlined_call_operand.vmem [shape: f32[16,1], index: 1, kind: input, shape index: {}]
  %s2 = inlined_call_operand.vmem [shape: f32[16,4], index: 2, kind: input, shape index: {}]
  %s3 = inlined_call_operand.vmem [shape: f32[16,4,1,32], index: 3, kind: input, shape index: {}]
  %s4 = inlined_call_operand.vmem [shape: f32[16,4,1,16], index: 4, kind: input, shape index: {}]
  %s5 = inlined_call_operand.vmem [shape: f32[32,32], index: 5, kind: input, shape index: {}]
  %s6 = inlined_call_operand.vmem [shape: f32[32,32], index: 6, kind: input, shape index: {}]
  %s7 = inlined_call_operand.vmem [shape: f32[16,32], index: 7, kind: input, shape index: {}]
  %s8 = inlined_call_operand.vmem [shape: f32[1,32], index: 8, kind: input, shape index: {}]
  %s9 = inlined_call_operand.vmem [shape: f32[32,32], index: 9, kind: input, shape index: {}]
  %s10 = inlined_call_operand.vmem [shape: f32[1,32], index: 10, kind: input, shape index: {}]
  %s11 = inlined_call_operand.vmem [shape: f32[16,32], index: 11, kind: output, shape index: {}]
  %s12 = sld [smem:[#allocation0]]
  $region167: #{res_mpnn_forward.3} parent=0
    _
  %s14 = ssub.s32 1, %s12
  %s15 = scalar_select 0, %s14, %s12
  $region1: #{res_mpnn_forward.3} parent=0
    #allocation5 [shape = 'u8[8192]{0}', space=vmem, size = 0x2000, scoped, tag = 'input window, operand 3']
    #allocation6 [shape = 'u8[8192]{0}', space=vmem, size = 0x2000, scoped, tag = 'input window, operand 4']
    loop: start=0, step=1, limit=10
    $region2: #{res_mpnn_forward.3} parent=1 // loop_pre_header
      _
    $region3: #{res_mpnn_forward.3} parent=1 // loop_header
      %s17 = sphi 0, %s21
      %p18 = scmp.ge.s32.totalorder %s17, 10
      %s24 = sphi 0, %s36
      %s25 = sphi 0, %s32
      %s26 = sphi 0, %s24
      %s27 = sphi 0, %s25
      %s28 = sphi 0, %s26
      %s29 = sphi 0, %s27
      %s39 = sphi 0, %s41
      %s42 = sphi 0, %s39
      %s43 = sphi 0, %s42
      %s59 = sphi 0, %s43
      %s65 = sphi 0, %s67
      %s68 = sphi 0, %s65
      %s69 = sphi 0, %s68
      %s85 = sphi 0, %s69
      %s91 = sphi 0, %s93
      %s94 = sphi 0, %s91
      %s95 = sphi 0, %s94
      %s111 = sphi 0, %s95
      %s119 = sphi 0, %s121
      %s122 = sphi 0, %s119
      %s123 = sphi 0, %s122
      %s139 = sphi 0, %s123
      %s147 = sphi 0, %s149
      %s150 = sphi 0, %s147
      %s151 = sphi 0, %s150
      %s167 = sphi 0, %s151
      %s171 = sphi 0, %s171
      %s173 = sphi 0, %s171
      %s174 = sphi 0, %s173
      %s188 = sphi 0, %s174
      %s192 = sphi 0, %s192
      %s194 = sphi 0, %s192
      %s195 = sphi 0, %s194
      %s209 = sphi 0, %s195
      %s213 = sphi 0, %s213
      %s215 = sphi 0, %s213
      %s216 = sphi 0, %s215
      %s230 = sphi 0, %s216
      %s234 = sphi 0, %s234
      %s236 = sphi 0, %s234
      %s237 = sphi 0, %s236
      %s251 = sphi 0, %s237
      %s255 = sphi 0, %s255
      %s257 = sphi 0, %s255
      %s258 = sphi 0, %s257
      %s272 = sphi 0, %s258
      %s276 = sphi 0, %s276
      %s278 = sphi 0, %s276
      %s279 = sphi 0, %s278
      %s293 = sphi 0, %s279
      %s299 = sphi 0, %s301
      %s302 = sphi 0, %s299
      %s303 = sphi 0, %s302
      %s319 = sphi 0, %s303
    $region4: #{res_mpnn_forward.3} parent=1 // loop_header_branch
      %20 = sbr.rel (%p18) target = $region8
    $region5: #{res_mpnn_forward.3} parent=1 // loop_body
      %s22 = ssub.s32 %s17, 1
      %s23 = ssub.s32 %s17, 2
      %s30 = sadd.s32 1, %s25
      %p31 = scmp.ge.s32.totalorder %s30, 4
      %s32 = scalar_select %p31, 0, %s30
      %s33 = sadd.s32 1, %s24
      %s34 = scalar_select %p31, %s33, %s24
      %p35 = scmp.ge.s32.totalorder %s34, 2
      %s36 = scalar_select %p35, 0, %s34
      %s37 = ssub.s32 %s24, %s36
      %p38 = scmp.eq.s32.totalorder %s37, 0
      %s40 = sadd.s32 %s39, 1
      %s41 = scalar_select %p38, %s39, %s40
      %p44 = pneg %p38
      %p45 = scmp.eq.s32.totalorder %s17, 7
      %p46 = por %p44, %p45
      %p47 = scmp.ne.s32.totalorder %s39, %s42
      %p48 = scmp.eq.s32.totalorder %s17, 0
      %p49 = por %p47, %p48
      %p50 = scmp.ne.s32.totalorder %s39, %s42
      %p51 = scmp.eq.s32.totalorder %s22, 7
      %p52 = por %p50, %p51
      %p53 = scmp.ne.s32.totalorder %s42, %s43
      %p54 = scmp.eq.s32.totalorder %s22, 0
      %p55 = por %p53, %p54
      %p56 = scmp.ne.s32.totalorder %s42, %s43
      %p57 = scmp.eq.s32.totalorder %s23, 7
      %p58 = por %p56, %p57
      %p60 = scmp.ne.s32.totalorder %s43, %s59
      %p61 = scmp.eq.s32.totalorder %s23, 0
      %p62 = por %p60, %p61
      %s63 = ssub.s32 %s24, %s36
      %p64 = scmp.eq.s32.totalorder %s63, 0
      %s66 = sadd.s32 %s65, 1
      %s67 = scalar_select %p64, %s65, %s66
      %p70 = pneg %p64
      %p71 = scmp.eq.s32.totalorder %s17, 7
      %p72 = por %p70, %p71
      %p73 = scmp.ne.s32.totalorder %s65, %s68
      %p74 = scmp.eq.s32.totalorder %s17, 0
      %p75 = por %p73, %p74
      %p76 = scmp.ne.s32.totalorder %s65, %s68
      %p77 = scmp.eq.s32.totalorder %s22, 7
      %p78 = por %p76, %p77
      %p79 = scmp.ne.s32.totalorder %s68, %s69
      %p80 = scmp.eq.s32.totalorder %s22, 0
      %p81 = por %p79, %p80
      %p82 = scmp.ne.s32.totalorder %s68, %s69
      %p83 = scmp.eq.s32.totalorder %s23, 7
      %p84 = por %p82, %p83
      %p86 = scmp.ne.s32.totalorder %s69, %s85
      %p87 = scmp.eq.s32.totalorder %s23, 0
      %p88 = por %p86, %p87
      %s89 = ssub.s32 %s24, %s36
      %p90 = scmp.eq.s32.totalorder %s89, 0
      %s92 = sadd.s32 %s91, 1
      %s93 = scalar_select %p90, %s91, %s92
      %p96 = pneg %p90
      %p97 = scmp.eq.s32.totalorder %s17, 7
      %p98 = por %p96, %p97
      %p99 = scmp.ne.s32.totalorder %s91, %s94
      %p100 = scmp.eq.s32.totalorder %s17, 0
      %p101 = por %p99, %p100
      %p102 = scmp.ne.s32.totalorder %s91, %s94
      %p103 = scmp.eq.s32.totalorder %s22, 7
      %p104 = por %p102, %p103
      %p105 = scmp.ne.s32.totalorder %s94, %s95
      %p106 = scmp.eq.s32.totalorder %s22, 0
      %p107 = por %p105, %p106
      %p108 = scmp.ne.s32.totalorder %s94, %s95
      %p109 = scmp.eq.s32.totalorder %s23, 7
      %p110 = por %p108, %p109
      %p112 = scmp.ne.s32.totalorder %s95, %s111
      %p113 = scmp.eq.s32.totalorder %s23, 0
      %p114 = por %p112, %p113
      %s115 = ssub.s32 %s24, %s36
      %s116 = ssub.s32 %s25, %s32
      %s117 = sor.u32 %s115, %s116
      %p118 = scmp.eq.s32.totalorder %s117, 0
      %s120 = sadd.s32 %s119, 1
      %s121 = scalar_select %p118, %s119, %s120
      %p124 = pneg %p118
      %p125 = scmp.eq.s32.totalorder %s17, 7
      %p126 = por %p124, %p125
      %p127 = scmp.ne.s32.totalorder %s119, %s122
      %p128 = scmp.eq.s32.totalorder %s17, 0
      %p129 = por %p127, %p128
      %p130 = scmp.ne.s32.totalorder %s119, %s122
      %p131 = scmp.eq.s32.totalorder %s22, 7
      %p132 = por %p130, %p131
      %p133 = scmp.ne.s32.totalorder %s122, %s123
      %p134 = scmp.eq.s32.totalorder %s22, 0
      %p135 = por %p133, %p134
      %p136 = scmp.ne.s32.totalorder %s122, %s123
      %p137 = scmp.eq.s32.totalorder %s23, 7
      %p138 = por %p136, %p137
      %p140 = scmp.ne.s32.totalorder %s123, %s139
      %p141 = scmp.eq.s32.totalorder %s23, 0
      %p142 = por %p140, %p141
      %s143 = ssub.s32 %s24, %s36
      %s144 = ssub.s32 %s25, %s32
      %s145 = sor.u32 %s143, %s144
      %p146 = scmp.eq.s32.totalorder %s145, 0
      %s148 = sadd.s32 %s147, 1
      %s149 = scalar_select %p146, %s147, %s148
      %p152 = pneg %p146
      %p153 = scmp.eq.s32.totalorder %s17, 7
      %p154 = por %p152, %p153
      %p155 = scmp.ne.s32.totalorder %s147, %s150
      %p156 = scmp.eq.s32.totalorder %s17, 0
      %p157 = por %p155, %p156
      %p158 = scmp.ne.s32.totalorder %s147, %s150
      %p159 = scmp.eq.s32.totalorder %s22, 7
      %p160 = por %p158, %p159
      %p161 = scmp.ne.s32.totalorder %s150, %s151
      %p162 = scmp.eq.s32.totalorder %s22, 0
      %p163 = por %p161, %p162
      %p164 = scmp.ne.s32.totalorder %s150, %s151
      %p165 = scmp.eq.s32.totalorder %s23, 7
      %p166 = por %p164, %p165
      %p168 = scmp.ne.s32.totalorder %s151, %s167
      %p169 = scmp.eq.s32.totalorder %s23, 0
      %p170 = por %p168, %p169
      %s172 = sadd.s32 %s171, 1
      %p175 = scmp.eq.s32.totalorder %s17, 7
      %p176 = scmp.ne.s32.totalorder %s171, %s173
      %p177 = scmp.eq.s32.totalorder %s17, 0
      %p178 = por %p176, %p177
      %p179 = scmp.ne.s32.totalorder %s171, %s173
      %p180 = scmp.eq.s32.totalorder %s22, 7
      %p181 = por %p179, %p180
      %p182 = scmp.ne.s32.totalorder %s173, %s174
      %p183 = scmp.eq.s32.totalorder %s22, 0
      %p184 = por %p182, %p183
      %p185 = scmp.ne.s32.totalorder %s173, %s174
      %p186 = scmp.eq.s32.totalorder %s23, 7
      %p187 = por %p185, %p186
      %p189 = scmp.ne.s32.totalorder %s174, %s188
      %p190 = scmp.eq.s32.totalorder %s23, 0
      %p191 = por %p189, %p190
      %s193 = sadd.s32 %s192, 1
      %p196 = scmp.eq.s32.totalorder %s17, 7
      %p197 = scmp.ne.s32.totalorder %s192, %s194
      %p198 = scmp.eq.s32.totalorder %s17, 0
      %p199 = por %p197, %p198
      %p200 = scmp.ne.s32.totalorder %s192, %s194
      %p201 = scmp.eq.s32.totalorder %s22, 7
      %p202 = por %p200, %p201
      %p203 = scmp.ne.s32.totalorder %s194, %s195
      %p204 = scmp.eq.s32.totalorder %s22, 0
      %p205 = por %p203, %p204
      %p206 = scmp.ne.s32.totalorder %s194, %s195
      %p207 = scmp.eq.s32.totalorder %s23, 7
      %p208 = por %p206, %p207
      %p210 = scmp.ne.s32.totalorder %s195, %s209
      %p211 = scmp.eq.s32.totalorder %s23, 0
      %p212 = por %p210, %p211
      %s214 = sadd.s32 %s213, 1
      %p217 = scmp.eq.s32.totalorder %s17, 7
      %p218 = scmp.ne.s32.totalorder %s213, %s215
      %p219 = scmp.eq.s32.totalorder %s17, 0
      %p220 = por %p218, %p219
      %p221 = scmp.ne.s32.totalorder %s213, %s215
      %p222 = scmp.eq.s32.totalorder %s22, 7
      %p223 = por %p221, %p222
      %p224 = scmp.ne.s32.totalorder %s215, %s216
      %p225 = scmp.eq.s32.totalorder %s22, 0
      %p226 = por %p224, %p225
      %p227 = scmp.ne.s32.totalorder %s215, %s216
      %p228 = scmp.eq.s32.totalorder %s23, 7
      %p229 = por %p227, %p228
      %p231 = scmp.ne.s32.totalorder %s216, %s230
      %p232 = scmp.eq.s32.totalorder %s23, 0
      %p233 = por %p231, %p232
      %s235 = sadd.s32 %s234, 1
      %p238 = scmp.eq.s32.totalorder %s17, 7
      %p239 = scmp.ne.s32.totalorder %s234, %s236
      %p240 = scmp.eq.s32.totalorder %s17, 0
      %p241 = por %p239, %p240
      %p242 = scmp.ne.s32.totalorder %s234, %s236
      %p243 = scmp.eq.s32.totalorder %s22, 7
      %p244 = por %p242, %p243
      %p245 = scmp.ne.s32.totalorder %s236, %s237
      %p246 = scmp.eq.s32.totalorder %s22, 0
      %p247 = por %p245, %p246
      %p248 = scmp.ne.s32.totalorder %s236, %s237
      %p249 = scmp.eq.s32.totalorder %s23, 7
      %p250 = por %p248, %p249
      %p252 = scmp.ne.s32.totalorder %s237, %s251
      %p253 = scmp.eq.s32.totalorder %s23, 0
      %p254 = por %p252, %p253
      %s256 = sadd.s32 %s255, 1
      %p259 = scmp.eq.s32.totalorder %s17, 7
      %p260 = scmp.ne.s32.totalorder %s255, %s257
      %p261 = scmp.eq.s32.totalorder %s17, 0
      %p262 = por %p260, %p261
      %p263 = scmp.ne.s32.totalorder %s255, %s257
      %p264 = scmp.eq.s32.totalorder %s22, 7
      %p265 = por %p263, %p264
      %p266 = scmp.ne.s32.totalorder %s257, %s258
      %p267 = scmp.eq.s32.totalorder %s22, 0
      %p268 = por %p266, %p267
      %p269 = scmp.ne.s32.totalorder %s257, %s258
      %p270 = scmp.eq.s32.totalorder %s23, 7
      %p271 = por %p269, %p270
      %p273 = scmp.ne.s32.totalorder %s258, %s272
      %p274 = scmp.eq.s32.totalorder %s23, 0
      %p275 = por %p273, %p274
      %s277 = sadd.s32 %s276, 1
      %p280 = scmp.eq.s32.totalorder %s17, 7
      %p281 = scmp.ne.s32.totalorder %s276, %s278
      %p282 = scmp.eq.s32.totalorder %s17, 0
      %p283 = por %p281, %p282
      %p284 = scmp.ne.s32.totalorder %s276, %s278
      %p285 = scmp.eq.s32.totalorder %s22, 7
      %p286 = por %p284, %p285
      %p287 = scmp.ne.s32.totalorder %s278, %s279
      %p288 = scmp.eq.s32.totalorder %s22, 0
      %p289 = por %p287, %p288
      %p290 = scmp.ne.s32.totalorder %s278, %s279
      %p291 = scmp.eq.s32.totalorder %s23, 7
      %p292 = por %p290, %p291
      %p294 = scmp.ne.s32.totalorder %s279, %s293
      %p295 = scmp.eq.s32.totalorder %s23, 0
      %p296 = por %p294, %p295
      %s297 = ssub.s32 %s24, %s36
      %p298 = scmp.eq.s32.totalorder %s297, 0
      %s300 = sadd.s32 %s299, 1
      %s301 = scalar_select %p298, %s299, %s300
      %p304 = pneg %p298
      %p305 = scmp.eq.s32.totalorder %s17, 7
      %p306 = por %p304, %p305
      %p307 = scmp.ne.s32.totalorder %s299, %s302
      %p308 = scmp.eq.s32.totalorder %s17, 0
      %p309 = por %p307, %p308
      %p310 = scmp.ne.s32.totalorder %s299, %s302
      %p311 = scmp.eq.s32.totalorder %s22, 7
      %p312 = por %p310, %p311
      %p313 = scmp.ne.s32.totalorder %s302, %s303
      %p314 = scmp.eq.s32.totalorder %s22, 0
      %p315 = por %p313, %p314
      %p316 = scmp.ne.s32.totalorder %s302, %s303
      %p317 = scmp.eq.s32.totalorder %s23, 7
      %p318 = por %p316, %p317
      %p320 = scmp.ne.s32.totalorder %s303, %s319
      %p321 = scmp.eq.s32.totalorder %s23, 0
      %p322 = por %p320, %p321
      %p323 = scmp.le.s32.totalorder 1, %s17
      %p324 = scmp.lt.s32.totalorder %s17, 9
      %p325 = pnand %p323, %p324
      %p326 = pneg %p325
      // Predicated region
      $region9: #{res_mpnn_forward.3} parent=5 // pred_check
        _
      $region10: #{res_mpnn_forward.3} parent=5 // pred_check_branch
        %328 = sbr.rel (%p325) target = $region12
      $region11: #{res_mpnn_forward.3} parent=5 // pred_region
        %s329 = ssub.s32 %s17, 1
        // Predicated region
        $region13: #{res_mpnn_forward.3} parent=11 // pred_check
          %p330 = pneg %p184
        $region14: #{res_mpnn_forward.3} parent=11 // pred_check_branch
          %332 = sbr.rel (%p330) target = $region16
        $region15: #{res_mpnn_forward.3} parent=11 // pred_region
          _
        $region16: #{res_mpnn_forward.3} parent=11 // pred_fallthru
          _
        // Predicated region
        $region17: #{res_mpnn_forward.3} parent=11 // pred_check
          %p333 = pneg %p205
        $region18: #{res_mpnn_forward.3} parent=11 // pred_check_branch
          %335 = sbr.rel (%p333) target = $region20
        $region19: #{res_mpnn_forward.3} parent=11 // pred_region
          _
        $region20: #{res_mpnn_forward.3} parent=11 // pred_fallthru
          _
        // Predicated region
        $region21: #{res_mpnn_forward.3} parent=11 // pred_check
          %p336 = pneg %p226
        $region22: #{res_mpnn_forward.3} parent=11 // pred_check_branch
          %338 = sbr.rel (%p336) target = $region24
        $region23: #{res_mpnn_forward.3} parent=11 // pred_region
          _
        $region24: #{res_mpnn_forward.3} parent=11 // pred_fallthru
          _
        // Predicated region
        $region25: #{res_mpnn_forward.3} parent=11 // pred_check
          %p339 = pneg %p247
        $region26: #{res_mpnn_forward.3} parent=11 // pred_check_branch
          %341 = sbr.rel (%p339) target = $region28
        $region27: #{res_mpnn_forward.3} parent=11 // pred_region
          _
        $region28: #{res_mpnn_forward.3} parent=11 // pred_fallthru
          _
        // Predicated region
        $region29: #{res_mpnn_forward.3} parent=11 // pred_check
          %p342 = pneg %p268
        $region30: #{res_mpnn_forward.3} parent=11 // pred_check_branch
          %344 = sbr.rel (%p342) target = $region32
        $region31: #{res_mpnn_forward.3} parent=11 // pred_region
          _
        $region32: #{res_mpnn_forward.3} parent=11 // pred_fallthru
          _
        // Predicated region
        $region33: #{res_mpnn_forward.3} parent=11 // pred_check
          %p345 = pneg %p289
        $region34: #{res_mpnn_forward.3} parent=11 // pred_check_branch
          %347 = sbr.rel (%p345) target = $region36
        $region35: #{res_mpnn_forward.3} parent=11 // pred_region
          _
        $region36: #{res_mpnn_forward.3} parent=11 // pred_fallthru
          _
      $region12: #{res_mpnn_forward.3} parent=5 // pred_fallthru
        _
      %p348 = scmp.lt.s32.totalorder %s17, 8
      // Predicated region
      $region37: #{res_mpnn_forward.3} parent=5 // pred_check
        %p349 = pneg %p348
      $region38: #{res_mpnn_forward.3} parent=5 // pred_check_branch
        %351 = sbr.rel (%p349) target = $region40
      $region39: #{res_mpnn_forward.3} parent=5 // pred_region
        // Predicated region
        $region41: #{res_mpnn_forward.3} parent=39 // pred_check
          %p352 = pneg %p49
        $region42: #{res_mpnn_forward.3} parent=39 // pred_check_branch
          %354 = sbr.rel (%p352) target = $region44
        $region43: #{res_mpnn_forward.3} parent=39 // pred_region
          %p355 = scmp.lt.s32.totalorder %s24, 1
          %s356 = scalar_select %p355, %s24, 1
          %s357 = smul.addr %s356, 8
          %s358 = scalar_lea.vmem %s0, %s357
        $region44: #{res_mpnn_forward.3} parent=39 // pred_fallthru
          _
        // Predicated region
        $region45: #{res_mpnn_forward.3} parent=39 // pred_check
          %p359 = pneg %p75
        $region46: #{res_mpnn_forward.3} parent=39 // pred_check_branch
          %361 = sbr.rel (%p359) target = $region48
        $region47: #{res_mpnn_forward.3} parent=39 // pred_region
          %p362 = scmp.lt.s32.totalorder %s24, 1
          %s363 = scalar_select %p362, %s24, 1
          %s364 = smul.addr %s363, 8
          %s365 = scalar_lea.vmem %s1, %s364
        $region48: #{res_mpnn_forward.3} parent=39 // pred_fallthru
          _
        // Predicated region
        $region49: #{res_mpnn_forward.3} parent=39 // pred_check
          %p366 = pneg %p101
        $region50: #{res_mpnn_forward.3} parent=39 // pred_check_branch
          %368 = sbr.rel (%p366) target = $region52
        $region51: #{res_mpnn_forward.3} parent=39 // pred_region
          %p369 = scmp.lt.s32.totalorder %s24, 1
          %s370 = scalar_select %p369, %s24, 1
          %s371 = smul.addr %s370, 8
          %s372 = scalar_lea.vmem %s2, %s371
        $region52: #{res_mpnn_forward.3} parent=39 // pred_fallthru
          _
        // Predicated region
        $region53: #{res_mpnn_forward.3} parent=39 // pred_check
          %p373 = pneg %p129
        $region54: #{res_mpnn_forward.3} parent=39 // pred_check_branch
          %375 = sbr.rel (%p373) target = $region56
        $region55: #{res_mpnn_forward.3} parent=39 // pred_region
          %s376 = sand.u32 %s119, 1
          %s377 = sand.u32 %s119, 1
          %s378 = smul.addr %s377, 8
          %s379 = scalar_lea.vmem [#allocation5], %s378
          %s380 = smul.u32 8, %s24
          %s381 = smul.addr %s380, 4
          %s382 = sadd.s32 %s25, %s381
          %s383 = scalar_lea.vmem %s3, %s382
          // Predicated region
          $region57: #{res_mpnn_forward.3} parent=55 // pred_check
            _
          $region58: #{res_mpnn_forward.3} parent=55 // pred_check_branch
            %385 = sbr.rel (0) target = $region60
          $region59: #{res_mpnn_forward.3} parent=55 // pred_region
            // Predicated region
            $region61: #{res_mpnn_forward.3} parent=59 // pred_check
              _
            $region62: #{res_mpnn_forward.3} parent=59 // pred_check_branch
              %387 = sbr.rel target = $region64
            $region63: #{res_mpnn_forward.3} parent=59 // pred_region
              // Predicated region
              $region76: #{res_mpnn_forward.3} parent=63 // pred_check
                _
              $region77: #{res_mpnn_forward.3} parent=63 // pred_check_branch
                %416 = sbr.rel (0) target = $region79
              $region78: #{res_mpnn_forward.3} parent=63 // pred_region
                loop: start=0, step=1, limit=1
                $region80: #{res_mpnn_forward.3} parent=78 // loop_pre_header
                  _
                $region81: #{res_mpnn_forward.3} parent=78 // loop_header
                  %s418 = sphi 0, %s422
                  %p419 = scmp.ge.s32.totalorder %s418, 1
                  %s423 = sphi %s383, %s383
                  %s424 = sphi %s379, %s379
                $region82: #{res_mpnn_forward.3} parent=78 // loop_header_branch
                  %421 = sbr.rel (%p419) target = $region86
                $region83: #{res_mpnn_forward.3} parent=78 // loop_body
                  _
                $region84: #{res_mpnn_forward.3} parent=78 // loop_footer
                  %s422 = sadd.s32 1, %s418
                $region85: #{res_mpnn_forward.3} parent=78 // loop_footer_branch
                  %417 = sbr.rel target = $region81
                $region86: #{res_mpnn_forward.3} parent=78 // loop_exit
                  _
                loop: start=0, step=1, limit=1
                $region87: #{res_mpnn_forward.3} parent=78 // loop_pre_header
                  _
                $region88: #{res_mpnn_forward.3} parent=78 // loop_header
                  %s427 = sphi 0, %s431
                  %p428 = scmp.ge.s32.totalorder %s427, 1
                  %s432 = sphi %s383, %s383
                  %s433 = sphi %s379, %s379
                $region89: #{res_mpnn_forward.3} parent=78 // loop_header_branch
                  %430 = sbr.rel (%p428) target = $region93
                $region90: #{res_mpnn_forward.3} parent=78 // loop_body
                  %v434 = vld [vmem:[%s432] sm:$0x1]
                  %435 = vst [vmem:[%s433] sm:$0x1] %v434
                  %v436 = vld [vmem:[%s432 + $0x4] sm:$0x1]
                  %437 = vst [vmem:[%s433 + $0x1] sm:$0x1] %v436
                  %v438 = vld [vmem:[%s432 + $0x8] sm:$0x1]
                  %439 = vst [vmem:[%s433 + $0x2] sm:$0x1] %v438
                  %v440 = vld [vmem:[%s432 + $0xc] sm:$0x1]
                  %441 = vst [vmem:[%s433 + $0x3] sm:$0x1] %v440
                  %v442 = vld [vmem:[%s432 + $0x10] sm:$0x1]
                  %443 = vst [vmem:[%s433 + $0x4] sm:$0x1] %v442
                  %v444 = vld [vmem:[%s432 + $0x14] sm:$0x1]
                  %445 = vst [vmem:[%s433 + $0x5] sm:$0x1] %v444
                  %v446 = vld [vmem:[%s432 + $0x18] sm:$0x1]
                  %447 = vst [vmem:[%s433 + $0x6] sm:$0x1] %v446
                  %v448 = vld [vmem:[%s432 + $0x1c] sm:$0x1]
                  %449 = vst [vmem:[%s433 + $0x7] sm:$0x1] %v448
                $region91: #{res_mpnn_forward.3} parent=78 // loop_footer
                  %s431 = sadd.s32 1, %s427
                $region92: #{res_mpnn_forward.3} parent=78 // loop_footer_branch
                  %426 = sbr.rel target = $region88
                $region93: #{res_mpnn_forward.3} parent=78 // loop_exit
                  _
              $region79: #{res_mpnn_forward.3} parent=63 // pred_fallthru
                _
            $region64: #{res_mpnn_forward.3} parent=59 // pred_fallthru
              _
            // Predicated region
            $region65: #{res_mpnn_forward.3} parent=59 // pred_check
              _
            $region66: #{res_mpnn_forward.3} parent=59 // pred_check_branch
              %389 = sbr.rel (0) target = $region68
            $region67: #{res_mpnn_forward.3} parent=59 // pred_region
              loop: start=0, step=1, limit=1
              $region69: #{res_mpnn_forward.3} parent=67 // loop_pre_header
                _
              $region70: #{res_mpnn_forward.3} parent=67 // loop_header
                %s392 = sphi 0, %s396
                %p393 = scmp.ge.s32.totalorder %s392, 1
                %s397 = sphi %s383, %s383
                %s398 = sphi %s379, %s379
              $region71: #{res_mpnn_forward.3} parent=67 // loop_header_branch
                %395 = sbr.rel (%p393) target = $region75
              $region72: #{res_mpnn_forward.3} parent=67 // loop_body
                %v399 = vld [vmem:[%s397] sm:$0x1]
                %400 = vst [vmem:[%s398] sm:$0x1] %v399
                %v401 = vld [vmem:[%s397 + $0x4] sm:$0x1]
                %402 = vst [vmem:[%s398 + $0x1] sm:$0x1] %v401
                %v403 = vld [vmem:[%s397 + $0x8] sm:$0x1]
                %404 = vst [vmem:[%s398 + $0x2] sm:$0x1] %v403
                %v405 = vld [vmem:[%s397 + $0xc] sm:$0x1]
                %406 = vst [vmem:[%s398 + $0x3] sm:$0x1] %v405
                %v407 = vld [vmem:[%s397 + $0x10] sm:$0x1]
                %408 = vst [vmem:[%s398 + $0x4] sm:$0x1] %v407
                %v409 = vld [vmem:[%s397 + $0x14] sm:$0x1]
                %410 = vst [vmem:[%s398 + $0x5] sm:$0x1] %v409
                %v411 = vld [vmem:[%s397 + $0x18] sm:$0x1]
                %412 = vst [vmem:[%s398 + $0x6] sm:$0x1] %v411
                %v413 = vld [vmem:[%s397 + $0x1c] sm:$0x1]
                %414 = vst [vmem:[%s398 + $0x7] sm:$0x1] %v413
              $region73: #{res_mpnn_forward.3} parent=67 // loop_footer
                %s396 = sadd.s32 1, %s392
              $region74: #{res_mpnn_forward.3} parent=67 // loop_footer_branch
                %391 = sbr.rel target = $region70
              $region75: #{res_mpnn_forward.3} parent=67 // loop_exit
                _
            $region68: #{res_mpnn_forward.3} parent=59 // pred_fallthru
              _
          $region60: #{res_mpnn_forward.3} parent=55 // pred_fallthru
            _
          %450 = vnop
        $region56: #{res_mpnn_forward.3} parent=39 // pred_fallthru
          _
        // Predicated region
        $region94: #{res_mpnn_forward.3} parent=39 // pred_check
          %p451 = pneg %p157
        $region95: #{res_mpnn_forward.3} parent=39 // pred_check_branch
          %453 = sbr.rel (%p451) target = $region97
        $region96: #{res_mpnn_forward.3} parent=39 // pred_region
          %s454 = sand.u32 %s147, 1
          %s455 = sand.u32 %s147, 1
          %s456 = smul.addr %s455, 8
          %s457 = scalar_lea.vmem [#allocation6], %s456
          %s458 = smul.u32 8, %s24
          %s459 = smul.addr %s458, 4
          %s460 = sadd.s32 %s25, %s459
          %s461 = scalar_lea.vmem %s4, %s460
          // Predicated region
          $region98: #{res_mpnn_forward.3} parent=96 // pred_check
            _
          $region99: #{res_mpnn_forward.3} parent=96 // pred_check_branch
            %463 = sbr.rel (0) target = $region101
          $region100: #{res_mpnn_forward.3} parent=96 // pred_region
            // Predicated region
            $region102: #{res_mpnn_forward.3} parent=100 // pred_check
              _
            $region103: #{res_mpnn_forward.3} parent=100 // pred_check_branch
              %465 = sbr.rel target = $region105
            $region104: #{res_mpnn_forward.3} parent=100 // pred_region
              // Predicated region
              $region117: #{res_mpnn_forward.3} parent=104 // pred_check
                _
              $region118: #{res_mpnn_forward.3} parent=104 // pred_check_branch
                %494 = sbr.rel (0) target = $region120
              $region119: #{res_mpnn_forward.3} parent=104 // pred_region
                loop: start=0, step=1, limit=1
                $region121: #{res_mpnn_forward.3} parent=119 // loop_pre_header
                  _
                $region122: #{res_mpnn_forward.3} parent=119 // loop_header
                  %s496 = sphi 0, %s500
                  %p497 = scmp.ge.s32.totalorder %s496, 1
                  %s501 = sphi %s461, %s461
                  %s502 = sphi %s457, %s457
                $region123: #{res_mpnn_forward.3} parent=119 // loop_header_branch
                  %499 = sbr.rel (%p497) target = $region127
                $region124: #{res_mpnn_forward.3} parent=119 // loop_body
                  _
                $region125: #{res_mpnn_forward.3} parent=119 // loop_footer
                  %s500 = sadd.s32 1, %s496
                $region126: #{res_mpnn_forward.3} parent=119 // loop_footer_branch
                  %495 = sbr.rel target = $region122
                $region127: #{res_mpnn_forward.3} parent=119 // loop_exit
                  _
                loop: start=0, step=1, limit=1
                $region128: #{res_mpnn_forward.3} parent=119 // loop_pre_header
                  _
                $region129: #{res_mpnn_forward.3} parent=119 // loop_header
                  %s505 = sphi 0, %s509
                  %p506 = scmp.ge.s32.totalorder %s505, 1
                  %s510 = sphi %s461, %s461
                  %s511 = sphi %s457, %s457
                $region130: #{res_mpnn_forward.3} parent=119 // loop_header_branch
                  %508 = sbr.rel (%p506) target = $region134
                $region131: #{res_mpnn_forward.3} parent=119 // loop_body
                  %v512 = vld [vmem:[%s510] sm:$0x1]
                  %513 = vst [vmem:[%s511] sm:$0x1] %v512
                  %v514 = vld [vmem:[%s510 + $0x4] sm:$0x1]
                  %515 = vst [vmem:[%s511 + $0x1] sm:$0x1] %v514
                  %v516 = vld [vmem:[%s510 + $0x8] sm:$0x1]
                  %517 = vst [vmem:[%s511 + $0x2] sm:$0x1] %v516
                  %v518 = vld [vmem:[%s510 + $0xc] sm:$0x1]
                  %519 = vst [vmem:[%s511 + $0x3] sm:$0x1] %v518
                  %v520 = vld [vmem:[%s510 + $0x10] sm:$0x1]
                  %521 = vst [vmem:[%s511 + $0x4] sm:$0x1] %v520
                  %v522 = vld [vmem:[%s510 + $0x14] sm:$0x1]
                  %523 = vst [vmem:[%s511 + $0x5] sm:$0x1] %v522
                  %v524 = vld [vmem:[%s510 + $0x18] sm:$0x1]
                  %525 = vst [vmem:[%s511 + $0x6] sm:$0x1] %v524
                  %v526 = vld [vmem:[%s510 + $0x1c] sm:$0x1]
                  %527 = vst [vmem:[%s511 + $0x7] sm:$0x1] %v526
                $region132: #{res_mpnn_forward.3} parent=119 // loop_footer
                  %s509 = sadd.s32 1, %s505
                $region133: #{res_mpnn_forward.3} parent=119 // loop_footer_branch
                  %504 = sbr.rel target = $region129
                $region134: #{res_mpnn_forward.3} parent=119 // loop_exit
                  _
              $region120: #{res_mpnn_forward.3} parent=104 // pred_fallthru
                _
            $region105: #{res_mpnn_forward.3} parent=100 // pred_fallthru
              _
            // Predicated region
            $region106: #{res_mpnn_forward.3} parent=100 // pred_check
              _
            $region107: #{res_mpnn_forward.3} parent=100 // pred_check_branch
              %467 = sbr.rel (0) target = $region109
            $region108: #{res_mpnn_forward.3} parent=100 // pred_region
              loop: start=0, step=1, limit=1
              $region110: #{res_mpnn_forward.3} parent=108 // loop_pre_header
                _
              $region111: #{res_mpnn_forward.3} parent=108 // loop_header
                %s470 = sphi 0, %s474
                %p471 = scmp.ge.s32.totalorder %s470, 1
                %s475 = sphi %s461, %s461
                %s476 = sphi %s457, %s457
              $region112: #{res_mpnn_forward.3} parent=108 // loop_header_branch
                %473 = sbr.rel (%p471) target = $region116
              $region113: #{res_mpnn_forward.3} parent=108 // loop_body
                %v477 = vld [vmem:[%s475] sm:$0x1]
                %478 = vst [vmem:[%s476] sm:$0x1] %v477
                %v479 = vld [vmem:[%s475 + $0x4] sm:$0x1]
                %480 = vst [vmem:[%s476 + $0x1] sm:$0x1] %v479
                %v481 = vld [vmem:[%s475 + $0x8] sm:$0x1]
                %482 = vst [vmem:[%s476 + $0x2] sm:$0x1] %v481
                %v483 = vld [vmem:[%s475 + $0xc] sm:$0x1]
                %484 = vst [vmem:[%s476 + $0x3] sm:$0x1] %v483
                %v485 = vld [vmem:[%s475 + $0x10] sm:$0x1]
                %486 = vst [vmem:[%s476 + $0x4] sm:$0x1] %v485
                %v487 = vld [vmem:[%s475 + $0x14] sm:$0x1]
                %488 = vst [vmem:[%s476 + $0x5] sm:$0x1] %v487
                %v489 = vld [vmem:[%s475 + $0x18] sm:$0x1]
                %490 = vst [vmem:[%s476 + $0x6] sm:$0x1] %v489
                %v491 = vld [vmem:[%s475 + $0x1c] sm:$0x1]
                %492 = vst [vmem:[%s476 + $0x7] sm:$0x1] %v491
              $region114: #{res_mpnn_forward.3} parent=108 // loop_footer
                %s474 = sadd.s32 1, %s470
              $region115: #{res_mpnn_forward.3} parent=108 // loop_footer_branch
                %469 = sbr.rel target = $region111
              $region116: #{res_mpnn_forward.3} parent=108 // loop_exit
                _
            $region109: #{res_mpnn_forward.3} parent=100 // pred_fallthru
              _
          $region101: #{res_mpnn_forward.3} parent=96 // pred_fallthru
            _
          %528 = vnop
        $region97: #{res_mpnn_forward.3} parent=39 // pred_fallthru
          _
      $region40: #{res_mpnn_forward.3} parent=5 // pred_fallthru
        _
      %p529 = scmp.le.s32.totalorder 1, %s17
      %p530 = scmp.lt.s32.totalorder %s17, 9
      %p531 = pnand %p529, %p530
      %p532 = pneg %p531
      // Predicated region
      $region135: #{res_mpnn_forward.3} parent=5 // pred_check
        _
      $region136: #{res_mpnn_forward.3} parent=5 // pred_check_branch
        %534 = sbr.rel (%p531) target = $region138
      $region137: #{res_mpnn_forward.3} parent=5 // pred_region
        %s535 = ssub.s32 %s17, 1
        %s536 = sand.u32 %s122, 1
        %s537 = sand.u32 %s122, 1
        %s538 = smul.addr %s537, 8
        %s539 = scalar_lea.vmem [#allocation5], %s538
        // Predicated region
        $region139: #{res_mpnn_forward.3} parent=137 // pred_check
          %p540 = pneg %p135
        $region140: #{res_mpnn_forward.3} parent=137 // pred_check_branch
          %542 = sbr.rel (%p540) target = $region142
        $region141: #{res_mpnn_forward.3} parent=137 // pred_region
          _
        $region142: #{res_mpnn_forward.3} parent=137 // pred_fallthru
          _
        %s543 = sand.u32 %s150, 1
        %s544 = sand.u32 %s150, 1
        %s545 = smul.addr %s544, 8
        %s546 = scalar_lea.vmem [#allocation6], %s545
        // Predicated region
        $region143: #{res_mpnn_forward.3} parent=137 // pred_check
          %p547 = pneg %p163
        $region144: #{res_mpnn_forward.3} parent=137 // pred_check_branch
          %549 = sbr.rel (%p547) target = $region146
        $region145: #{res_mpnn_forward.3} parent=137 // pred_region
          _
        $region146: #{res_mpnn_forward.3} parent=137 // pred_fallthru
          _
        %p550 = scmp.lt.s32.totalorder %s26, 1
        %s551 = scalar_select %p550, %s26, 1
        %s552 = smul.addr %s551, 8
        %s553 = scalar_lea.vmem %s0, %s552
        %p554 = pneg %p55
        %p555 = pneg %p52
        %p556 = scmp.lt.s32.totalorder %s26, 1
        %s557 = scalar_select %p556, %s26, 1
        %s558 = smul.addr %s557, 8
        %s559 = scalar_lea.vmem %s1, %s558
        %p560 = pneg %p81
        %p561 = pneg %p78
        %p562 = scmp.lt.s32.totalorder %s26, 1
        %s563 = scalar_select %p562, %s26, 1
        %s564 = smul.addr %s563, 8
        %s565 = scalar_lea.vmem %s2, %s564
        %p566 = pneg %p107
        %p567 = pneg %p104
        %s568 = sand.u32 %s122, 1
        %s569 = sand.u32 %s122, 1
        %s570 = smul.addr %s569, 8
        %s571 = scalar_lea.vmem [#allocation5], %s570
        %p572 = pneg %p135
        %p573 = pneg %p132
        %s574 = sand.u32 %s150, 1
        %s575 = sand.u32 %s150, 1
        %s576 = smul.addr %s575, 8
        %s577 = scalar_lea.vmem [#allocation6], %s576
        %p578 = pneg %p163
        %p579 = pneg %p160
        %p580 = pneg %p184
        %p581 = pneg %p181
        %p582 = pneg %p205
        %p583 = pneg %p202
        %p584 = pneg %p226
        %p585 = pneg %p223
        %p586 = pneg %p247
        %p587 = pneg %p244
        %p588 = pneg %p268
        %p589 = pneg %p265
        %p590 = pneg %p289
        %p591 = pneg %p286
        %p592 = pneg %p315
        %p593 = pneg %p312
        %p594 = scmp.lt.s32.totalorder %s26, 1
        %s595 = scalar_select %p594, %s26, 1
        %s596 = smul.addr %s595, 8
        %s597 = scalar_lea.vmem %s11, %s596
        %p598 = scmp.lt.s32.totalorder %s26, 1
        %s599 = scalar_select %p598, %s26, 1
        %s600 = smul.addr %s599, 8
        %s601 = scalar_lea.vmem %s0, %s600
        %p602 = scmp.lt.s32.totalorder %s26, 1
        %s603 = scalar_select %p602, %s26, 1
        %s604 = smul.addr %s603, 8
        %s605 = scalar_lea.vmem %s1, %s604
        %p606 = scmp.lt.s32.totalorder %s26, 1
        %s607 = scalar_select %p606, %s26, 1
        %s608 = smul.addr %s607, 8
        %s609 = scalar_lea.vmem %s2, %s608
        %s610 = smul.u32 8, %s26
        %s611 = smul.u32 8, %s26
        %p612 = scmp.lt.s32.totalorder %s26, 1
        %s613 = scalar_select %p612, %s26, 1
        %s614 = smul.addr %s613, 8
        %s615 = scalar_lea.vmem %s11, %s614
        %p616 = scmp.eq.s32.totalorder %s27, 0
        // Predicated region
        $region147: #{res_mpnn_forward.3} parent=137 // pred_check
          %p617 = pneg %p616
        $region148: #{res_mpnn_forward.3} parent=137 // pred_check_branch
          %619 = sbr.rel (%p617) target = $region150
        $region149: #{res_mpnn_forward.3} parent=137 // pred_region
          %v620 = vld [vmem:[%s601] sm:$0xff]
          %v621 = vld [vmem:[%s605] sm:$0xff]
          %623 = vset.pattern.permute.xlu0 0
          %624 = vperm.xlu0 %623, %v621
          %v625 = vpop.permute.xlu0 %624
          %v627 = vmul.f32 %v620, %v625
          %v628 = vld [vmem:[%s5] sm:$0xff]
          %v629 = vld [vmem:[%s5 + $0x8] sm:$0xff]
          %v630 = vld [vmem:[%s5 + $0x10] sm:$0xff]
          %v631 = vld [vmem:[%s5 + $0x18] sm:$0xff]
          %v632 = vld [vmem:[%s8] sm:$0x1]
          %v634 = vlaneseq
          %v635 = vshrl.u32 %v634, 7
          %v636 = vsub.s32 0, %v635
          %v637 = vrot.slane %v632, %v636
          %vm639 = vcmask 261120
          %v641 = vsel %vm639, %v627, 0
          %643 = vmatprep.subr.mxu0 0.0
          %644 = vmatpush1.msra.mxu0 %v628
          %645 = vmatprep.subr.mxu0 0.0
          %646 = vmatpush1.msra.mxu0 %v629
          %647 = vmatprep.subr.mxu0 0.0
          %648 = vmatpush1.msra.mxu0 %v630
          %649 = vmatprep.subr.mxu0 0.0
          %650 = vmatpush1.msra.mxu0 %v631
          %651 = vmatprep.subr.mxu0 0.0
          %652 = vmatpush1.msra.mxu0 0.0
          %653 = vmatprep.subr.mxu0 0.0
          %654 = vmatpush1.msra.mxu0 0.0
          %655 = vmatprep.subr.mxu0 0.0
          %656 = vmatpush1.msra.mxu0 0.0
          %657 = vmatprep.subr.mxu0 0.0
          %658 = vmatpush1.msra.mxu0 0.0
          %659 = vmatprep.subr.mxu0 0.0
          %660 = vmatpush1.msra.mxu0 0.0
          %661 = vmatprep.subr.mxu0 0.0
          %662 = vmatpush1.msra.mxu0 0.0
          %663 = vmatprep.subr.mxu0 0.0
          %664 = vmatpush1.msra.mxu0 0.0
          %665 = vmatprep.subr.mxu0 0.0
          %666 = vmatpush1.msra.mxu0 0.0
          %667 = vmatprep.subr.mxu0 0.0
          %668 = vmatpush1.msra.mxu0 0.0
          %669 = vmatprep.subr.mxu0 0.0
          %670 = vmatpush1.msra.mxu0 0.0
          %671 = vmatprep.subr.mxu0 0.0
          %672 = vmatpush1.msra.mxu0 0.0
          %673 = vmatprep.subr.mxu0 0.0
          %674 = vmatpush1.msra.mxu0 0.0
          %675 = vmatprep.subr.mxu0 0.0
          %676 = vmatpush1.msra.mxu0 0.0
          %677 = vmatprep.subr.mxu0 0.0
          %678 = vmatpush1.msra.mxu0 0.0
          %679 = vmatprep.subr.mxu0 0.0
          %680 = vmatpush1.msra.mxu0 0.0
          %681 = vmatprep.subr.mxu0 0.0
          %682 = vmatpush1.msra.mxu0 0.0
          %683 = vmatprep.subr.mxu0 0.0
          %684 = vmatpush1.msra.mxu0 0.0
          %685 = vmatprep.subr.mxu0 0.0
          %686 = vmatpush1.msra.mxu0 0.0
          %687 = vmatprep.subr.mxu0 0.0
          %688 = vmatpush1.msra.mxu0 0.0
          %689 = vmatprep.subr.mxu0 0.0
          %690 = vmatpush1.msra.mxu0 0.0
          %691 = vmatprep.subr.mxu0 0.0
          %692 = vmatpush1.msra.mxu0 0.0
          %693 = vmatprep.subr.mxu0 0.0
          %694 = vmatpush1.msra.mxu0 0.0
          %695 = vmatprep.subr.mxu0 0.0
          %696 = vmatpush1.msra.mxu0 0.0
          %697 = vmatprep.subr.mxu0 0.0
          %698 = vmatpush1.msra.mxu0 0.0
          %699 = vmatprep.subr.mxu0 0.0
          %700 = vmatpush1.msra.mxu0 0.0
          %701 = vmatprep.subr.mxu0 0.0
          %702 = vmatpush1.msra.mxu0 0.0
          %703 = vmatprep.subr.mxu0 0.0
          %704 = vmatpush1.msra.mxu0 0.0
          %705 = vmatprep.subr.mxu0 0.0
          %706 = vmatpush1.msra.mxu0 0.0
          %707 = vmatprep.mubr.f32.mxu0 0.0
          %708 = vmatmul.mubr.f32.gmra.mrb[0].mxu0 %v641
          %v709 = vpop.f32.mrb[0].mxu0
          %v710 = vadd.f32 %v637, %v709
          %v711 = vpop.f32.mrb[0].mxu0
          %712 = vdwg.mxu0
          %713 = vst.msk [vmem:[#allocation2] sm:$0xff] %vm639, %v710
          %714 = vst.msk [vmem:[#allocation3] sm:$0xff] %vm639, 0.0
          %v715 = vld [vmem:[%s609] sm:$0xff]
          %vm716 = vcmask 31744
          %v717 = vsel %vm716, %v715, 0.0
          %718 = vadd.xlane.f32.xlu0 %v717
          %v719 = vpop.xlane.xlu0 %718
          %v720 = vmax.f32 %v719, 1.0
          %vm721 = vcmask 7168
          %722 = vst.msk [vmem:[#allocation4] sm:$0xff] %vm721, %v720
        $region150: #{res_mpnn_forward.3} parent=137 // pred_fallthru
          _
        %v723 = vlaneseq
        %v724 = vand.u32 %v723, 127
        %v725 = vstv %s27
        %vm726 = vcmp.eq.s32.totalorder %v724, %v725
        %v727 = vld [vmem:[%s609] sm:$0xff]
        %v728 = vsel %vm726, %v727, 0.0
        %vm729 = vcmask 31744
        %v730 = vsel %vm729, %v728, 0.0
        %731 = vadd.xlane.f32.xlu0 %v730
        %v732 = vpop.xlane.xlu0 %731
        %v733 = vld [vmem:[%s539] sm:$0x1]
        %v734 = vld [vmem:[%s539 + $0x1] sm:$0x1]
        %v735 = vld [vmem:[%s539 + $0x2] sm:$0x1]
        %v736 = vld [vmem:[%s539 + $0x3] sm:$0x1]
        %v737 = vld [vmem:[%s539 + $0x4] sm:$0x1]
        %v738 = vld [vmem:[%s539 + $0x5] sm:$0x1]
        %v739 = vld [vmem:[%s539 + $0x6] sm:$0x1]
        %v740 = vld [vmem:[%s539 + $0x7] sm:$0x1]
        %v741 = vld [vmem:[%s546] sm:$0x1]
        %v742 = vld [vmem:[%s546 + $0x1] sm:$0x1]
        %v743 = vld [vmem:[%s546 + $0x2] sm:$0x1]
        %v744 = vld [vmem:[%s546 + $0x3] sm:$0x1]
        %v745 = vld [vmem:[%s546 + $0x4] sm:$0x1]
        %v746 = vld [vmem:[%s546 + $0x5] sm:$0x1]
        %v747 = vld [vmem:[%s546 + $0x6] sm:$0x1]
        %v748 = vld [vmem:[%s546 + $0x7] sm:$0x1]
        %v749 = vld [vmem:[#allocation2] sm:$0xff]
        %v750 = vld [vmem:[%s6] sm:$0xff]
        %v751 = vld [vmem:[%s6 + $0x8] sm:$0xff]
        %v752 = vld [vmem:[%s6 + $0x10] sm:$0xff]
        %v753 = vld [vmem:[%s6 + $0x18] sm:$0xff]
        %v762 = vcombine.low %v733, %v734
        %v763 = vcombine.low %v735, %v736
        %v764 = vcombine.low %v737, %v738
        %v765 = vcombine.low %v739, %v740
        %v767 = vunpack.c.l.s4 1966171168
        %v768 = vunpack.c.0.s8 %v767
        %v769 = vlaneseq
        %v770 = vshrl.u32 %v769, 7
        %v771 = vsub.s32 %v768, %v770
        %v772 = vrot.slane %v762, %v771
        %v774 = vunpack.c.l.s4 1966171168
        %v775 = vunpack.c.0.s8 %v774
        %v776 = vlaneseq
        %v777 = vshrl.u32 %v776, 7
        %v778 = vsub.s32 %v775, %v777
        %v779 = vrot.slane %v763, %v778
        %v781 = vunpack.c.l.s4 1966171168
        %v782 = vunpack.c.0.s8 %v781
        %v783 = vlaneseq
        %v784 = vshrl.u32 %v783, 7
        %v785 = vsub.s32 %v782, %v784
        %v786 = vrot.slane %v764, %v785
        %v788 = vunpack.c.l.s4 1966171168
        %v789 = vunpack.c.0.s8 %v788
        %v790 = vlaneseq
        %v791 = vshrl.u32 %v790, 7
        %v792 = vsub.s32 %v789, %v791
        %v793 = vrot.slane %v765, %v792
        %v794 = vcombine.low %v772, %v779
        %v795 = vcombine.low %v786, %v793
        %v797 = vunpack.c.l.s4 1966171168
        %v798 = vunpack.c.0.s8 %v797
        %v799 = vlaneseq
        %v800 = vshrl.u32 %v799, 7
        %v801 = vsub.s32 %v798, %v800
        %v802 = vrot.slane %v794, %v801
        %v804 = vunpack.c.l.s4 1966171168
        %v805 = vunpack.c.0.s8 %v804
        %v806 = vlaneseq
        %v807 = vshrl.u32 %v806, 7
        %v808 = vsub.s32 %v805, %v807
        %v809 = vrot.slane %v795, %v808
        %v810 = vcombine.low %v802, %v809
        %vm811 = vcmask 261120
        %v812 = vsel %vm811, %v810, 0
        %814 = vmatprep.subr.mxu0 0.0
        %815 = vmatpush1.msra.mxu0 %v750
        %816 = vmatprep.subr.mxu0 0.0
        %817 = vmatpush1.msra.mxu0 %v751
        %818 = vmatprep.subr.mxu0 0.0
        %819 = vmatpush1.msra.mxu0 %v752
        %820 = vmatprep.subr.mxu0 0.0
        %821 = vmatpush1.msra.mxu0 %v753
        %822 = vmatprep.subr.mxu0 0.0
        %823 = vmatpush1.msra.mxu0 0.0
        %824 = vmatprep.subr.mxu0 0.0
        %825 = vmatpush1.msra.mxu0 0.0
        %826 = vmatprep.subr.mxu0 0.0
        %827 = vmatpush1.msra.mxu0 0.0
        %828 = vmatprep.subr.mxu0 0.0
        %829 = vmatpush1.msra.mxu0 0.0
        %830 = vmatprep.subr.mxu0 0.0
        %831 = vmatpush1.msra.mxu0 0.0
        %832 = vmatprep.subr.mxu0 0.0
        %833 = vmatpush1.msra.mxu0 0.0
        %834 = vmatprep.subr.mxu0 0.0
        %835 = vmatpush1.msra.mxu0 0.0
        %836 = vmatprep.subr.mxu0 0.0
        %837 = vmatpush1.msra.mxu0 0.0
        %838 = vmatprep.subr.mxu0 0.0
        %839 = vmatpush1.msra.mxu0 0.0
        %840 = vmatprep.subr.mxu0 0.0
        %841 = vmatpush1.msra.mxu0 0.0
        %842 = vmatprep.subr.mxu0 0.0
        %843 = vmatpush1.msra.mxu0 0.0
        %844 = vmatprep.subr.mxu0 0.0
        %845 = vmatpush1.msra.mxu0 0.0
        %846 = vmatprep.subr.mxu0 0.0
        %847 = vmatpush1.msra.mxu0 0.0
        %848 = vmatprep.subr.mxu0 0.0
        %849 = vmatpush1.msra.mxu0 0.0
        %850 = vmatprep.subr.mxu0 0.0
        %851 = vmatpush1.msra.mxu0 0.0
        %852 = vmatprep.subr.mxu0 0.0
        %853 = vmatpush1.msra.mxu0 0.0
        %854 = vmatprep.subr.mxu0 0.0
        %855 = vmatpush1.msra.mxu0 0.0
        %856 = vmatprep.subr.mxu0 0.0
        %857 = vmatpush1.msra.mxu0 0.0
        %858 = vmatprep.subr.mxu0 0.0
        %859 = vmatpush1.msra.mxu0 0.0
        %860 = vmatprep.subr.mxu0 0.0
        %861 = vmatpush1.msra.mxu0 0.0
        %862 = vmatprep.subr.mxu0 0.0
        %863 = vmatpush1.msra.mxu0 0.0
        %864 = vmatprep.subr.mxu0 0.0
        %865 = vmatpush1.msra.mxu0 0.0
        %866 = vmatprep.subr.mxu0 0.0
        %867 = vmatpush1.msra.mxu0 0.0
        %868 = vmatprep.subr.mxu0 0.0
        %869 = vmatpush1.msra.mxu0 0.0
        %870 = vmatprep.subr.mxu0 0.0
        %871 = vmatpush1.msra.mxu0 0.0
        %872 = vmatprep.subr.mxu0 0.0
        %873 = vmatpush1.msra.mxu0 0.0
        %874 = vmatprep.subr.mxu0 0.0
        %875 = vmatpush1.msra.mxu0 0.0
        %876 = vmatprep.subr.mxu0 0.0
        %877 = vmatpush1.msra.mxu0 0.0
        %878 = vmatprep.mubr.f32.mxu0 0.0
        %879 = vmatmul.mubr.f32.gmra.mrb[0].mxu0 %v812
        %v880 = vpop.f32.mrb[0].mxu0
        %v881 = vadd.f32 0.0, %v880
        %v882 = vpop.f32.mrb[0].mxu0
        %883 = vdwg.mxu0
        %v884 = vadd.f32 %v749, %v881
        %v885 = vld [vmem:[%s7] sm:$0xff]
        %v886 = vld [vmem:[%s7 + $0x8] sm:$0xff]
        %v895 = vcombine.low %v741, %v742
        %v896 = vcombine.low %v743, %v744
        %v897 = vcombine.low %v745, %v746
        %v898 = vcombine.low %v747, %v748
        %v900 = vunpack.c.l.s4 1966171168
        %v901 = vunpack.c.0.s8 %v900
        %v902 = vlaneseq
        %v903 = vshrl.u32 %v902, 7
        %v904 = vsub.s32 %v901, %v903
        %v905 = vrot.slane %v895, %v904
        %v907 = vunpack.c.l.s4 1966171168
        %v908 = vunpack.c.0.s8 %v907
        %v909 = vlaneseq
        %v910 = vshrl.u32 %v909, 7
        %v911 = vsub.s32 %v908, %v910
        %v912 = vrot.slane %v896, %v911
        %v914 = vunpack.c.l.s4 1966171168
        %v915 = vunpack.c.0.s8 %v914
        %v916 = vlaneseq
        %v917 = vshrl.u32 %v916, 7
        %v918 = vsub.s32 %v915, %v917
        %v919 = vrot.slane %v897, %v918
        %v921 = vunpack.c.l.s4 1966171168
        %v922 = vunpack.c.0.s8 %v921
        %v923 = vlaneseq
        %v924 = vshrl.u32 %v923, 7
        %v925 = vsub.s32 %v922, %v924
        %v926 = vrot.slane %v898, %v925
        %v927 = vcombine.low %v905, %v912
        %v928 = vcombine.low %v919, %v926
        %v930 = vunpack.c.l.s4 1966171168
        %v931 = vunpack.c.0.s8 %v930
        %v932 = vlaneseq
        %v933 = vshrl.u32 %v932, 7
        %v934 = vsub.s32 %v931, %v933
        %v935 = vrot.slane %v927, %v934
        %v937 = vunpack.c.l.s4 1966171168
        %v938 = vunpack.c.0.s8 %v937
        %v939 = vlaneseq
        %v940 = vshrl.u32 %v939, 7
        %v941 = vsub.s32 %v938, %v940
        %v942 = vrot.slane %v928, %v941
        %v943 = vcombine.low %v935, %v942
        %vm944 = vcmask 130048
        %v945 = vsel %vm944, %v943, 0
        %947 = vmatprep.subr.mxu0 0.0
        %948 = vmatpush1.msra.mxu0 %v885
        %949 = vmatprep.subr.mxu0 0.0
        %950 = vmatpush1.msra.mxu0 %v886
        %951 = vmatprep.subr.mxu0 0.0
        %952 = vmatpush1.msra.mxu0 0.0
        %953 = vmatprep.subr.mxu0 0.0
        %954 = vmatpush1.msra.mxu0 0.0
        %955 = vmatprep.subr.mxu0 0.0
        %956 = vmatpush1.msra.mxu0 0.0
        %957 = vmatprep.subr.mxu0 0.0
        %958 = vmatpush1.msra.mxu0 0.0
        %959 = vmatprep.subr.mxu0 0.0
        %960 = vmatpush1.msra.mxu0 0.0
        %961 = vmatprep.subr.mxu0 0.0
        %962 = vmatpush1.msra.mxu0 0.0
        %963 = vmatprep.subr.mxu0 0.0
        %964 = vmatpush1.msra.mxu0 0.0
        %965 = vmatprep.subr.mxu0 0.0
        %966 = vmatpush1.msra.mxu0 0.0
        %967 = vmatprep.subr.mxu0 0.0
        %968 = vmatpush1.msra.mxu0 0.0
        %969 = vmatprep.subr.mxu0 0.0
        %970 = vmatpush1.msra.mxu0 0.0
        %971 = vmatprep.subr.mxu0 0.0
        %972 = vmatpush1.msra.mxu0 0.0
        %973 = vmatprep.subr.mxu0 0.0
        %974 = vmatpush1.msra.mxu0 0.0
        %975 = vmatprep.subr.mxu0 0.0
        %976 = vmatpush1.msra.mxu0 0.0
        %977 = vmatprep.subr.mxu0 0.0
        %978 = vmatpush1.msra.mxu0 0.0
        %979 = vmatprep.subr.mxu0 0.0
        %980 = vmatpush1.msra.mxu0 0.0
        %981 = vmatprep.subr.mxu0 0.0
        %982 = vmatpush1.msra.mxu0 0.0
        %983 = vmatprep.subr.mxu0 0.0
        %984 = vmatpush1.msra.mxu0 0.0
        %985 = vmatprep.subr.mxu0 0.0
        %986 = vmatpush1.msra.mxu0 0.0
        %987 = vmatprep.subr.mxu0 0.0
        %988 = vmatpush1.msra.mxu0 0.0
        %989 = vmatprep.subr.mxu0 0.0
        %990 = vmatpush1.msra.mxu0 0.0
        %991 = vmatprep.subr.mxu0 0.0
        %992 = vmatpush1.msra.mxu0 0.0
        %993 = vmatprep.subr.mxu0 0.0
        %994 = vmatpush1.msra.mxu0 0.0
        %995 = vmatprep.subr.mxu0 0.0
        %996 = vmatpush1.msra.mxu0 0.0
        %997 = vmatprep.subr.mxu0 0.0
        %998 = vmatpush1.msra.mxu0 0.0
        %999 = vmatprep.subr.mxu0 0.0
        %1000 = vmatpush1.msra.mxu0 0.0
        %1001 = vmatprep.subr.mxu0 0.0
        %1002 = vmatpush1.msra.mxu0 0.0
        %1003 = vmatprep.subr.mxu0 0.0
        %1004 = vmatpush1.msra.mxu0 0.0
        %1005 = vmatprep.subr.mxu0 0.0
        %1006 = vmatpush1.msra.mxu0 0.0
        %1007 = vmatprep.subr.mxu0 0.0
        %1008 = vmatpush1.msra.mxu0 0.0
        %1009 = vmatprep.subr.mxu0 0.0
        %1010 = vmatpush1.msra.mxu0 0.0
        %1011 = vmatprep.mubr.f32.mxu0 0.0
        %1012 = vmatmul.mubr.f32.gmra.mrb[0].mxu0 %v945
        %v1013 = vpop.f32.mrb[0].mxu0
        %v1014 = vadd.f32 0.0, %v1013
        %v1015 = vpop.f32.mrb[0].mxu0
        %1016 = vdwg.mxu0
        %v1017 = vadd.f32 %v884, %v1014
        %v1018 = vmul.f32 %v1017, 0.5
        %v1019 = vmul.f32 %v1017, 0.70710677
        %vm1020 = vcmp.ge.f32.partialorder %v1019, 0.0
        %v1021 = vsel %vm1020, 1.0, -1.0
        %v1022 = vand.u32 2147483647, %v1019
        %v1023 = vmul.f32 %v1022, 0.3275911
        %v1024 = vadd.f32 %v1023, 1.0
        %v1025 = vrcp.pop %v1024
        %v1026 = vmul.f32 1.0, %v1025
        %v1027 = vmul.f32 %v1026, 1.0614054
        %v1028 = vadd.f32 %v1027, -1.4531521
        %v1029 = vmul.f32 %v1028, %v1026
        %v1030 = vadd.f32 %v1029, 1.4214138
        %v1031 = vmul.f32 %v1030, %v1026
        %v1032 = vadd.f32 %v1031, -0.28449672
        %v1033 = vmul.f32 %v1032, %v1026
        %v1034 = vadd.f32 %v1033, 0.2548296
        %v1035 = vmul.f32 %v1034, %v1026
        %v1036 = vsub.f32 0.0, %v1022
        %v1037 = vmul.f32 %v1036, %v1022
        %v1038 = vmul.f32 %v1037, 1.442695
        %v1039 = vpow.pop %v1038
        %v1040 = vmul.f32 %v1035, %v1039
        %v1041 = vsub.f32 1.0, %v1040
        %v1042 = vmul.f32 %v1021, %v1041
        %v1043 = vadd.f32 %v1042, 1.0
        %v1044 = vmul.f32 %v1018, %v1043
        %v1045 = vld [vmem:[%s9] sm:$0xff]
        %v1046 = vld [vmem:[%s9 + $0x8] sm:$0xff]
        %v1047 = vld [vmem:[%s9 + $0x10] sm:$0xff]
        %v1048 = vld [vmem:[%s9 + $0x18] sm:$0xff]
        %v1049 = vld [vmem:[%s10] sm:$0x1]
        %v1051 = vlaneseq
        %v1052 = vshrl.u32 %v1051, 7
        %v1053 = vsub.s32 0, %v1052
        %v1054 = vrot.slane %v1049, %v1053
        %v1057 = vsel %vm811, %v1044, 0
        %1059 = vmatprep.subr.mxu0 0.0
        %1060 = vmatpush1.msra.mxu0 %v1045
        %1061 = vmatprep.subr.mxu0 0.0
        %1062 = vmatpush1.msra.mxu0 %v1046
        %1063 = vmatprep.subr.mxu0 0.0
        %1064 = vmatpush1.msra.mxu0 %v1047
        %1065 = vmatprep.subr.mxu0 0.0
        %1066 = vmatpush1.msra.mxu0 %v1048
        %1067 = vmatprep.subr.mxu0 0.0
        %1068 = vmatpush1.msra.mxu0 0.0
        %1069 = vmatprep.subr.mxu0 0.0
        %1070 = vmatpush1.msra.mxu0 0.0
        %1071 = vmatprep.subr.mxu0 0.0
        %1072 = vmatpush1.msra.mxu0 0.0
        %1073 = vmatprep.subr.mxu0 0.0
        %1074 = vmatpush1.msra.mxu0 0.0
        %1075 = vmatprep.subr.mxu0 0.0
        %1076 = vmatpush1.msra.mxu0 0.0
        %1077 = vmatprep.subr.mxu0 0.0
        %1078 = vmatpush1.msra.mxu0 0.0
        %1079 = vmatprep.subr.mxu0 0.0
        %1080 = vmatpush1.msra.mxu0 0.0
        %1081 = vmatprep.subr.mxu0 0.0
        %1082 = vmatpush1.msra.mxu0 0.0
        %1083 = vmatprep.subr.mxu0 0.0
        %1084 = vmatpush1.msra.mxu0 0.0
        %1085 = vmatprep.subr.mxu0 0.0
        %1086 = vmatpush1.msra.mxu0 0.0
        %1087 = vmatprep.subr.mxu0 0.0
        %1088 = vmatpush1.msra.mxu0 0.0
        %1089 = vmatprep.subr.mxu0 0.0
        %1090 = vmatpush1.msra.mxu0 0.0
        %1091 = vmatprep.subr.mxu0 0.0
        %1092 = vmatpush1.msra.mxu0 0.0
        %1093 = vmatprep.subr.mxu0 0.0
        %1094 = vmatpush1.msra.mxu0 0.0
        %1095 = vmatprep.subr.mxu0 0.0
        %1096 = vmatpush1.msra.mxu0 0.0
        %1097 = vmatprep.subr.mxu0 0.0
        %1098 = vmatpush1.msra.mxu0 0.0
        %1099 = vmatprep.subr.mxu0 0.0
        %1100 = vmatpush1.msra.mxu0 0.0
        %1101 = vmatprep.subr.mxu0 0.0
        %1102 = vmatpush1.msra.mxu0 0.0
        %1103 = vmatprep.subr.mxu0 0.0
        %1104 = vmatpush1.msra.mxu0 0.0
        %1105 = vmatprep.subr.mxu0 0.0
        %1106 = vmatpush1.msra.mxu0 0.0
        %1107 = vmatprep.subr.mxu0 0.0
        %1108 = vmatpush1.msra.mxu0 0.0
        %1109 = vmatprep.subr.mxu0 0.0
        %1110 = vmatpush1.msra.mxu0 0.0
        %1111 = vmatprep.subr.mxu0 0.0
        %1112 = vmatpush1.msra.mxu0 0.0
        %1113 = vmatprep.subr.mxu0 0.0
        %1114 = vmatpush1.msra.mxu0 0.0
        %1115 = vmatprep.subr.mxu0 0.0
        %1116 = vmatpush1.msra.mxu0 0.0
        %1117 = vmatprep.subr.mxu0 0.0
        %1118 = vmatpush1.msra.mxu0 0.0
        %1119 = vmatprep.subr.mxu0 0.0
        %1120 = vmatpush1.msra.mxu0 0.0
        %1121 = vmatprep.subr.mxu0 0.0
        %1122 = vmatpush1.msra.mxu0 0.0
        %1123 = vmatprep.mubr.f32.mxu0 0.0
        %1124 = vmatmul.mubr.f32.gmra.mrb[0].mxu0 %v1057
        %v1125 = vpop.f32.mrb[0].mxu0
        %v1126 = vadd.f32 %v1054, %v1125
        %v1127 = vpop.f32.mrb[0].mxu0
        %1128 = vdwg.mxu0
        %v1129 = vmul.f32 %v1126, 0.5
        %v1130 = vmul.f32 %v1126, 0.70710677
        %vm1131 = vcmp.ge.f32.partialorder %v1130, 0.0
        %v1132 = vsel %vm1131, 1.0, -1.0
        %v1133 = vand.u32 2147483647, %v1130
        %v1134 = vmul.f32 %v1133, 0.3275911
        %v1135 = vadd.f32 %v1134, 1.0
        %v1136 = vrcp.pop %v1135
        %v1137 = vmul.f32 1.0, %v1136
        %v1138 = vmul.f32 %v1137, 1.0614054
        %v1139 = vadd.f32 %v1138, -1.4531521
        %v1140 = vmul.f32 %v1139, %v1137
        %v1141 = vadd.f32 %v1140, 1.4214138
        %v1142 = vmul.f32 %v1141, %v1137
        %v1143 = vadd.f32 %v1142, -0.28449672
        %v1144 = vmul.f32 %v1143, %v1137
        %v1145 = vadd.f32 %v1144, 0.2548296
        %v1146 = vmul.f32 %v1145, %v1137
        %v1147 = vsub.f32 0.0, %v1133
        %v1148 = vmul.f32 %v1147, %v1133
        %v1149 = vmul.f32 %v1148, 1.442695
        %v1150 = vpow.pop %v1149
        %v1151 = vmul.f32 %v1146, %v1150
        %v1152 = vsub.f32 1.0, %v1151
        %v1153 = vmul.f32 %v1132, %v1152
        %v1154 = vadd.f32 %v1153, 1.0
        %v1155 = vmul.f32 %v1129, %v1154
        %v1156 = vld [vmem:[#allocation3] sm:$0xff]
        %v1157 = vmul.f32 %v1155, %v732
        %v1158 = vadd.f32 %v1156, %v1157
        %1159 = vst.msk [vmem:[#allocation3] sm:$0xff] %vm811, %v1158
        %p1160 = scmp.eq.s32.totalorder %s27, 3
        // Predicated region
        $region151: #{res_mpnn_forward.3} parent=137 // pred_check
          %p1161 = pneg %p1160
        $region152: #{res_mpnn_forward.3} parent=137 // pred_check_branch
          %1163 = sbr.rel (%p1161) target = $region154
        $region153: #{res_mpnn_forward.3} parent=137 // pred_region
          %v1164 = vld [vmem:[#allocation3] sm:$0xff]
          %v1165 = vld [vmem:[#allocation4] sm:$0xff]
          %1167 = vset.pattern.permute.xlu0 0
          %1168 = vperm.xlu0 %1167, %v1165
          %v1169 = vpop.permute.xlu0 %1168
          %v1171 = vrcp.pop %v1169
          %v1172 = vmul.f32 %v1164, %v1171
          %v1173 = vld [vmem:[%s601] sm:$0xff]
          %v1174 = vadd.f32 %v1173, %v1172
          %v1175 = vld [vmem:[%s605] sm:$0xff]
          %1177 = vset.pattern.permute.xlu0 0
          %1178 = vperm.xlu0 %1177, %v1175
          %v1179 = vpop.permute.xlu0 %1178
          %v1181 = vmul.f32 %v1174, %v1179
          %1182 = vst.msk [vmem:[%s615] sm:$0xff] %vm811, %v1181
        $region154: #{res_mpnn_forward.3} parent=137 // pred_fallthru
          _
        %p1183 = scmp.lt.s32.totalorder %s26, 1
        %s1184 = scalar_select %p1183, %s26, 1
        %s1185 = smul.addr %s1184, 8
        %s1186 = scalar_lea.vmem %s11, %s1185
        // Predicated region
        $region155: #{res_mpnn_forward.3} parent=137 // pred_check
          %p1187 = pneg %p312
        $region156: #{res_mpnn_forward.3} parent=137 // pred_check_branch
          %1189 = sbr.rel (%p1187) target = $region158
        $region157: #{res_mpnn_forward.3} parent=137 // pred_region
          _
        $region158: #{res_mpnn_forward.3} parent=137 // pred_fallthru
          _
      $region138: #{res_mpnn_forward.3} parent=5 // pred_fallthru
        _
      %p1190 = scmp.le.s32.totalorder 2, %s17
      // Predicated region
      $region159: #{res_mpnn_forward.3} parent=5 // pred_check
        %p1191 = pneg %p1190
      $region160: #{res_mpnn_forward.3} parent=5 // pred_check_branch
        %1193 = sbr.rel (%p1191) target = $region162
      $region161: #{res_mpnn_forward.3} parent=5 // pred_region
        %s1194 = ssub.s32 %s17, 2
        // Predicated region
        $region163: #{res_mpnn_forward.3} parent=161 // pred_check
          %p1195 = pneg %p318
        $region164: #{res_mpnn_forward.3} parent=161 // pred_check_branch
          %1197 = sbr.rel (%p1195) target = $region166
        $region165: #{res_mpnn_forward.3} parent=161 // pred_region
          %p1198 = scmp.lt.s32.totalorder %s28, 1
          %s1199 = scalar_select %p1198, %s28, 1
          %s1200 = smul.addr %s1199, 8
          %s1201 = scalar_lea.vmem %s11, %s1200
        $region166: #{res_mpnn_forward.3} parent=161 // pred_fallthru
          _
      $region162: #{res_mpnn_forward.3} parent=5 // pred_fallthru
        _
    $region6: #{res_mpnn_forward.3} parent=1 // loop_footer
      %s21 = sadd.s32 1, %s17
    $region7: #{res_mpnn_forward.3} parent=1 // loop_footer_branch
      %16 = sbr.rel target = $region3
    $region8: #{res_mpnn_forward.3} parent=1 // loop_exit
      _

</llo_original>
